<compile_context>
chip_gen: v5e
topology: v5e:2x2
jax: 0.10.0
libtpu: 0.0.40
codegen_flags: <defaults>
</compile_context>

<pallas_src>
import functools

import jax
import jax.numpy as jnp
from jax.experimental import pallas as pl
from jax.experimental.pallas import tpu as pltpu


def _round_up(n, m):
    return (n + m - 1) // m * m


# ----------------------------- Pallas kernel ---------------------------------


def _convlstm_layer_kernel(xp_ref, wx_ref, wh_ref, b_ref, m_ref, h0_ref, c0_ref,
                           hall_ref, clast_ref,
                           h_st, c_st, hp_st, acc,
                           *, W, Ch, khh, khw):
    """One (batch, time) grid point of a ConvLSTM layer.

    HW = H*W, C4 = 4*Ch, Kx = padded kh*kw*Cin, Kh = khh*khw*Ch.
      xp_ref:   (1, 1, Kx, HW)  im2col patches of x[t] (compute dtype)
      wx_ref:   (C4, Kx)        input->gates weight   (compute dtype, resident)
      wh_ref:   (C4, Kh)        hidden->gates weight  (compute dtype, resident)
      b_ref:    (C4, 1)         combined bias (fp32, resident)
      m_ref:    (khh*khw, 1, HW) per-tap edge masks (fp32, resident)
      h0/c0:    (1, Ch, HW)     initial state (fp32)
      hall_ref: (1, 1, Ch, HW)  per-step hidden output (fp32)
      clast_ref:(1, Ch, HW)     final cell state (fp32)
      h_st,c_st:(Ch, HW) fp32 VMEM scratch  (state, persistent over the time axis)
      hp_st:    (Kh, HW) compute-dtype VMEM scratch (hidden im2col patches)
      acc:      (C4, HW) fp32 VMEM scratch  (gate pre-activations)
    """
    t = pl.program_id(1)
    T = pl.num_programs(1)
    HW = h_st.shape[1]
    ph, pw = khh // 2, khw // 2

    @pl.when(t == 0)
    def _init():
        h_st[...] = h0_ref[0]
        c_st[...] = c0_ref[0]

    # ---- input -> gates: single fused im2col matmul (patches built in the wrapper) ----
    acc[...] = jnp.dot(wx_ref[...], xp_ref[0, 0],
                       preferred_element_type=jnp.float32)

    # ---- hidden -> gates: build im2col patches with lane rolls + masks, one matmul ----
    h_prev = h_st[...]                                        # fp32 (Ch, HW)
    for idx in range(khh * khw):
        dy, dx = idx // khw, idx % khw
        off = (dy - ph) * W + (dx - pw)                       # flattened-spatial shift
        tap = h_prev if off == 0 else pltpu.roll(h_prev, shift=(-off) % HW, axis=1)
        if not (dy == ph and dx == pw):                       # centre tap is always valid
            tap = tap * m_ref[idx]                            # zero out-of-image neighbours
        hp_st[pl.ds(idx * Ch, Ch), :] = tap.astype(hp_st.dtype)
    acc[...] += jnp.dot(wh_ref[...], hp_st[...],
                        preferred_element_type=jnp.float32)

    # ---- gates & state update (fp32).  Gate order i, f, c, o == torch.split order ----
    def gate(k):
        return acc[pl.ds(k * Ch, Ch), :] + b_ref[pl.ds(k * Ch, Ch), :]

    i = jax.nn.sigmoid(gate(0))
    f = jax.nn.sigmoid(gate(1))
    g = jnp.tanh(gate(2))
    o = jax.nn.sigmoid(gate(3))

    c_new = f * c_st[...] + i * g
    h_new = o * jnp.tanh(c_new)

    h_st[...] = h_new
    c_st[...] = c_new
    hall_ref[0, 0] = h_new.astype(hall_ref.dtype)

    @pl.when(t == T - 1)
    def _final():
        clast_ref[0] = c_new.astype(clast_ref.dtype)


# ------------------------------ layer wrapper ---------------------------------


def _extract_patches_nchw(x_seq, kh, kw, k_pad, dtype):
    """x_seq: (B, T, C, H, W) -> im2col patches (B, T, k_pad, H*W) in `dtype`."""
    B, T, C, H, W = x_seq.shape
    ph, pw = kh // 2, kw // 2
    xp = jnp.pad(x_seq, ((0, 0), (0, 0), (0, 0), (ph, ph), (pw, pw)))
    taps = [xp[:, :, :, dy:dy + H, dx:dx + W]
            for dy in range(kh) for dx in range(kw)]
    p = jnp.stack(taps, axis=2).reshape(B, T, kh * kw * C, H * W)
    if k_pad > kh * kw * C:
        p = jnp.pad(p, ((0, 0), (0, 0), (0, k_pad - kh * kw * C), (0, 0)))
    return p.astype(dtype)


def _tap_masks(H, W, kh, kw):
    """(kh*kw, 1, H*W) fp32: 1 where the shifted neighbour lies inside the image."""
    ph, pw = kh // 2, kw // 2
    r = jnp.arange(H * W)
    y, x = r // W, r % W
    masks = [((y + dy - ph >= 0) & (y + dy - ph < H) &
              (x + dx - pw >= 0) & (x + dx - pw < W))
             for dy in range(kh) for dx in range(kw)]
    return jnp.stack(masks).astype(jnp.float32).reshape(kh * kw, 1, H * W)


def convlstm_layer(x_seq, h0, c0, wx, bx, wh, bh, compute_dtype):
    """x_seq: (B, T, Ci, H, W); h0, c0: (B, Ch, H, W); wx/wh in HWIO layout.

    Returns (h_all: (B, T, Ch, H, W), c_last: (B, Ch, H, W)) in fp32.
    """
    B, T, Ci, H, W = x_seq.shape
    Ch = h0.shape[1]
    C4 = 4 * Ch
    kxh, kxw = wx.shape[0], wx.shape[1]
    khh, khw = wh.shape[0], wh.shape[1]
    assert kxh % 2 == 1 and kxw % 2 == 1 and khh % 2 == 1 and khw % 2 == 1, \
        "'same' padding implemented for odd kernel sizes"
    HW = H * W
    Kx = kxh * kxw * Ci
    Kxp = _round_up(Kx, 8)
    Kh = khh * khw * Ch

    # Input-path im2col for all timesteps at once (done by XLA, streamed per step).
    x_patches = _extract_patches_nchw(x_seq, kxh, kxw, Kxp, compute_dtype)

    # Weights rearranged for the channels-on-sublanes layout.
    wx_t = wx.reshape(Kx, C4).T                                     # (C4, Kx)
    if Kxp > Kx:
        wx_t = jnp.pad(wx_t, ((0, 0), (0, Kxp - Kx)))
    wx_t = wx_t.astype(compute_dtype)
    wh_t = jnp.transpose(wh, (3, 0, 1, 2)).reshape(C4, Kh).astype(compute_dtype)
    bias = (bx + bh).reshape(C4, 1).astype(jnp.float32)
    masks = _tap_masks(H, W, khh, khw)

    h0f = h0.reshape(B, Ch, HW).astype(jnp.float32)
    c0f = c0.reshape(B, Ch, HW).astype(jnp.float32)

    kern = functools.partial(_convlstm_layer_kernel, W=W, Ch=Ch, khh=khh, khw=khw)

    h_all, c_last = pl.pallas_call(
        kern,
        out_shape=(jax.ShapeDtypeStruct((B, T, Ch, HW), jnp.float32),
                   jax.ShapeDtypeStruct((B, Ch, HW), jnp.float32)),
        grid_spec=pltpu.PrefetchScalarGridSpec(
            num_scalar_prefetch=0,
            grid=(B, T),
            in_specs=[
                pl.BlockSpec((1, 1, Kxp, HW), lambda b, t: (b, t, 0, 0)),   # x patches (streamed)
                pl.BlockSpec((C4, Kxp), lambda b, t: (0, 0)),               # Wx (resident)
                pl.BlockSpec((C4, Kh), lambda b, t: (0, 0)),                # Wh (resident)
                pl.BlockSpec((C4, 1), lambda b, t: (0, 0)),                 # bias (resident)
                pl.BlockSpec((khh * khw, 1, HW), lambda b, t: (0, 0, 0)),   # masks (resident)
                pl.BlockSpec((1, Ch, HW), lambda b, t: (b, 0, 0)),          # h0
                pl.BlockSpec((1, Ch, HW), lambda b, t: (b, 0, 0)),          # c0
            ],
            out_specs=[
                pl.BlockSpec((1, 1, Ch, HW), lambda b, t: (b, t, 0, 0)),    # h per step
                pl.BlockSpec((1, Ch, HW), lambda b, t: (b, 0, 0)),          # final cell state
            ],
            scratch_shapes=[
                pltpu.VMEM((Ch, HW), jnp.float32),        # h state (persists across T)
                pltpu.VMEM((Ch, HW), jnp.float32),        # c state (persists across T)
                pltpu.VMEM((Kh, HW), compute_dtype),      # hidden im2col patches
                pltpu.VMEM((C4, HW), jnp.float32),        # gate pre-activation accumulator
            ]),
        compiler_params=pltpu.CompilerParams(
            dimension_semantics=("parallel", "arbitrary"),
            vmem_limit_bytes=48 * 1024 * 1024),
    )(x_patches, wx_t, wh_t, bias, masks, h0f, c0f)

    return h_all.reshape(B, T, Ch, H, W), c_last.reshape(B, Ch, H, W)


# --------------------------- Module-level forward -----------------------------


def conv_lstm_module_forward(x, params, hidden_channels, layers_num,
                             h_0=None, c_0=None, compute_dtype=jnp.bfloat16):
    """x: (B, T, Cin, H, W) fp32.  PyTorch-shaped results:
       output (B, T, Ch, H, W); hidden, cell (B, Ch, H, W, layers_num)."""
    B, T, _, H, W = x.shape
    Ch = hidden_channels
    if h_0 is None:
        h_0 = jnp.zeros((B, Ch, H, W, layers_num), jnp.float32)
    if c_0 is None:
        c_0 = jnp.zeros((B, Ch, H, W, layers_num), jnp.float32)

    output = x
    hiddens, cells = [], []
    for layer in range(layers_num):
        wx, bx, wh, bh = params[layer]
        h_all, c_last = convlstm_layer(output, h_0[..., layer], c_0[..., layer],
                                       wx, bx, wh, bh, compute_dtype)
        output = h_all                         # (B, T, Ch, H, W) feeds the next layer
        hiddens.append(h_all[:, -1])
        cells.append(c_last)

    hidden = jnp.stack(hiddens, axis=-1)
    cell = jnp.stack(cells, axis=-1)
    return output, hidden, cell


# --------------------------- deterministic params ------------------------------


def init_params(key, in_channels, hidden_channels, in2hi_kernel, hi2hi_kernel, layers_num):
    params = []
    for layer in range(layers_num):
        cin = in_channels if layer == 0 else hidden_channels
        key, k1, k2, k3, k4 = jax.random.split(key, 5)
        wx = 0.1 * jax.random.normal(
            k1, (in2hi_kernel, in2hi_kernel, cin, 4 * hidden_channels), jnp.float32)
        bx = 0.1 * jax.random.normal(k2, (4 * hidden_channels,), jnp.float32)
        wh = 0.1 * jax.random.normal(
            k3, (hi2hi_kernel, hi2hi_kernel, hidden_channels, 4 * hidden_channels),
            jnp.float32)
        bh = 0.1 * jax.random.normal(k4, (4 * hidden_channels,), jnp.float32)
        params.append((wx, bx, wh, bh))
    return params


# ------------------------------- pure-JAX reference ----------------------------


def _ref_forward(x, params, hidden_channels, layers_num):
    Ch = hidden_channels

    def conv_same(v, w, b):
        out = jax.lax.conv_general_dilated(
            v, w, window_strides=(1, 1), padding='SAME',
            dimension_numbers=('NHWC', 'HWIO', 'NHWC'))
        return out + b

    def cell(xi, h, c, wx, bx, wh, bh):
        g = conv_same(xi, wx, bx) + conv_same(h, wh, bh)
        i = jax.nn.sigmoid(g[..., :Ch])
        f = jax.nn.sigmoid(g[..., Ch:2 * Ch])
        gg = jnp.tanh(g[..., 2 * Ch:3 * Ch])
        o = jax.nn.sigmoid(g[..., 3 * Ch:4 * Ch])
        c_new = f * c + i * gg
        return o * jnp.tanh(c_new), c_new

    B, T = x.shape[0], x.shape[1]
    H, W = x.shape[3], x.shape[4]
    output = jnp.transpose(x, (0, 1, 3, 4, 2))
    hiddens, cells = [], []
    for layer in range(layers_num):
        wx, bx, wh, bh = params[layer]
        h = jnp.zeros((B, H, W, Ch), jnp.float32)
        c = jnp.zeros((B, H, W, Ch), jnp.float32)
        outs = []
        for t in range(T):
            h, c = cell(output[:, t], h, c, wx, bx, wh, bh)
            outs.append(h)
        output = jnp.stack(outs, axis=1)
        hiddens.append(h)
        cells.append(c)
    hidden = jnp.stack(hiddens, axis=-1)
    cell_s = jnp.stack(cells, axis=-1)
    return (jnp.transpose(output, (0, 1, 4, 2, 3)),
            jnp.transpose(hidden, (0, 3, 1, 2, 4)),
            jnp.transpose(cell_s, (0, 3, 1, 2, 4)))


# ------------------------------------ main -------------------------------------


if __name__ == "__main__":
    B, T, Cin, H, W = 2, 8, 4, 16, 16
    hidden_channels, layers_num = 32, 2
    in2hi_kernel, hi2hi_kernel = 3, 3

    key = jax.random.PRNGKey(0)
    kx_key, kp_key = jax.random.split(key)
    x = jax.random.normal(kx_key, (B, T, Cin, H, W), jnp.float32)
    params = init_params(kp_key, Cin, hidden_channels, in2hi_kernel, hi2hi_kernel,
                         layers_num)

    fwd = jax.jit(conv_lstm_module_forward,
                  static_argnames=("hidden_channels", "layers_num", "compute_dtype"))

    # fp32 compute path: tight check against the XLA conv reference.
    out32, hid32, cel32 = fwd(x, params, hidden_channels=hidden_channels,
                              layers_num=layers_num, compute_dtype=jnp.float32)
    jax.block_until_ready((out32, hid32, cel32))

    # bf16 matmul path (v6e / v7x fast path): fp32 accumulation & state, looser check.
    out16, hid16, cel16 = fwd(x, params, hidden_channels=hidden_channels,
                              layers_num=layers_num, compute_dtype=jnp.bfloat16)
    jax.block_until_ready((out16, hid16, cel16))

    ref_out, ref_hid, ref_cel = _ref_forward(x, params, hidden_channels, layers_num)

    assert out32.shape == (B, T, hidden_channels, H, W)
    assert hid32.shape == (B, hidden_channels, H, W, layers_num)
    assert cel32.shape == (B, hidden_channels, H, W, layers_num)
    assert jnp.allclose(out32, ref_out, atol=2e-3, rtol=2e-3)
    assert jnp.allclose(hid32, ref_hid, atol=2e-3, rtol=2e-3)
    assert jnp.allclose(cel32, ref_cel, atol=2e-3, rtol=2e-3)
    assert jnp.allclose(out16, ref_out, atol=6e-2, rtol=6e-2)
    assert jnp.allclose(cel16, ref_cel, atol=6e-2, rtol=6e-2)

    print("KERNEL_OK")
</pallas_src>

<mosaic_0001>
module attributes {stable_mosaic.version = 11 : i64} {
  func.func @_convlstm_layer_kernel(%arg0: i32, %arg1: i32, %arg2: memref<1x1x40x256xf32, #tpu.memory_space<vmem>>, %arg3: memref<128x40xf32, #tpu.memory_space<vmem>>, %arg4: memref<128x288xf32, #tpu.memory_space<vmem>>, %arg5: memref<128x1xf32, #tpu.memory_space<vmem>>, %arg6: memref<9x1x256xf32, #tpu.memory_space<vmem>>, %arg7: memref<1x32x256xf32, #tpu.memory_space<vmem>>, %arg8: memref<1x32x256xf32, #tpu.memory_space<vmem>>, %arg9: memref<1x1x32x256xf32, #tpu.memory_space<vmem>>, %arg10: memref<1x32x256xf32, #tpu.memory_space<vmem>>, %arg11: memref<32x256xf32, #tpu.memory_space<vmem>>, %arg12: memref<32x256xf32, #tpu.memory_space<vmem>>, %arg13: memref<288x256xf32, #tpu.memory_space<vmem>>, %arg14: memref<128x256xf32, #tpu.memory_space<vmem>>) attributes {dimension_semantics = [#tpu.dimension_semantics<parallel>, #tpu.dimension_semantics<arbitrary>], iteration_bounds = array<i64: 2, 8>, scalar_prefetch = 0 : i64, scratch_operands = 4 : i64, tpu.core_type = #tpu.core_type<tc>, window_params = [{transform_indices = @transform_0, window_bounds = array<i64: 1, 1, 40, 256>}, {pipeline_mode = #tpu.pipeline_mode<synchronous>, transform_indices = @transform_1, window_bounds = array<i64: 128, 40>}, {pipeline_mode = #tpu.pipeline_mode<synchronous>, transform_indices = @transform_2, window_bounds = array<i64: 128, 288>}, {pipeline_mode = #tpu.pipeline_mode<synchronous>, transform_indices = @transform_3, window_bounds = array<i64: 128, 1>}, {pipeline_mode = #tpu.pipeline_mode<synchronous>, transform_indices = @transform_4, window_bounds = array<i64: 9, 1, 256>}, {transform_indices = @transform_5, window_bounds = array<i64: 1, 32, 256>}, {transform_indices = @transform_6, window_bounds = array<i64: 1, 32, 256>}, {transform_indices = @transform_7, window_bounds = array<i64: 1, 1, 32, 256>}, {transform_indices = @transform_8, window_bounds = array<i64: 1, 32, 256>}]} {
    %c0_i32 = arith.constant 0 : i32
    %0 = arith.cmpi eq, %arg1, %c0_i32 : i32
    %1 = arith.extui %0 : i1 to i32
    %c0_i32_0 = arith.constant 0 : i32
    %2 = arith.cmpi ne, %1, %c0_i32_0 : i32
    scf.if %2 {
      %c0_76 = arith.constant 0 : index
      %c0_77 = arith.constant 0 : index
      %c0_78 = arith.constant 0 : index
      %110 = vector.load %arg7[%c0_76, %c0_77, %c0_78] : memref<1x32x256xf32, #tpu.memory_space<vmem>>, vector<1x32x256xf32>
      %111 = vector.shape_cast %110 : vector<1x32x256xf32> to vector<32x256xf32>
      %c0_79 = arith.constant 0 : index
      %c0_80 = arith.constant 0 : index
      %112 = vector.load %arg11[%c0_79, %c0_80] : memref<32x256xf32, #tpu.memory_space<vmem>>, vector<32x256xf32>
      tpu.vector_store %arg11[%c0_79, %c0_80], %111 {strides = array<i32>} : memref<32x256xf32, #tpu.memory_space<vmem>>, vector<32x256xf32>,
      %c0_81 = arith.constant 0 : index
      %c0_82 = arith.constant 0 : index
      %c0_83 = arith.constant 0 : index
      %113 = vector.load %arg8[%c0_81, %c0_82, %c0_83] : memref<1x32x256xf32, #tpu.memory_space<vmem>>, vector<1x32x256xf32>
      %114 = vector.shape_cast %113 : vector<1x32x256xf32> to vector<32x256xf32>
      %c0_84 = arith.constant 0 : index
      %c0_85 = arith.constant 0 : index
      %115 = vector.load %arg12[%c0_84, %c0_85] : memref<32x256xf32, #tpu.memory_space<vmem>>, vector<32x256xf32>
      tpu.vector_store %arg12[%c0_84, %c0_85], %114 {strides = array<i32>} : memref<32x256xf32, #tpu.memory_space<vmem>>, vector<32x256xf32>,
    } else {
    }
    %c0 = arith.constant 0 : index
    %c0_1 = arith.constant 0 : index
    %3 = vector.load %arg3[%c0, %c0_1] : memref<128x40xf32, #tpu.memory_space<vmem>>, vector<128x40xf32>
    %c0_2 = arith.constant 0 : index
    %c0_3 = arith.constant 0 : index
    %c0_4 = arith.constant 0 : index
    %c0_5 = arith.constant 0 : index
    %4 = vector.load %arg2[%c0_2, %c0_3, %c0_4, %c0_5] : memref<1x1x40x256xf32, #tpu.memory_space<vmem>>, vector<1x1x40x256xf32>
    %5 = vector.shape_cast %4 : vector<1x1x40x256xf32> to vector<40x256xf32>
    %cst = arith.constant dense<0.000000e+00> : vector<128x256xf32>
    %6 = tpu.matmul %3, %5, %cst {dimension_numbers = #tpu.dot_dimension_numbers<[1], [0], [0], [1], [0, 0, 1, 1], [], []>} : vector<128x40xf32>, vector<40x256xf32>, vector<128x256xf32> -> vector<128x256xf32>
    %c0_6 = arith.constant 0 : index
    %c0_7 = arith.constant 0 : index
    %7 = vector.load %arg14[%c0_6, %c0_7] : memref<128x256xf32, #tpu.memory_space<vmem>>, vector<128x256xf32>
    tpu.vector_store %arg14[%c0_6, %c0_7], %6 {strides = array<i32>} : memref<128x256xf32, #tpu.memory_space<vmem>>, vector<128x256xf32>,
    %c0_8 = arith.constant 0 : index
    %c0_9 = arith.constant 0 : index
    %8 = vector.load %arg11[%c0_8, %c0_9] : memref<32x256xf32, #tpu.memory_space<vmem>>, vector<32x256xf32>
    %c17_i32 = arith.constant 17 : i32
    %9 = tpu.dynamic_rotate %8 by %c17_i32 dim 1 : vector<32x256xf32>, i32 -> vector<32x256xf32>
    %c0_10 = arith.constant 0 : index
    %c0_11 = arith.constant 0 : index
    %c0_12 = arith.constant 0 : index
    %10 = vector.load %arg6[%c0_10, %c0_11, %c0_12] : memref<9x1x256xf32, #tpu.memory_space<vmem>>, vector<1x1x256xf32>
    %11 = vector.shape_cast %10 : vector<1x1x256xf32> to vector<1x256xf32>
    %12 = vector.broadcast %11 : vector<1x256xf32> to vector<32x256xf32>
    %13 = arith.mulf %9, %12 : vector<32x256xf32>
    %c0_13 = arith.constant 0 : index
    %c0_14 = arith.constant 0 : index
    %14 = vector.load %arg13[%c0_13, %c0_14] : memref<288x256xf32, #tpu.memory_space<vmem>>, vector<32x256xf32>
    tpu.vector_store %arg13[%c0_13, %c0_14], %13 {strides = array<i32>} : memref<288x256xf32, #tpu.memory_space<vmem>>, vector<32x256xf32>,
    %c16_i32 = arith.constant 16 : i32
    %15 = tpu.dynamic_rotate %8 by %c16_i32 dim 1 : vector<32x256xf32>, i32 -> vector<32x256xf32>
    %c1 = arith.constant 1 : index
    %c0_15 = arith.constant 0 : index
    %c0_16 = arith.constant 0 : index
    %16 = vector.load %arg6[%c1, %c0_15, %c0_16] : memref<9x1x256xf32, #tpu.memory_space<vmem>>, vector<1x1x256xf32>
    %17 = vector.shape_cast %16 : vector<1x1x256xf32> to vector<1x256xf32>
    %18 = vector.broadcast %17 : vector<1x256xf32> to vector<32x256xf32>
    %19 = arith.mulf %15, %18 : vector<32x256xf32>
    %c32 = arith.constant 32 : index
    %c0_17 = arith.constant 0 : index
    %20 = vector.load %arg13[%c32, %c0_17] : memref<288x256xf32, #tpu.memory_space<vmem>>, vector<32x256xf32>
    tpu.vector_store %arg13[%c32, %c0_17], %19 {strides = array<i32>} : memref<288x256xf32, #tpu.memory_space<vmem>>, vector<32x256xf32>,
    %c15_i32 = arith.constant 15 : i32
    %21 = tpu.dynamic_rotate %8 by %c15_i32 dim 1 : vector<32x256xf32>, i32 -> vector<32x256xf32>
    %c2 = arith.constant 2 : index
    %c0_18 = arith.constant 0 : index
    %c0_19 = arith.constant 0 : index
    %22 = vector.load %arg6[%c2, %c0_18, %c0_19] : memref<9x1x256xf32, #tpu.memory_space<vmem>>, vector<1x1x256xf32>
    %23 = vector.shape_cast %22 : vector<1x1x256xf32> to vector<1x256xf32>
    %24 = vector.broadcast %23 : vector<1x256xf32> to vector<32x256xf32>
    %25 = arith.mulf %21, %24 : vector<32x256xf32>
    %c64 = arith.constant 64 : index
    %c0_20 = arith.constant 0 : index
    %26 = vector.load %arg13[%c64, %c0_20] : memref<288x256xf32, #tpu.memory_space<vmem>>, vector<32x256xf32>
    tpu.vector_store %arg13[%c64, %c0_20], %25 {strides = array<i32>} : memref<288x256xf32, #tpu.memory_space<vmem>>, vector<32x256xf32>,
    %c1_i32 = arith.constant 1 : i32
    %27 = tpu.dynamic_rotate %8 by %c1_i32 dim 1 : vector<32x256xf32>, i32 -> vector<32x256xf32>
    %c3 = arith.constant 3 : index
    %c0_21 = arith.constant 0 : index
    %c0_22 = arith.constant 0 : index
    %28 = vector.load %arg6[%c3, %c0_21, %c0_22] : memref<9x1x256xf32, #tpu.memory_space<vmem>>, vector<1x1x256xf32>
    %29 = vector.shape_cast %28 : vector<1x1x256xf32> to vector<1x256xf32>
    %30 = vector.broadcast %29 : vector<1x256xf32> to vector<32x256xf32>
    %31 = arith.mulf %27, %30 : vector<32x256xf32>
    %c96 = arith.constant 96 : index
    %c0_23 = arith.constant 0 : index
    %32 = vector.load %arg13[%c96, %c0_23] : memref<288x256xf32, #tpu.memory_space<vmem>>, vector<32x256xf32>
    tpu.vector_store %arg13[%c96, %c0_23], %31 {strides = array<i32>} : memref<288x256xf32, #tpu.memory_space<vmem>>, vector<32x256xf32>,
    %c128 = arith.constant 128 : index
    %c0_24 = arith.constant 0 : index
    %33 = vector.load %arg13[%c128, %c0_24] : memref<288x256xf32, #tpu.memory_space<vmem>>, vector<32x256xf32>
    tpu.vector_store %arg13[%c128, %c0_24], %8 {strides = array<i32>} : memref<288x256xf32, #tpu.memory_space<vmem>>, vector<32x256xf32>,
    %c255_i32 = arith.constant 255 : i32
    %34 = tpu.dynamic_rotate %8 by %c255_i32 dim 1 : vector<32x256xf32>, i32 -> vector<32x256xf32>
    %c5 = arith.constant 5 : index
    %c0_25 = arith.constant 0 : index
    %c0_26 = arith.constant 0 : index
    %35 = vector.load %arg6[%c5, %c0_25, %c0_26] : memref<9x1x256xf32, #tpu.memory_space<vmem>>, vector<1x1x256xf32>
    %36 = vector.shape_cast %35 : vector<1x1x256xf32> to vector<1x256xf32>
    %37 = vector.broadcast %36 : vector<1x256xf32> to vector<32x256xf32>
    %38 = arith.mulf %34, %37 : vector<32x256xf32>
    %c160 = arith.constant 160 : index
    %c0_27 = arith.constant 0 : index
    %39 = vector.load %arg13[%c160, %c0_27] : memref<288x256xf32, #tpu.memory_space<vmem>>, vector<32x256xf32>
    tpu.vector_store %arg13[%c160, %c0_27], %38 {strides = array<i32>} : memref<288x256xf32, #tpu.memory_space<vmem>>, vector<32x256xf32>,
    %c241_i32 = arith.constant 241 : i32
    %40 = tpu.dynamic_rotate %8 by %c241_i32 dim 1 : vector<32x256xf32>, i32 -> vector<32x256xf32>
    %c6 = arith.constant 6 : index
    %c0_28 = arith.constant 0 : index
    %c0_29 = arith.constant 0 : index
    %41 = vector.load %arg6[%c6, %c0_28, %c0_29] : memref<9x1x256xf32, #tpu.memory_space<vmem>>, vector<1x1x256xf32>
    %42 = vector.shape_cast %41 : vector<1x1x256xf32> to vector<1x256xf32>
    %43 = vector.broadcast %42 : vector<1x256xf32> to vector<32x256xf32>
    %44 = arith.mulf %40, %43 : vector<32x256xf32>
    %c192 = arith.constant 192 : index
    %c0_30 = arith.constant 0 : index
    %45 = vector.load %arg13[%c192, %c0_30] : memref<288x256xf32, #tpu.memory_space<vmem>>, vector<32x256xf32>
    tpu.vector_store %arg13[%c192, %c0_30], %44 {strides = array<i32>} : memref<288x256xf32, #tpu.memory_space<vmem>>, vector<32x256xf32>,
    %c240_i32 = arith.constant 240 : i32
    %46 = tpu.dynamic_rotate %8 by %c240_i32 dim 1 : vector<32x256xf32>, i32 -> vector<32x256xf32>
    %c7 = arith.constant 7 : index
    %c0_31 = arith.constant 0 : index
    %c0_32 = arith.constant 0 : index
    %47 = vector.load %arg6[%c7, %c0_31, %c0_32] : memref<9x1x256xf32, #tpu.memory_space<vmem>>, vector<1x1x256xf32>
    %48 = vector.shape_cast %47 : vector<1x1x256xf32> to vector<1x256xf32>
    %49 = vector.broadcast %48 : vector<1x256xf32> to vector<32x256xf32>
    %50 = arith.mulf %46, %49 : vector<32x256xf32>
    %c224 = arith.constant 224 : index
    %c0_33 = arith.constant 0 : index
    %51 = vector.load %arg13[%c224, %c0_33] : memref<288x256xf32, #tpu.memory_space<vmem>>, vector<32x256xf32>
    tpu.vector_store %arg13[%c224, %c0_33], %50 {strides = array<i32>} : memref<288x256xf32, #tpu.memory_space<vmem>>, vector<32x256xf32>,
    %c239_i32 = arith.constant 239 : i32
    %52 = tpu.dynamic_rotate %8 by %c239_i32 dim 1 : vector<32x256xf32>, i32 -> vector<32x256xf32>
    %c8 = arith.constant 8 : index
    %c0_34 = arith.constant 0 : index
    %c0_35 = arith.constant 0 : index
    %53 = vector.load %arg6[%c8, %c0_34, %c0_35] : memref<9x1x256xf32, #tpu.memory_space<vmem>>, vector<1x1x256xf32>
    %54 = vector.shape_cast %53 : vector<1x1x256xf32> to vector<1x256xf32>
    %55 = vector.broadcast %54 : vector<1x256xf32> to vector<32x256xf32>
    %56 = arith.mulf %52, %55 : vector<32x256xf32>
    %c256 = arith.constant 256 : index
    %c0_36 = arith.constant 0 : index
    %57 = vector.load %arg13[%c256, %c0_36] : memref<288x256xf32, #tpu.memory_space<vmem>>, vector<32x256xf32>
    tpu.vector_store %arg13[%c256, %c0_36], %56 {strides = array<i32>} : memref<288x256xf32, #tpu.memory_space<vmem>>, vector<32x256xf32>,
    %c0_37 = arith.constant 0 : index
    %c0_38 = arith.constant 0 : index
    %58 = vector.load %arg14[%c0_37, %c0_38] : memref<128x256xf32, #tpu.memory_space<vmem>>, vector<128x256xf32>
    %c0_39 = arith.constant 0 : index
    %c0_40 = arith.constant 0 : index
    %59 = vector.load %arg4[%c0_39, %c0_40] : memref<128x288xf32, #tpu.memory_space<vmem>>, vector<128x288xf32>
    %c0_41 = arith.constant 0 : index
    %c0_42 = arith.constant 0 : index
    %60 = vector.load %arg13[%c0_41, %c0_42] : memref<288x256xf32, #tpu.memory_space<vmem>>, vector<288x256xf32>
    %cst_43 = arith.constant dense<0.000000e+00> : vector<128x256xf32>
    %61 = tpu.matmul %59, %60, %cst_43 {dimension_numbers = #tpu.dot_dimension_numbers<[1], [0], [0], [1], [0, 0, 1, 1], [], []>} : vector<128x288xf32>, vector<288x256xf32>, vector<128x256xf32> -> vector<128x256xf32>
    %62 = arith.addf %58, %61 : vector<128x256xf32>
    %c0_44 = arith.constant 0 : index
    %c0_45 = arith.constant 0 : index
    %63 = vector.load %arg14[%c0_44, %c0_45] : memref<128x256xf32, #tpu.memory_space<vmem>>, vector<128x256xf32>
    tpu.vector_store %arg14[%c0_44, %c0_45], %62 {strides = array<i32>} : memref<128x256xf32, #tpu.memory_space<vmem>>, vector<128x256xf32>,
    %c0_46 = arith.constant 0 : index
    %c0_47 = arith.constant 0 : index
    %64 = vector.load %arg14[%c0_46, %c0_47] : memref<128x256xf32, #tpu.memory_space<vmem>>, vector<32x256xf32>
    %c0_48 = arith.constant 0 : index
    %c0_49 = arith.constant 0 : index
    %65 = vector.load %arg5[%c0_48, %c0_49] : memref<128x1xf32, #tpu.memory_space<vmem>>, vector<32x1xf32>
    %66 = vector.broadcast %65 : vector<32x1xf32> to vector<32x256xf32>
    %67 = arith.addf %64, %66 : vector<32x256xf32>
    %68 = arith.negf %67 : vector<32x256xf32>
    %69 = math.exp %68 : vector<32x256xf32>
    %cst_50 = arith.constant 1.000000e+00 : f32
    %70 = vector.broadcast %cst_50 : f32 to vector<32x256xf32>
    %71 = arith.addf %70, %69 : vector<32x256xf32>
    %72 = arith.divf %70, %71 : vector<32x256xf32>
    %c32_51 = arith.constant 32 : index
    %c0_52 = arith.constant 0 : index
    %73 = vector.load %arg14[%c32_51, %c0_52] : memref<128x256xf32, #tpu.memory_space<vmem>>, vector<32x256xf32>
    %c32_53 = arith.constant 32 : index
    %c0_54 = arith.constant 0 : index
    %74 = vector.load %arg5[%c32_53, %c0_54] : memref<128x1xf32, #tpu.memory_space<vmem>>, vector<32x1xf32>
    %75 = vector.broadcast %74 : vector<32x1xf32> to vector<32x256xf32>
    %76 = arith.addf %73, %75 : vector<32x256xf32>
    %77 = arith.negf %76 : vector<32x256xf32>
    %78 = math.exp %77 : vector<32x256xf32>
    %cst_55 = arith.constant 1.000000e+00 : f32
    %79 = vector.broadcast %cst_55 : f32 to vector<32x256xf32>
    %80 = arith.addf %79, %78 : vector<32x256xf32>
    %81 = arith.divf %79, %80 : vector<32x256xf32>
    %c64_56 = arith.constant 64 : index
    %c0_57 = arith.constant 0 : index
    %82 = vector.load %arg14[%c64_56, %c0_57] : memref<128x256xf32, #tpu.memory_space<vmem>>, vector<32x256xf32>
    %c64_58 = arith.constant 64 : index
    %c0_59 = arith.constant 0 : index
    %83 = vector.load %arg5[%c64_58, %c0_59] : memref<128x1xf32, #tpu.memory_space<vmem>>, vector<32x1xf32>
    %84 = vector.broadcast %83 : vector<32x1xf32> to vector<32x256xf32>
    %85 = arith.addf %82, %84 : vector<32x256xf32>
    %86 = math.tanh %85 : vector<32x256xf32>
    %c96_60 = arith.constant 96 : index
    %c0_61 = arith.constant 0 : index
    %87 = vector.load %arg14[%c96_60, %c0_61] : memref<128x256xf32, #tpu.memory_space<vmem>>, vector<32x256xf32>
    %c96_62 = arith.constant 96 : index
    %c0_63 = arith.constant 0 : index
    %88 = vector.load %arg5[%c96_62, %c0_63] : memref<128x1xf32, #tpu.memory_space<vmem>>, vector<32x1xf32>
    %89 = vector.broadcast %88 : vector<32x1xf32> to vector<32x256xf32>
    %90 = arith.addf %87, %89 : vector<32x256xf32>
    %91 = arith.negf %90 : vector<32x256xf32>
    %92 = math.exp %91 : vector<32x256xf32>
    %cst_64 = arith.constant 1.000000e+00 : f32
    %93 = vector.broadcast %cst_64 : f32 to vector<32x256xf32>
    %94 = arith.addf %93, %92 : vector<32x256xf32>
    %95 = arith.divf %93, %94 : vector<32x256xf32>
    %c0_65 = arith.constant 0 : index
    %c0_66 = arith.constant 0 : index
    %96 = vector.load %arg12[%c0_65, %c0_66] : memref<32x256xf32, #tpu.memory_space<vmem>>, vector<32x256xf32>
    %97 = arith.mulf %81, %96 : vector<32x256xf32>
    %98 = arith.mulf %72, %86 : vector<32x256xf32>
    %99 = arith.addf %97, %98 : vector<32x256xf32>
    %100 = math.tanh %99 : vector<32x256xf32>
    %101 = arith.mulf %95, %100 : vector<32x256xf32>
    %c0_67 = arith.constant 0 : index
    %c0_68 = arith.constant 0 : index
    %102 = vector.load %arg11[%c0_67, %c0_68] : memref<32x256xf32, #tpu.memory_space<vmem>>, vector<32x256xf32>
    tpu.vector_store %arg11[%c0_67, %c0_68], %101 {strides = array<i32>} : memref<32x256xf32, #tpu.memory_space<vmem>>, vector<32x256xf32>,
    %c0_69 = arith.constant 0 : index
    %c0_70 = arith.constant 0 : index
    %103 = vector.load %arg12[%c0_69, %c0_70] : memref<32x256xf32, #tpu.memory_space<vmem>>, vector<32x256xf32>
    tpu.vector_store %arg12[%c0_69, %c0_70], %99 {strides = array<i32>} : memref<32x256xf32, #tpu.memory_space<vmem>>, vector<32x256xf32>,
    %c0_71 = arith.constant 0 : index
    %c0_72 = arith.constant 0 : index
    %c0_73 = arith.constant 0 : index
    %c0_74 = arith.constant 0 : index
    %104 = vector.load %arg9[%c0_71, %c0_72, %c0_73, %c0_74] : memref<1x1x32x256xf32, #tpu.memory_space<vmem>>, vector<1x1x32x256xf32>
    %105 = vector.shape_cast %104 : vector<1x1x32x256xf32> to vector<32x256xf32>
    %106 = vector.shape_cast %101 : vector<32x256xf32> to vector<1x1x32x256xf32>
    tpu.vector_store %arg9[%c0_71, %c0_72, %c0_73, %c0_74], %106 {strides = array<i32>} : memref<1x1x32x256xf32, #tpu.memory_space<vmem>>, vector<1x1x32x256xf32>,
    %c7_i32 = arith.constant 7 : i32
    %107 = arith.cmpi eq, %arg1, %c7_i32 : i32
    %108 = arith.extui %107 : i1 to i32
    %c0_i32_75 = arith.constant 0 : i32
    %109 = arith.cmpi ne, %108, %c0_i32_75 : i32
    scf.if %109 {
      %c0_76 = arith.constant 0 : index
      %c0_77 = arith.constant 0 : index
      %c0_78 = arith.constant 0 : index
      %110 = vector.load %arg10[%c0_76, %c0_77, %c0_78] : memref<1x32x256xf32, #tpu.memory_space<vmem>>, vector<1x32x256xf32>
      %111 = vector.shape_cast %110 : vector<1x32x256xf32> to vector<32x256xf32>
      %112 = vector.shape_cast %99 : vector<32x256xf32> to vector<1x32x256xf32>
      tpu.vector_store %arg10[%c0_76, %c0_77, %c0_78], %112 {strides = array<i32>} : memref<1x32x256xf32, #tpu.memory_space<vmem>>, vector<1x32x256xf32>,
    } else {
    }
    return
  }
  func.func @transform_0(%arg0: i32, %arg1: i32) -> (i32, i32, i32, i32) {
    %c0_i32 = arith.constant 0 : i32
    %c0_i32_0 = arith.constant 0 : i32
    %c0_i32_1 = arith.constant 0 : i32
    return %arg0, %arg1, %c0_i32, %c0_i32_0 : i32, i32, i32, i32
  }
  func.func @transform_1(%arg0: i32, %arg1: i32) -> (i32, i32) {
    %c0_i32 = arith.constant 0 : i32
    %c0_i32_0 = arith.constant 0 : i32
    %c0_i32_1 = arith.constant 0 : i32
    return %c0_i32, %c0_i32_0 : i32, i32
  }
  func.func @transform_2(%arg0: i32, %arg1: i32) -> (i32, i32) {
    %c0_i32 = arith.constant 0 : i32
    %c0_i32_0 = arith.constant 0 : i32
    %c0_i32_1 = arith.constant 0 : i32
    return %c0_i32, %c0_i32_0 : i32, i32
  }
  func.func @transform_3(%arg0: i32, %arg1: i32) -> (i32, i32) {
    %c0_i32 = arith.constant 0 : i32
    %c0_i32_0 = arith.constant 0 : i32
    %c0_i32_1 = arith.constant 0 : i32
    return %c0_i32, %c0_i32_0 : i32, i32
  }
  func.func @transform_4(%arg0: i32, %arg1: i32) -> (i32, i32, i32) {
    %c0_i32 = arith.constant 0 : i32
    %c0_i32_0 = arith.constant 0 : i32
    %c0_i32_1 = arith.constant 0 : i32
    %c0_i32_2 = arith.constant 0 : i32
    return %c0_i32, %c0_i32_0, %c0_i32_1 : i32, i32, i32
  }
  func.func @transform_5(%arg0: i32, %arg1: i32) -> (i32, i32, i32) {
    %c0_i32 = arith.constant 0 : i32
    %c0_i32_0 = arith.constant 0 : i32
    %c0_i32_1 = arith.constant 0 : i32
    return %arg0, %c0_i32, %c0_i32_0 : i32, i32, i32
  }
  func.func @transform_6(%arg0: i32, %arg1: i32) -> (i32, i32, i32) {
    %c0_i32 = arith.constant 0 : i32
    %c0_i32_0 = arith.constant 0 : i32
    %c0_i32_1 = arith.constant 0 : i32
    return %arg0, %c0_i32, %c0_i32_0 : i32, i32, i32
  }
  func.func @transform_7(%arg0: i32, %arg1: i32) -> (i32, i32, i32, i32) {
    %c0_i32 = arith.constant 0 : i32
    %c0_i32_0 = arith.constant 0 : i32
    %c0_i32_1 = arith.constant 0 : i32
    return %arg0, %arg1, %c0_i32, %c0_i32_0 : i32, i32, i32, i32
  }
  func.func @transform_8(%arg0: i32, %arg1: i32) -> (i32, i32, i32) {
    %c0_i32 = arith.constant 0 : i32
    %c0_i32_0 = arith.constant 0 : i32
    %c0_i32_1 = arith.constant 0 : i32
    return %arg0, %c0_i32, %c0_i32_0 : i32, i32, i32
  }
}

module attributes {stable_mosaic.version = 11 : i64} {
  func.func @_convlstm_layer_kernel(%arg0: i32, %arg1: i32, %arg2: memref<1x1x288x256xf32, #tpu.memory_space<vmem>>, %arg3: memref<128x288xf32, #tpu.memory_space<vmem>>, %arg4: memref<128x288xf32, #tpu.memory_space<vmem>>, %arg5: memref<128x1xf32, #tpu.memory_space<vmem>>, %arg6: memref<9x1x256xf32, #tpu.memory_space<vmem>>, %arg7: memref<1x32x256xf32, #tpu.memory_space<vmem>>, %arg8: memref<1x32x256xf32, #tpu.memory_space<vmem>>, %arg9: memref<1x1x32x256xf32, #tpu.memory_space<vmem>>, %arg10: memref<1x32x256xf32, #tpu.memory_space<vmem>>, %arg11: memref<32x256xf32, #tpu.memory_space<vmem>>, %arg12: memref<32x256xf32, #tpu.memory_space<vmem>>, %arg13: memref<288x256xf32, #tpu.memory_space<vmem>>, %arg14: memref<128x256xf32, #tpu.memory_space<vmem>>) attributes {dimension_semantics = [#tpu.dimension_semantics<parallel>, #tpu.dimension_semantics<arbitrary>], iteration_bounds = array<i64: 2, 8>, scalar_prefetch = 0 : i64, scratch_operands = 4 : i64, tpu.core_type = #tpu.core_type<tc>, window_params = [{transform_indices = @transform_0, window_bounds = array<i64: 1, 1, 288, 256>}, {pipeline_mode = #tpu.pipeline_mode<synchronous>, transform_indices = @transform_1, window_bounds = array<i64: 128, 288>}, {pipeline_mode = #tpu.pipeline_mode<synchronous>, transform_indices = @transform_2, window_bounds = array<i64: 128, 288>}, {pipeline_mode = #tpu.pipeline_mode<synchronous>, transform_indices = @transform_3, window_bounds = array<i64: 128, 1>}, {pipeline_mode = #tpu.pipeline_mode<synchronous>, transform_indices = @transform_4, window_bounds = array<i64: 9, 1, 256>}, {transform_indices = @transform_5, window_bounds = array<i64: 1, 32, 256>}, {transform_indices = @transform_6, window_bounds = array<i64: 1, 32, 256>}, {transform_indices = @transform_7, window_bounds = array<i64: 1, 1, 32, 256>}, {transform_indices = @transform_8, window_bounds = array<i64: 1, 32, 256>}]} {
    %c0_i32 = arith.constant 0 : i32
    %0 = arith.cmpi eq, %arg1, %c0_i32 : i32
    %1 = arith.extui %0 : i1 to i32
    %c0_i32_0 = arith.constant 0 : i32
    %2 = arith.cmpi ne, %1, %c0_i32_0 : i32
    scf.if %2 {
      %c0_76 = arith.constant 0 : index
      %c0_77 = arith.constant 0 : index
      %c0_78 = arith.constant 0 : index
      %110 = vector.load %arg7[%c0_76, %c0_77, %c0_78] : memref<1x32x256xf32, #tpu.memory_space<vmem>>, vector<1x32x256xf32>
      %111 = vector.shape_cast %110 : vector<1x32x256xf32> to vector<32x256xf32>
      %c0_79 = arith.constant 0 : index
      %c0_80 = arith.constant 0 : index
      %112 = vector.load %arg11[%c0_79, %c0_80] : memref<32x256xf32, #tpu.memory_space<vmem>>, vector<32x256xf32>
      tpu.vector_store %arg11[%c0_79, %c0_80], %111 {strides = array<i32>} : memref<32x256xf32, #tpu.memory_space<vmem>>, vector<32x256xf32>,
      %c0_81 = arith.constant 0 : index
      %c0_82 = arith.constant 0 : index
      %c0_83 = arith.constant 0 : index
      %113 = vector.load %arg8[%c0_81, %c0_82, %c0_83] : memref<1x32x256xf32, #tpu.memory_space<vmem>>, vector<1x32x256xf32>
      %114 = vector.shape_cast %113 : vector<1x32x256xf32> to vector<32x256xf32>
      %c0_84 = arith.constant 0 : index
      %c0_85 = arith.constant 0 : index
      %115 = vector.load %arg12[%c0_84, %c0_85] : memref<32x256xf32, #tpu.memory_space<vmem>>, vector<32x256xf32>
      tpu.vector_store %arg12[%c0_84, %c0_85], %114 {strides = array<i32>} : memref<32x256xf32, #tpu.memory_space<vmem>>, vector<32x256xf32>,
    } else {
    }
    %c0 = arith.constant 0 : index
    %c0_1 = arith.constant 0 : index
    %3 = vector.load %arg3[%c0, %c0_1] : memref<128x288xf32, #tpu.memory_space<vmem>>, vector<128x288xf32>
    %c0_2 = arith.constant 0 : index
    %c0_3 = arith.constant 0 : index
    %c0_4 = arith.constant 0 : index
    %c0_5 = arith.constant 0 : index
    %4 = vector.load %arg2[%c0_2, %c0_3, %c0_4, %c0_5] : memref<1x1x288x256xf32, #tpu.memory_space<vmem>>, vector<1x1x288x256xf32>
    %5 = vector.shape_cast %4 : vector<1x1x288x256xf32> to vector<288x256xf32>
    %cst = arith.constant dense<0.000000e+00> : vector<128x256xf32>
    %6 = tpu.matmul %3, %5, %cst {dimension_numbers = #tpu.dot_dimension_numbers<[1], [0], [0], [1], [0, 0, 1, 1], [], []>} : vector<128x288xf32>, vector<288x256xf32>, vector<128x256xf32> -> vector<128x256xf32>
    %c0_6 = arith.constant 0 : index
    %c0_7 = arith.constant 0 : index
    %7 = vector.load %arg14[%c0_6, %c0_7] : memref<128x256xf32, #tpu.memory_space<vmem>>, vector<128x256xf32>
    tpu.vector_store %arg14[%c0_6, %c0_7], %6 {strides = array<i32>} : memref<128x256xf32, #tpu.memory_space<vmem>>, vector<128x256xf32>,
    %c0_8 = arith.constant 0 : index
    %c0_9 = arith.constant 0 : index
    %8 = vector.load %arg11[%c0_8, %c0_9] : memref<32x256xf32, #tpu.memory_space<vmem>>, vector<32x256xf32>
    %c17_i32 = arith.constant 17 : i32
    %9 = tpu.dynamic_rotate %8 by %c17_i32 dim 1 : vector<32x256xf32>, i32 -> vector<32x256xf32>
    %c0_10 = arith.constant 0 : index
    %c0_11 = arith.constant 0 : index
    %c0_12 = arith.constant 0 : index
    %10 = vector.load %arg6[%c0_10, %c0_11, %c0_12] : memref<9x1x256xf32, #tpu.memory_space<vmem>>, vector<1x1x256xf32>
    %11 = vector.shape_cast %10 : vector<1x1x256xf32> to vector<1x256xf32>
    %12 = vector.broadcast %11 : vector<1x256xf32> to vector<32x256xf32>
    %13 = arith.mulf %9, %12 : vector<32x256xf32>
    %c0_13 = arith.constant 0 : index
    %c0_14 = arith.constant 0 : index
    %14 = vector.load %arg13[%c0_13, %c0_14] : memref<288x256xf32, #tpu.memory_space<vmem>>, vector<32x256xf32>
    tpu.vector_store %arg13[%c0_13, %c0_14], %13 {strides = array<i32>} : memref<288x256xf32, #tpu.memory_space<vmem>>, vector<32x256xf32>,
    %c16_i32 = arith.constant 16 : i32
    %15 = tpu.dynamic_rotate %8 by %c16_i32 dim 1 : vector<32x256xf32>, i32 -> vector<32x256xf32>
    %c1 = arith.constant 1 : index
    %c0_15 = arith.constant 0 : index
    %c0_16 = arith.constant 0 : index
    %16 = vector.load %arg6[%c1, %c0_15, %c0_16] : memref<9x1x256xf32, #tpu.memory_space<vmem>>, vector<1x1x256xf32>
    %17 = vector.shape_cast %16 : vector<1x1x256xf32> to vector<1x256xf32>
    %18 = vector.broadcast %17 : vector<1x256xf32> to vector<32x256xf32>
    %19 = arith.mulf %15, %18 : vector<32x256xf32>
    %c32 = arith.constant 32 : index
    %c0_17 = arith.constant 0 : index
    %20 = vector.load %arg13[%c32, %c0_17] : memref<288x256xf32, #tpu.memory_space<vmem>>, vector<32x256xf32>
    tpu.vector_store %arg13[%c32, %c0_17], %19 {strides = array<i32>} : memref<288x256xf32, #tpu.memory_space<vmem>>, vector<32x256xf32>,
    %c15_i32 = arith.constant 15 : i32
    %21 = tpu.dynamic_rotate %8 by %c15_i32 dim 1 : vector<32x256xf32>, i32 -> vector<32x256xf32>
    %c2 = arith.constant 2 : index
    %c0_18 = arith.constant 0 : index
    %c0_19 = arith.constant 0 : index
    %22 = vector.load %arg6[%c2, %c0_18, %c0_19] : memref<9x1x256xf32, #tpu.memory_space<vmem>>, vector<1x1x256xf32>
    %23 = vector.shape_cast %22 : vector<1x1x256xf32> to vector<1x256xf32>
    %24 = vector.broadcast %23 : vector<1x256xf32> to vector<32x256xf32>
    %25 = arith.mulf %21, %24 : vector<32x256xf32>
    %c64 = arith.constant 64 : index
    %c0_20 = arith.constant 0 : index
    %26 = vector.load %arg13[%c64, %c0_20] : memref<288x256xf32, #tpu.memory_space<vmem>>, vector<32x256xf32>
    tpu.vector_store %arg13[%c64, %c0_20], %25 {strides = array<i32>} : memref<288x256xf32, #tpu.memory_space<vmem>>, vector<32x256xf32>,
    %c1_i32 = arith.constant 1 : i32
    %27 = tpu.dynamic_rotate %8 by %c1_i32 dim 1 : vector<32x256xf32>, i32 -> vector<32x256xf32>
    %c3 = arith.constant 3 : index
    %c0_21 = arith.constant 0 : index
    %c0_22 = arith.constant 0 : index
    %28 = vector.load %arg6[%c3, %c0_21, %c0_22] : memref<9x1x256xf32, #tpu.memory_space<vmem>>, vector<1x1x256xf32>
    %29 = vector.shape_cast %28 : vector<1x1x256xf32> to vector<1x256xf32>
    %30 = vector.broadcast %29 : vector<1x256xf32> to vector<32x256xf32>
    %31 = arith.mulf %27, %30 : vector<32x256xf32>
    %c96 = arith.constant 96 : index
    %c0_23 = arith.constant 0 : index
    %32 = vector.load %arg13[%c96, %c0_23] : memref<288x256xf32, #tpu.memory_space<vmem>>, vector<32x256xf32>
    tpu.vector_store %arg13[%c96, %c0_23], %31 {strides = array<i32>} : memref<288x256xf32, #tpu.memory_space<vmem>>, vector<32x256xf32>,
    %c128 = arith.constant 128 : index
    %c0_24 = arith.constant 0 : index
    %33 = vector.load %arg13[%c128, %c0_24] : memref<288x256xf32, #tpu.memory_space<vmem>>, vector<32x256xf32>
    tpu.vector_store %arg13[%c128, %c0_24], %8 {strides = array<i32>} : memref<288x256xf32, #tpu.memory_space<vmem>>, vector<32x256xf32>,
    %c255_i32 = arith.constant 255 : i32
    %34 = tpu.dynamic_rotate %8 by %c255_i32 dim 1 : vector<32x256xf32>, i32 -> vector<32x256xf32>
    %c5 = arith.constant 5 : index
    %c0_25 = arith.constant 0 : index
    %c0_26 = arith.constant 0 : index
    %35 = vector.load %arg6[%c5, %c0_25, %c0_26] : memref<9x1x256xf32, #tpu.memory_space<vmem>>, vector<1x1x256xf32>
    %36 = vector.shape_cast %35 : vector<1x1x256xf32> to vector<1x256xf32>
    %37 = vector.broadcast %36 : vector<1x256xf32> to vector<32x256xf32>
    %38 = arith.mulf %34, %37 : vector<32x256xf32>
    %c160 = arith.constant 160 : index
    %c0_27 = arith.constant 0 : index
    %39 = vector.load %arg13[%c160, %c0_27] : memref<288x256xf32, #tpu.memory_space<vmem>>, vector<32x256xf32>
    tpu.vector_store %arg13[%c160, %c0_27], %38 {strides = array<i32>} : memref<288x256xf32, #tpu.memory_space<vmem>>, vector<32x256xf32>,
    %c241_i32 = arith.constant 241 : i32
    %40 = tpu.dynamic_rotate %8 by %c241_i32 dim 1 : vector<32x256xf32>, i32 -> vector<32x256xf32>
    %c6 = arith.constant 6 : index
    %c0_28 = arith.constant 0 : index
    %c0_29 = arith.constant 0 : index
    %41 = vector.load %arg6[%c6, %c0_28, %c0_29] : memref<9x1x256xf32, #tpu.memory_space<vmem>>, vector<1x1x256xf32>
    %42 = vector.shape_cast %41 : vector<1x1x256xf32> to vector<1x256xf32>
    %43 = vector.broadcast %42 : vector<1x256xf32> to vector<32x256xf32>
    %44 = arith.mulf %40, %43 : vector<32x256xf32>
    %c192 = arith.constant 192 : index
    %c0_30 = arith.constant 0 : index
    %45 = vector.load %arg13[%c192, %c0_30] : memref<288x256xf32, #tpu.memory_space<vmem>>, vector<32x256xf32>
    tpu.vector_store %arg13[%c192, %c0_30], %44 {strides = array<i32>} : memref<288x256xf32, #tpu.memory_space<vmem>>, vector<32x256xf32>,
    %c240_i32 = arith.constant 240 : i32
    %46 = tpu.dynamic_rotate %8 by %c240_i32 dim 1 : vector<32x256xf32>, i32 -> vector<32x256xf32>
    %c7 = arith.constant 7 : index
    %c0_31 = arith.constant 0 : index
    %c0_32 = arith.constant 0 : index
    %47 = vector.load %arg6[%c7, %c0_31, %c0_32] : memref<9x1x256xf32, #tpu.memory_space<vmem>>, vector<1x1x256xf32>
    %48 = vector.shape_cast %47 : vector<1x1x256xf32> to vector<1x256xf32>
    %49 = vector.broadcast %48 : vector<1x256xf32> to vector<32x256xf32>
    %50 = arith.mulf %46, %49 : vector<32x256xf32>
    %c224 = arith.constant 224 : index
    %c0_33 = arith.constant 0 : index
    %51 = vector.load %arg13[%c224, %c0_33] : memref<288x256xf32, #tpu.memory_space<vmem>>, vector<32x256xf32>
    tpu.vector_store %arg13[%c224, %c0_33], %50 {strides = array<i32>} : memref<288x256xf32, #tpu.memory_space<vmem>>, vector<32x256xf32>,
    %c239_i32 = arith.constant 239 : i32
    %52 = tpu.dynamic_rotate %8 by %c239_i32 dim 1 : vector<32x256xf32>, i32 -> vector<32x256xf32>
    %c8 = arith.constant 8 : index
    %c0_34 = arith.constant 0 : index
    %c0_35 = arith.constant 0 : index
    %53 = vector.load %arg6[%c8, %c0_34, %c0_35] : memref<9x1x256xf32, #tpu.memory_space<vmem>>, vector<1x1x256xf32>
    %54 = vector.shape_cast %53 : vector<1x1x256xf32> to vector<1x256xf32>
    %55 = vector.broadcast %54 : vector<1x256xf32> to vector<32x256xf32>
    %56 = arith.mulf %52, %55 : vector<32x256xf32>
    %c256 = arith.constant 256 : index
    %c0_36 = arith.constant 0 : index
    %57 = vector.load %arg13[%c256, %c0_36] : memref<288x256xf32, #tpu.memory_space<vmem>>, vector<32x256xf32>
    tpu.vector_store %arg13[%c256, %c0_36], %56 {strides = array<i32>} : memref<288x256xf32, #tpu.memory_space<vmem>>, vector<32x256xf32>,
    %c0_37 = arith.constant 0 : index
    %c0_38 = arith.constant 0 : index
    %58 = vector.load %arg14[%c0_37, %c0_38] : memref<128x256xf32, #tpu.memory_space<vmem>>, vector<128x256xf32>
    %c0_39 = arith.constant 0 : index
    %c0_40 = arith.constant 0 : index
    %59 = vector.load %arg4[%c0_39, %c0_40] : memref<128x288xf32, #tpu.memory_space<vmem>>, vector<128x288xf32>
    %c0_41 = arith.constant 0 : index
    %c0_42 = arith.constant 0 : index
    %60 = vector.load %arg13[%c0_41, %c0_42] : memref<288x256xf32, #tpu.memory_space<vmem>>, vector<288x256xf32>
    %cst_43 = arith.constant dense<0.000000e+00> : vector<128x256xf32>
    %61 = tpu.matmul %59, %60, %cst_43 {dimension_numbers = #tpu.dot_dimension_numbers<[1], [0], [0], [1], [0, 0, 1, 1], [], []>} : vector<128x288xf32>, vector<288x256xf32>, vector<128x256xf32> -> vector<128x256xf32>
    %62 = arith.addf %58, %61 : vector<128x256xf32>
    %c0_44 = arith.constant 0 : index
    %c0_45 = arith.constant 0 : index
    %63 = vector.load %arg14[%c0_44, %c0_45] : memref<128x256xf32, #tpu.memory_space<vmem>>, vector<128x256xf32>
    tpu.vector_store %arg14[%c0_44, %c0_45], %62 {strides = array<i32>} : memref<128x256xf32, #tpu.memory_space<vmem>>, vector<128x256xf32>,
    %c0_46 = arith.constant 0 : index
    %c0_47 = arith.constant 0 : index
    %64 = vector.load %arg14[%c0_46, %c0_47] : memref<128x256xf32, #tpu.memory_space<vmem>>, vector<32x256xf32>
    %c0_48 = arith.constant 0 : index
    %c0_49 = arith.constant 0 : index
    %65 = vector.load %arg5[%c0_48, %c0_49] : memref<128x1xf32, #tpu.memory_space<vmem>>, vector<32x1xf32>
    %66 = vector.broadcast %65 : vector<32x1xf32> to vector<32x256xf32>
    %67 = arith.addf %64, %66 : vector<32x256xf32>
    %68 = arith.negf %67 : vector<32x256xf32>
    %69 = math.exp %68 : vector<32x256xf32>
    %cst_50 = arith.constant 1.000000e+00 : f32
    %70 = vector.broadcast %cst_50 : f32 to vector<32x256xf32>
    %71 = arith.addf %70, %69 : vector<32x256xf32>
    %72 = arith.divf %70, %71 : vector<32x256xf32>
    %c32_51 = arith.constant 32 : index
    %c0_52 = arith.constant 0 : index
    %73 = vector.load %arg14[%c32_51, %c0_52] : memref<128x256xf32, #tpu.memory_space<vmem>>, vector<32x256xf32>
    %c32_53 = arith.constant 32 : index
    %c0_54 = arith.constant 0 : index
    %74 = vector.load %arg5[%c32_53, %c0_54] : memref<128x1xf32, #tpu.memory_space<vmem>>, vector<32x1xf32>
    %75 = vector.broadcast %74 : vector<32x1xf32> to vector<32x256xf32>
    %76 = arith.addf %73, %75 : vector<32x256xf32>
    %77 = arith.negf %76 : vector<32x256xf32>
    %78 = math.exp %77 : vector<32x256xf32>
    %cst_55 = arith.constant 1.000000e+00 : f32
    %79 = vector.broadcast %cst_55 : f32 to vector<32x256xf32>
    %80 = arith.addf %79, %78 : vector<32x256xf32>
    %81 = arith.divf %79, %80 : vector<32x256xf32>
    %c64_56 = arith.constant 64 : index
    %c0_57 = arith.constant 0 : index
    %82 = vector.load %arg14[%c64_56, %c0_57] : memref<128x256xf32, #tpu.memory_space<vmem>>, vector<32x256xf32>
    %c64_58 = arith.constant 64 : index
    %c0_59 = arith.constant 0 : index
    %83 = vector.load %arg5[%c64_58, %c0_59] : memref<128x1xf32, #tpu.memory_space<vmem>>, vector<32x1xf32>
    %84 = vector.broadcast %83 : vector<32x1xf32> to vector<32x256xf32>
    %85 = arith.addf %82, %84 : vector<32x256xf32>
    %86 = math.tanh %85 : vector<32x256xf32>
    %c96_60 = arith.constant 96 : index
    %c0_61 = arith.constant 0 : index
    %87 = vector.load %arg14[%c96_60, %c0_61] : memref<128x256xf32, #tpu.memory_space<vmem>>, vector<32x256xf32>
    %c96_62 = arith.constant 96 : index
    %c0_63 = arith.constant 0 : index
    %88 = vector.load %arg5[%c96_62, %c0_63] : memref<128x1xf32, #tpu.memory_space<vmem>>, vector<32x1xf32>
    %89 = vector.broadcast %88 : vector<32x1xf32> to vector<32x256xf32>
    %90 = arith.addf %87, %89 : vector<32x256xf32>
    %91 = arith.negf %90 : vector<32x256xf32>
    %92 = math.exp %91 : vector<32x256xf32>
    %cst_64 = arith.constant 1.000000e+00 : f32
    %93 = vector.broadcast %cst_64 : f32 to vector<32x256xf32>
    %94 = arith.addf %93, %92 : vector<32x256xf32>
    %95 = arith.divf %93, %94 : vector<32x256xf32>
    %c0_65 = arith.constant 0 : index
    %c0_66 = arith.constant 0 : index
    %96 = vector.load %arg12[%c0_65, %c0_66] : memref<32x256xf32, #tpu.memory_space<vmem>>, vector<32x256xf32>
    %97 = arith.mulf %81, %96 : vector<32x256xf32>
    %98 = arith.mulf %72, %86 : vector<32x256xf32>
    %99 = arith.addf %97, %98 : vector<32x256xf32>
    %100 = math.tanh %99 : vector<32x256xf32>
    %101 = arith.mulf %95, %100 : vector<32x256xf32>
    %c0_67 = arith.constant 0 : index
    %c0_68 = arith.constant 0 : index
    %102 = vector.load %arg11[%c0_67, %c0_68] : memref<32x256xf32, #tpu.memory_space<vmem>>, vector<32x256xf32>
    tpu.vector_store %arg11[%c0_67, %c0_68], %101 {strides = array<i32>} : memref<32x256xf32, #tpu.memory_space<vmem>>, vector<32x256xf32>,
    %c0_69 = arith.constant 0 : index
    %c0_70 = arith.constant 0 : index
    %103 = vector.load %arg12[%c0_69, %c0_70] : memref<32x256xf32, #tpu.memory_space<vmem>>, vector<32x256xf32>
    tpu.vector_store %arg12[%c0_69, %c0_70], %99 {strides = array<i32>} : memref<32x256xf32, #tpu.memory_space<vmem>>, vector<32x256xf32>,
    %c0_71 = arith.constant 0 : index
    %c0_72 = arith.constant 0 : index
    %c0_73 = arith.constant 0 : index
    %c0_74 = arith.constant 0 : index
    %104 = vector.load %arg9[%c0_71, %c0_72, %c0_73, %c0_74] : memref<1x1x32x256xf32, #tpu.memory_space<vmem>>, vector<1x1x32x256xf32>
    %105 = vector.shape_cast %104 : vector<1x1x32x256xf32> to vector<32x256xf32>
    %106 = vector.shape_cast %101 : vector<32x256xf32> to vector<1x1x32x256xf32>
    tpu.vector_store %arg9[%c0_71, %c0_72, %c0_73, %c0_74], %106 {strides = array<i32>} : memref<1x1x32x256xf32, #tpu.memory_space<vmem>>, vector<1x1x32x256xf32>,
    %c7_i32 = arith.constant 7 : i32
    %107 = arith.cmpi eq, %arg1, %c7_i32 : i32
    %108 = arith.extui %107 : i1 to i32
    %c0_i32_75 = arith.constant 0 : i32
    %109 = arith.cmpi ne, %108, %c0_i32_75 : i32
    scf.if %109 {
      %c0_76 = arith.constant 0 : index
      %c0_77 = arith.constant 0 : index
      %c0_78 = arith.constant 0 : index
      %110 = vector.load %arg10[%c0_76, %c0_77, %c0_78] : memref<1x32x256xf32, #tpu.memory_space<vmem>>, vector<1x32x256xf32>
      %111 = vector.shape_cast %110 : vector<1x32x256xf32> to vector<32x256xf32>
      %112 = vector.shape_cast %99 : vector<32x256xf32> to vector<1x32x256xf32>
      tpu.vector_store %arg10[%c0_76, %c0_77, %c0_78], %112 {strides = array<i32>} : memref<1x32x256xf32, #tpu.memory_space<vmem>>, vector<1x32x256xf32>,
    } else {
    }
    return
  }
  func.func @transform_0(%arg0: i32, %arg1: i32) -> (i32, i32, i32, i32) {
    %c0_i32 = arith.constant 0 : i32
    %c0_i32_0 = arith.constant 0 : i32
    %c0_i32_1 = arith.constant 0 : i32
    return %arg0, %arg1, %c0_i32, %c0_i32_0 : i32, i32, i32, i32
  }
  func.func @transform_1(%arg0: i32, %arg1: i32) -> (i32, i32) {
    %c0_i32 = arith.constant 0 : i32
    %c0_i32_0 = arith.constant 0 : i32
    %c0_i32_1 = arith.constant 0 : i32
    return %c0_i32, %c0_i32_0 : i32, i32
  }
  func.func @transform_2(%arg0: i32, %arg1: i32) -> (i32, i32) {
    %c0_i32 = arith.constant 0 : i32
    %c0_i32_0 = arith.constant 0 : i32
    %c0_i32_1 = arith.constant 0 : i32
    return %c0_i32, %c0_i32_0 : i32, i32
  }
  func.func @transform_3(%arg0: i32, %arg1: i32) -> (i32, i32) {
    %c0_i32 = arith.constant 0 : i32
    %c0_i32_0 = arith.constant 0 : i32
    %c0_i32_1 = arith.constant 0 : i32
    return %c0_i32, %c0_i32_0 : i32, i32
  }
  func.func @transform_4(%arg0: i32, %arg1: i32) -> (i32, i32, i32) {
    %c0_i32 = arith.constant 0 : i32
    %c0_i32_0 = arith.constant 0 : i32
    %c0_i32_1 = arith.constant 0 : i32
    %c0_i32_2 = arith.constant 0 : i32
    return %c0_i32, %c0_i32_0, %c0_i32_1 : i32, i32, i32
  }
  func.func @transform_5(%arg0: i32, %arg1: i32) -> (i32, i32, i32) {
    %c0_i32 = arith.constant 0 : i32
    %c0_i32_0 = arith.constant 0 : i32
    %c0_i32_1 = arith.constant 0 : i32
    return %arg0, %c0_i32, %c0_i32_0 : i32, i32, i32
  }
  func.func @transform_6(%arg0: i32, %arg1: i32) -> (i32, i32, i32) {
    %c0_i32 = arith.constant 0 : i32
    %c0_i32_0 = arith.constant 0 : i32
    %c0_i32_1 = arith.constant 0 : i32
    return %arg0, %c0_i32, %c0_i32_0 : i32, i32, i32
  }
  func.func @transform_7(%arg0: i32, %arg1: i32) -> (i32, i32, i32, i32) {
    %c0_i32 = arith.constant 0 : i32
    %c0_i32_0 = arith.constant 0 : i32
    %c0_i32_1 = arith.constant 0 : i32
    return %arg0, %arg1, %c0_i32, %c0_i32_0 : i32, i32, i32, i32
  }
  func.func @transform_8(%arg0: i32, %arg1: i32) -> (i32, i32, i32) {
    %c0_i32 = arith.constant 0 : i32
    %c0_i32_0 = arith.constant 0 : i32
    %c0_i32_1 = arith.constant 0 : i32
    return %arg0, %c0_i32, %c0_i32_0 : i32, i32, i32
  }
}

</mosaic_0001>

<llo_original>
// kernel: conv_lstm_module_forward.2
$region0: #{conv_lstm_module_forward.2}
  #allocation0 [shape = 'u32[]', space=smem, size = 0x4, offset = 0x4, fixed_abs, tag = 'smem constant byte address 0x4 - core index']
  #allocation1 [shape = 'u32[72,128]{1,0:T(1,128)}', space=vmem, size = 0x9000, scoped, tag = 'internal scratch']
  #allocation2 [shape = 'f32[32,256]{1,0:T(8,128)}', space=vmem, size = 0x8000, scoped, tag = 'scratch operand']
  #allocation3 [shape = 'f32[32,256]{1,0:T(8,128)}', space=vmem, size = 0x8000, scoped, tag = 'scratch operand']
  #allocation4 [shape = 'f32[288,256]{1,0:T(8,128)}', space=vmem, size = 0x48000, scoped, tag = 'scratch operand']
  #allocation5 [shape = 'f32[128,256]{1,0:T(8,128)}', space=vmem, size = 0x20000, scoped, tag = 'scratch operand']
  %s0 = inlined_call_operand.vmem [shape: f32[2,8,40,256], index: 0, kind: input, shape index: {}]
  %s1 = inlined_call_operand.vmem [shape: f32[128,40], index: 1, kind: input, shape index: {}]
  %s2 = inlined_call_operand.vmem [shape: f32[128,288], index: 2, kind: input, shape index: {}]
  %s3 = inlined_call_operand.vmem [shape: f32[128,1], index: 3, kind: input, shape index: {}]
  %s4 = inlined_call_operand.vmem [shape: f32[9,1,256], index: 4, kind: input, shape index: {}]
  %s5 = inlined_call_operand.vmem [shape: f32[2,32,256], index: 5, kind: input, shape index: {}, may-alias: {5,6}]
  %s6 = inlined_call_operand.vmem [shape: f32[2,32,256], index: 6, kind: input, shape index: {}, may-alias: {5,6}]
  %s7 = inlined_call_operand.vmem [shape: f32[2,8,32,256], index: 7, kind: output, shape index: {0}]
  %s8 = inlined_call_operand.vmem [shape: f32[2,32,256], index: 8, kind: output, shape index: {1}]
  %9 = xla_tuple %s7, %s8
  %s10 = sld [smem:[#allocation0]]
  $region77: #{conv_lstm_module_forward.2} parent=0
    _
  %s12 = ssub.s32 1, %s10
  %s13 = scalar_select 0, %s12, %s10
  loop: start=0, step=1, limit=18
  $region2: #{conv_lstm_module_forward.2} parent=0 // loop_pre_header
    _
  $region3: #{conv_lstm_module_forward.2} parent=0 // loop_header
    %s15 = sphi 0, %s19
    %p16 = scmp.ge.s32.totalorder %s15, 18
    %s22 = sphi 0, %s34
    %s23 = sphi 0, %s30
    %s24 = sphi 0, %s22
    %s25 = sphi 0, %s23
    %s26 = sphi 0, %s24
    %s27 = sphi 0, %s25
    %s39 = sphi 0, %s41
    %s42 = sphi 0, %s39
    %s43 = sphi 0, %s42
    %s59 = sphi 0, %s43
    %s63 = sphi 0, %s63
    %s65 = sphi 0, %s63
    %s66 = sphi 0, %s65
    %s80 = sphi 0, %s66
    %s84 = sphi 0, %s84
    %s86 = sphi 0, %s84
    %s87 = sphi 0, %s86
    %s101 = sphi 0, %s87
    %s105 = sphi 0, %s105
    %s107 = sphi 0, %s105
    %s108 = sphi 0, %s107
    %s122 = sphi 0, %s108
    %s126 = sphi 0, %s126
    %s128 = sphi 0, %s126
    %s129 = sphi 0, %s128
    %s143 = sphi 0, %s129
    %s149 = sphi 0, %s151
    %s152 = sphi 0, %s149
    %s153 = sphi 0, %s152
    %s169 = sphi 0, %s153
    %s175 = sphi 0, %s177
    %s178 = sphi 0, %s175
    %s179 = sphi 0, %s178
    %s195 = sphi 0, %s179
    %s203 = sphi 0, %s205
    %s206 = sphi 0, %s203
    %s207 = sphi 0, %s206
    %s223 = sphi 0, %s207
    %s229 = sphi 0, %s231
    %s232 = sphi 0, %s229
    %s233 = sphi 0, %s232
    %s249 = sphi 0, %s233
  $region4: #{conv_lstm_module_forward.2} parent=0 // loop_header_branch
    %18 = sbr.rel (%p16) target = $region8
  $region5: #{conv_lstm_module_forward.2} parent=0 // loop_body
    %s20 = ssub.s32 %s15, 1
    %s21 = ssub.s32 %s15, 2
    %s28 = sadd.s32 1, %s23
    %p29 = scmp.ge.s32.totalorder %s28, 8
    %s30 = scalar_select %p29, 0, %s28
    %s31 = sadd.s32 1, %s22
    %s32 = scalar_select %p29, %s31, %s22
    %p33 = scmp.ge.s32.totalorder %s32, 2
    %s34 = scalar_select %p33, 0, %s32
    %s35 = ssub.s32 %s22, %s34
    %s36 = ssub.s32 %s23, %s30
    %s37 = sor.u32 %s35, %s36
    %p38 = scmp.eq.s32.totalorder %s37, 0
    %s40 = sadd.s32 %s39, 1
    %s41 = scalar_select %p38, %s39, %s40
    %p44 = pneg %p38
    %p45 = scmp.eq.s32.totalorder %s15, 15
    %p46 = por %p44, %p45
    %p47 = scmp.ne.s32.totalorder %s39, %s42
    %p48 = scmp.eq.s32.totalorder %s15, 0
    %p49 = por %p47, %p48
    %p50 = scmp.ne.s32.totalorder %s39, %s42
    %p51 = scmp.eq.s32.totalorder %s20, 15
    %p52 = por %p50, %p51
    %p53 = scmp.ne.s32.totalorder %s42, %s43
    %p54 = scmp.eq.s32.totalorder %s20, 0
    %p55 = por %p53, %p54
    %p56 = scmp.ne.s32.totalorder %s42, %s43
    %p57 = scmp.eq.s32.totalorder %s21, 15
    %p58 = por %p56, %p57
    %p60 = scmp.ne.s32.totalorder %s43, %s59
    %p61 = scmp.eq.s32.totalorder %s21, 0
    %p62 = por %p60, %p61
    %s64 = sadd.s32 %s63, 1
    %p67 = scmp.eq.s32.totalorder %s15, 15
    %p68 = scmp.ne.s32.totalorder %s63, %s65
    %p69 = scmp.eq.s32.totalorder %s15, 0
    %p70 = por %p68, %p69
    %p71 = scmp.ne.s32.totalorder %s63, %s65
    %p72 = scmp.eq.s32.totalorder %s20, 15
    %p73 = por %p71, %p72
    %p74 = scmp.ne.s32.totalorder %s65, %s66
    %p75 = scmp.eq.s32.totalorder %s20, 0
    %p76 = por %p74, %p75
    %p77 = scmp.ne.s32.totalorder %s65, %s66
    %p78 = scmp.eq.s32.totalorder %s21, 15
    %p79 = por %p77, %p78
    %p81 = scmp.ne.s32.totalorder %s66, %s80
    %p82 = scmp.eq.s32.totalorder %s21, 0
    %p83 = por %p81, %p82
    %s85 = sadd.s32 %s84, 1
    %p88 = scmp.eq.s32.totalorder %s15, 15
    %p89 = scmp.ne.s32.totalorder %s84, %s86
    %p90 = scmp.eq.s32.totalorder %s15, 0
    %p91 = por %p89, %p90
    %p92 = scmp.ne.s32.totalorder %s84, %s86
    %p93 = scmp.eq.s32.totalorder %s20, 15
    %p94 = por %p92, %p93
    %p95 = scmp.ne.s32.totalorder %s86, %s87
    %p96 = scmp.eq.s32.totalorder %s20, 0
    %p97 = por %p95, %p96
    %p98 = scmp.ne.s32.totalorder %s86, %s87
    %p99 = scmp.eq.s32.totalorder %s21, 15
    %p100 = por %p98, %p99
    %p102 = scmp.ne.s32.totalorder %s87, %s101
    %p103 = scmp.eq.s32.totalorder %s21, 0
    %p104 = por %p102, %p103
    %s106 = sadd.s32 %s105, 1
    %p109 = scmp.eq.s32.totalorder %s15, 15
    %p110 = scmp.ne.s32.totalorder %s105, %s107
    %p111 = scmp.eq.s32.totalorder %s15, 0
    %p112 = por %p110, %p111
    %p113 = scmp.ne.s32.totalorder %s105, %s107
    %p114 = scmp.eq.s32.totalorder %s20, 15
    %p115 = por %p113, %p114
    %p116 = scmp.ne.s32.totalorder %s107, %s108
    %p117 = scmp.eq.s32.totalorder %s20, 0
    %p118 = por %p116, %p117
    %p119 = scmp.ne.s32.totalorder %s107, %s108
    %p120 = scmp.eq.s32.totalorder %s21, 15
    %p121 = por %p119, %p120
    %p123 = scmp.ne.s32.totalorder %s108, %s122
    %p124 = scmp.eq.s32.totalorder %s21, 0
    %p125 = por %p123, %p124
    %s127 = sadd.s32 %s126, 1
    %p130 = scmp.eq.s32.totalorder %s15, 15
    %p131 = scmp.ne.s32.totalorder %s126, %s128
    %p132 = scmp.eq.s32.totalorder %s15, 0
    %p133 = por %p131, %p132
    %p134 = scmp.ne.s32.totalorder %s126, %s128
    %p135 = scmp.eq.s32.totalorder %s20, 15
    %p136 = por %p134, %p135
    %p137 = scmp.ne.s32.totalorder %s128, %s129
    %p138 = scmp.eq.s32.totalorder %s20, 0
    %p139 = por %p137, %p138
    %p140 = scmp.ne.s32.totalorder %s128, %s129
    %p141 = scmp.eq.s32.totalorder %s21, 15
    %p142 = por %p140, %p141
    %p144 = scmp.ne.s32.totalorder %s129, %s143
    %p145 = scmp.eq.s32.totalorder %s21, 0
    %p146 = por %p144, %p145
    %s147 = ssub.s32 %s22, %s34
    %p148 = scmp.eq.s32.totalorder %s147, 0
    %s150 = sadd.s32 %s149, 1
    %s151 = scalar_select %p148, %s149, %s150
    %p154 = pneg %p148
    %p155 = scmp.eq.s32.totalorder %s15, 15
    %p156 = por %p154, %p155
    %p157 = scmp.ne.s32.totalorder %s149, %s152
    %p158 = scmp.eq.s32.totalorder %s15, 0
    %p159 = por %p157, %p158
    %p160 = scmp.ne.s32.totalorder %s149, %s152
    %p161 = scmp.eq.s32.totalorder %s20, 15
    %p162 = por %p160, %p161
    %p163 = scmp.ne.s32.totalorder %s152, %s153
    %p164 = scmp.eq.s32.totalorder %s20, 0
    %p165 = por %p163, %p164
    %p166 = scmp.ne.s32.totalorder %s152, %s153
    %p167 = scmp.eq.s32.totalorder %s21, 15
    %p168 = por %p166, %p167
    %p170 = scmp.ne.s32.totalorder %s153, %s169
    %p171 = scmp.eq.s32.totalorder %s21, 0
    %p172 = por %p170, %p171
    %s173 = ssub.s32 %s22, %s34
    %p174 = scmp.eq.s32.totalorder %s173, 0
    %s176 = sadd.s32 %s175, 1
    %s177 = scalar_select %p174, %s175, %s176
    %p180 = pneg %p174
    %p181 = scmp.eq.s32.totalorder %s15, 15
    %p182 = por %p180, %p181
    %p183 = scmp.ne.s32.totalorder %s175, %s178
    %p184 = scmp.eq.s32.totalorder %s15, 0
    %p185 = por %p183, %p184
    %p186 = scmp.ne.s32.totalorder %s175, %s178
    %p187 = scmp.eq.s32.totalorder %s20, 15
    %p188 = por %p186, %p187
    %p189 = scmp.ne.s32.totalorder %s178, %s179
    %p190 = scmp.eq.s32.totalorder %s20, 0
    %p191 = por %p189, %p190
    %p192 = scmp.ne.s32.totalorder %s178, %s179
    %p193 = scmp.eq.s32.totalorder %s21, 15
    %p194 = por %p192, %p193
    %p196 = scmp.ne.s32.totalorder %s179, %s195
    %p197 = scmp.eq.s32.totalorder %s21, 0
    %p198 = por %p196, %p197
    %s199 = ssub.s32 %s22, %s34
    %s200 = ssub.s32 %s23, %s30
    %s201 = sor.u32 %s199, %s200
    %p202 = scmp.eq.s32.totalorder %s201, 0
    %s204 = sadd.s32 %s203, 1
    %s205 = scalar_select %p202, %s203, %s204
    %p208 = pneg %p202
    %p209 = scmp.eq.s32.totalorder %s15, 15
    %p210 = por %p208, %p209
    %p211 = scmp.ne.s32.totalorder %s203, %s206
    %p212 = scmp.eq.s32.totalorder %s15, 0
    %p213 = por %p211, %p212
    %p214 = scmp.ne.s32.totalorder %s203, %s206
    %p215 = scmp.eq.s32.totalorder %s20, 15
    %p216 = por %p214, %p215
    %p217 = scmp.ne.s32.totalorder %s206, %s207
    %p218 = scmp.eq.s32.totalorder %s20, 0
    %p219 = por %p217, %p218
    %p220 = scmp.ne.s32.totalorder %s206, %s207
    %p221 = scmp.eq.s32.totalorder %s21, 15
    %p222 = por %p220, %p221
    %p224 = scmp.ne.s32.totalorder %s207, %s223
    %p225 = scmp.eq.s32.totalorder %s21, 0
    %p226 = por %p224, %p225
    %s227 = ssub.s32 %s22, %s34
    %p228 = scmp.eq.s32.totalorder %s227, 0
    %s230 = sadd.s32 %s229, 1
    %s231 = scalar_select %p228, %s229, %s230
    %p234 = pneg %p228
    %p235 = scmp.eq.s32.totalorder %s15, 15
    %p236 = por %p234, %p235
    %p237 = scmp.ne.s32.totalorder %s229, %s232
    %p238 = scmp.eq.s32.totalorder %s15, 0
    %p239 = por %p237, %p238
    %p240 = scmp.ne.s32.totalorder %s229, %s232
    %p241 = scmp.eq.s32.totalorder %s20, 15
    %p242 = por %p240, %p241
    %p243 = scmp.ne.s32.totalorder %s232, %s233
    %p244 = scmp.eq.s32.totalorder %s20, 0
    %p245 = por %p243, %p244
    %p246 = scmp.ne.s32.totalorder %s232, %s233
    %p247 = scmp.eq.s32.totalorder %s21, 15
    %p248 = por %p246, %p247
    %p250 = scmp.ne.s32.totalorder %s233, %s249
    %p251 = scmp.eq.s32.totalorder %s21, 0
    %p252 = por %p250, %p251
    %p253 = scmp.le.s32.totalorder 1, %s15
    %p254 = scmp.lt.s32.totalorder %s15, 17
    %p255 = pnand %p253, %p254
    %p256 = pneg %p255
    // Predicated region
    $region9: #{conv_lstm_module_forward.2} parent=5 // pred_check
      _
    $region10: #{conv_lstm_module_forward.2} parent=5 // pred_check_branch
      %258 = sbr.rel (%p255) target = $region12
    $region11: #{conv_lstm_module_forward.2} parent=5 // pred_region
      %s259 = ssub.s32 %s15, 1
      // Predicated region
      $region13: #{conv_lstm_module_forward.2} parent=11 // pred_check
        %p260 = pneg %p76
      $region14: #{conv_lstm_module_forward.2} parent=11 // pred_check_branch
        %262 = sbr.rel (%p260) target = $region16
      $region15: #{conv_lstm_module_forward.2} parent=11 // pred_region
        _
      $region16: #{conv_lstm_module_forward.2} parent=11 // pred_fallthru
        _
      // Predicated region
      $region17: #{conv_lstm_module_forward.2} parent=11 // pred_check
        %p263 = pneg %p97
      $region18: #{conv_lstm_module_forward.2} parent=11 // pred_check_branch
        %265 = sbr.rel (%p263) target = $region20
      $region19: #{conv_lstm_module_forward.2} parent=11 // pred_region
        _
      $region20: #{conv_lstm_module_forward.2} parent=11 // pred_fallthru
        _
      // Predicated region
      $region21: #{conv_lstm_module_forward.2} parent=11 // pred_check
        %p266 = pneg %p118
      $region22: #{conv_lstm_module_forward.2} parent=11 // pred_check_branch
        %268 = sbr.rel (%p266) target = $region24
      $region23: #{conv_lstm_module_forward.2} parent=11 // pred_region
        _
      $region24: #{conv_lstm_module_forward.2} parent=11 // pred_fallthru
        _
      // Predicated region
      $region25: #{conv_lstm_module_forward.2} parent=11 // pred_check
        %p269 = pneg %p139
      $region26: #{conv_lstm_module_forward.2} parent=11 // pred_check_branch
        %271 = sbr.rel (%p269) target = $region28
      $region27: #{conv_lstm_module_forward.2} parent=11 // pred_region
        _
      $region28: #{conv_lstm_module_forward.2} parent=11 // pred_fallthru
        _
    $region12: #{conv_lstm_module_forward.2} parent=5 // pred_fallthru
      _
    %p272 = scmp.lt.s32.totalorder %s15, 16
    // Predicated region
    $region29: #{conv_lstm_module_forward.2} parent=5 // pred_check
      %p273 = pneg %p272
    $region30: #{conv_lstm_module_forward.2} parent=5 // pred_check_branch
      %275 = sbr.rel (%p273) target = $region32
    $region31: #{conv_lstm_module_forward.2} parent=5 // pred_region
      // Predicated region
      $region33: #{conv_lstm_module_forward.2} parent=31 // pred_check
        %p276 = pneg %p49
      $region34: #{conv_lstm_module_forward.2} parent=31 // pred_check_branch
        %278 = sbr.rel (%p276) target = $region36
      $region35: #{conv_lstm_module_forward.2} parent=31 // pred_region
        %p279 = scmp.lt.s32.totalorder %s22, 1
        %s280 = scalar_select %p279, %s22, 1
        %p281 = scmp.lt.s32.totalorder %s23, 7
        %s282 = scalar_select %p281, %s23, 7
        %s283 = smul.addr %s282, 10
        %s284 = smul.addr %s280, 80
        %s285 = sadd.s32 %s283, %s284
        %s286 = smul.addr %s285, 8
        %s287 = scalar_lea.vmem %s0, %s286
      $region36: #{conv_lstm_module_forward.2} parent=31 // pred_fallthru
        _
      // Predicated region
      $region37: #{conv_lstm_module_forward.2} parent=31 // pred_check
        %p288 = pneg %p159
      $region38: #{conv_lstm_module_forward.2} parent=31 // pred_check_branch
        %290 = sbr.rel (%p288) target = $region40
      $region39: #{conv_lstm_module_forward.2} parent=31 // pred_region
        %p291 = scmp.lt.s32.totalorder %s22, 1
        %s292 = scalar_select %p291, %s22, 1
        %s293 = smul.addr %s292, 8
        %s294 = smul.addr %s293, 8
        %s295 = scalar_lea.vmem %s5, %s294
      $region40: #{conv_lstm_module_forward.2} parent=31 // pred_fallthru
        _
      // Predicated region
      $region41: #{conv_lstm_module_forward.2} parent=31 // pred_check
        %p296 = pneg %p185
      $region42: #{conv_lstm_module_forward.2} parent=31 // pred_check_branch
        %298 = sbr.rel (%p296) target = $region44
      $region43: #{conv_lstm_module_forward.2} parent=31 // pred_region
        %p299 = scmp.lt.s32.totalorder %s22, 1
        %s300 = scalar_select %p299, %s22, 1
        %s301 = smul.addr %s300, 8
        %s302 = smul.addr %s301, 8
        %s303 = scalar_lea.vmem %s6, %s302
      $region44: #{conv_lstm_module_forward.2} parent=31 // pred_fallthru
        _
    $region32: #{conv_lstm_module_forward.2} parent=5 // pred_fallthru
      _
    %p304 = scmp.le.s32.totalorder 1, %s15
    %p305 = scmp.lt.s32.totalorder %s15, 17
    %p306 = pnand %p304, %p305
    %p307 = pneg %p306
    // Predicated region
    $region45: #{conv_lstm_module_forward.2} parent=5 // pred_check
      _
    $region46: #{conv_lstm_module_forward.2} parent=5 // pred_check_branch
      %309 = sbr.rel (%p306) target = $region48
    $region47: #{conv_lstm_module_forward.2} parent=5 // pred_region
      %s310 = ssub.s32 %s15, 1
      %p311 = scmp.lt.s32.totalorder %s24, 1
      %s312 = scalar_select %p311, %s24, 1
      %p313 = scmp.lt.s32.totalorder %s25, 7
      %s314 = scalar_select %p313, %s25, 7
      %s315 = smul.addr %s314, 10
      %s316 = smul.addr %s312, 80
      %s317 = sadd.s32 %s315, %s316
      %s318 = smul.addr %s317, 8
      %s319 = scalar_lea.vmem %s0, %s318
      %p320 = pneg %p55
      %p321 = pneg %p52
      %p322 = pneg %p76
      %p323 = pneg %p73
      %p324 = pneg %p97
      %p325 = pneg %p94
      %p326 = pneg %p118
      %p327 = pneg %p115
      %p328 = pneg %p139
      %p329 = pneg %p136
      %p330 = scmp.lt.s32.totalorder %s24, 1
      %s331 = scalar_select %p330, %s24, 1
      %s332 = smul.addr %s331, 8
      %s333 = smul.addr %s332, 8
      %s334 = scalar_lea.vmem %s5, %s333
      %p335 = pneg %p165
      %p336 = pneg %p162
      %p337 = scmp.lt.s32.totalorder %s24, 1
      %s338 = scalar_select %p337, %s24, 1
      %s339 = smul.addr %s338, 8
      %s340 = smul.addr %s339, 8
      %s341 = scalar_lea.vmem %s6, %s340
      %p342 = pneg %p191
      %p343 = pneg %p188
      %p344 = pneg %p219
      %p345 = pneg %p216
      %p346 = scmp.lt.s32.totalorder %s24, 1
      %s347 = scalar_select %p346, %s24, 1
      %p348 = scmp.lt.s32.totalorder %s25, 7
      %s349 = scalar_select %p348, %s25, 7
      %s350 = smul.addr %s349, 8
      %s351 = smul.addr %s347, 64
      %s352 = sadd.s32 %s350, %s351
      %s353 = smul.addr %s352, 8
      %s354 = scalar_lea.vmem %s7, %s353
      %p355 = pneg %p245
      %p356 = pneg %p242
      %p357 = scmp.lt.s32.totalorder %s24, 1
      %s358 = scalar_select %p357, %s24, 1
      %s359 = smul.addr %s358, 8
      %s360 = smul.addr %s359, 8
      %s361 = scalar_lea.vmem %s8, %s360
      %p362 = scmp.lt.s32.totalorder %s24, 1
      %s363 = scalar_select %p362, %s24, 1
      %p364 = scmp.lt.s32.totalorder %s25, 7
      %s365 = scalar_select %p364, %s25, 7
      %s366 = smul.addr %s365, 10
      %s367 = smul.addr %s363, 80
      %s368 = sadd.s32 %s366, %s367
      %s369 = smul.addr %s368, 8
      %s370 = scalar_lea.vmem %s0, %s369
      %p371 = scmp.lt.s32.totalorder %s24, 1
      %s372 = scalar_select %p371, %s24, 1
      %s373 = smul.addr %s372, 8
      %s374 = smul.addr %s373, 8
      %s375 = scalar_lea.vmem %s5, %s374
      %p376 = scmp.lt.s32.totalorder %s24, 1
      %s377 = scalar_select %p376, %s24, 1
      %s378 = smul.addr %s377, 8
      %s379 = smul.addr %s378, 8
      %s380 = scalar_lea.vmem %s6, %s379
      %p381 = scmp.lt.s32.totalorder %s24, 1
      %s382 = scalar_select %p381, %s24, 1
      %p383 = scmp.lt.s32.totalorder %s25, 7
      %s384 = scalar_select %p383, %s25, 7
      %s385 = smul.addr %s384, 8
      %s386 = smul.addr %s382, 64
      %s387 = sadd.s32 %s385, %s386
      %s388 = smul.addr %s387, 8
      %s389 = scalar_lea.vmem %s7, %s388
      %p390 = scmp.lt.s32.totalorder %s24, 1
      %s391 = scalar_select %p390, %s24, 1
      %s392 = smul.addr %s391, 8
      %s393 = smul.addr %s392, 8
      %s394 = scalar_lea.vmem %s8, %s393
      %p395 = scmp.eq.s32.totalorder %s25, 0
      // Predicated region
      $region49: #{conv_lstm_module_forward.2} parent=47 // pred_check
        %p396 = pneg %p395
      $region50: #{conv_lstm_module_forward.2} parent=47 // pred_check_branch
        %398 = sbr.rel (%p396) target = $region52
      $region51: #{conv_lstm_module_forward.2} parent=47 // pred_region
        %v399 = vld [vmem:[%s375] sm:$0xff]
        %v400 = vld [vmem:[%s375 + $0x8] sm:$0xff]
        %v401 = vld [vmem:[%s375 + $0x10] sm:$0xff]
        %v402 = vld [vmem:[%s375 + $0x18] sm:$0xff]
        %v403 = vld [vmem:[%s375 + $0x20] sm:$0xff]
        %v404 = vld [vmem:[%s375 + $0x28] sm:$0xff]
        %v405 = vld [vmem:[%s375 + $0x30] sm:$0xff]
        %v406 = vld [vmem:[%s375 + $0x38] sm:$0xff]
        %407 = vst [vmem:[#allocation2] sm:$0xff] %v399
        %408 = vst [vmem:[#allocation2 + $0x8] sm:$0xff] %v400
        %409 = vst [vmem:[#allocation2 + $0x10] sm:$0xff] %v401
        %410 = vst [vmem:[#allocation2 + $0x18] sm:$0xff] %v402
        %411 = vst [vmem:[#allocation2 + $0x20] sm:$0xff] %v403
        %412 = vst [vmem:[#allocation2 + $0x28] sm:$0xff] %v404
        %413 = vst [vmem:[#allocation2 + $0x30] sm:$0xff] %v405
        %414 = vst [vmem:[#allocation2 + $0x38] sm:$0xff] %v406
        %v415 = vld [vmem:[%s380] sm:$0xff]
        %v416 = vld [vmem:[%s380 + $0x8] sm:$0xff]
        %v417 = vld [vmem:[%s380 + $0x10] sm:$0xff]
        %v418 = vld [vmem:[%s380 + $0x18] sm:$0xff]
        %v419 = vld [vmem:[%s380 + $0x20] sm:$0xff]
        %v420 = vld [vmem:[%s380 + $0x28] sm:$0xff]
        %v421 = vld [vmem:[%s380 + $0x30] sm:$0xff]
        %v422 = vld [vmem:[%s380 + $0x38] sm:$0xff]
        %423 = vst [vmem:[#allocation3] sm:$0xff] %v415
        %424 = vst [vmem:[#allocation3 + $0x8] sm:$0xff] %v416
        %425 = vst [vmem:[#allocation3 + $0x10] sm:$0xff] %v417
        %426 = vst [vmem:[#allocation3 + $0x18] sm:$0xff] %v418
        %427 = vst [vmem:[#allocation3 + $0x20] sm:$0xff] %v419
        %428 = vst [vmem:[#allocation3 + $0x28] sm:$0xff] %v420
        %429 = vst [vmem:[#allocation3 + $0x30] sm:$0xff] %v421
        %430 = vst [vmem:[#allocation3 + $0x38] sm:$0xff] %v422
      $region52: #{conv_lstm_module_forward.2} parent=47 // pred_fallthru
        _
      %v431 = vld [vmem:[%s1] sm:$0xff]
      %v432 = vld [vmem:[%s1 + $0x8] sm:$0xff]
      %v433 = vld [vmem:[%s1 + $0x10] sm:$0xff]
      %v434 = vld [vmem:[%s1 + $0x18] sm:$0xff]
      %v435 = vld [vmem:[%s1 + $0x20] sm:$0xff]
      %v436 = vld [vmem:[%s1 + $0x28] sm:$0xff]
      %v437 = vld [vmem:[%s1 + $0x30] sm:$0xff]
      %v438 = vld [vmem:[%s1 + $0x38] sm:$0xff]
      %v439 = vld [vmem:[%s1 + $0x40] sm:$0xff]
      %v440 = vld [vmem:[%s1 + $0x48] sm:$0xff]
      %v441 = vld [vmem:[%s1 + $0x50] sm:$0xff]
      %v442 = vld [vmem:[%s1 + $0x58] sm:$0xff]
      %v443 = vld [vmem:[%s1 + $0x60] sm:$0xff]
      %v444 = vld [vmem:[%s1 + $0x68] sm:$0xff]
      %v445 = vld [vmem:[%s1 + $0x70] sm:$0xff]
      %v446 = vld [vmem:[%s1 + $0x78] sm:$0xff]
      %v447 = vld [vmem:[%s370] sm:$0xff]
      %v448 = vld [vmem:[%s370 + $0x8] sm:$0xff]
      %v449 = vld [vmem:[%s370 + $0x10] sm:$0xff]
      %v450 = vld [vmem:[%s370 + $0x18] sm:$0xff]
      %v451 = vld [vmem:[%s370 + $0x20] sm:$0xff]
      %v452 = vld [vmem:[%s370 + $0x28] sm:$0xff]
      %v453 = vld [vmem:[%s370 + $0x30] sm:$0xff]
      %v454 = vld [vmem:[%s370 + $0x38] sm:$0xff]
      %v455 = vld [vmem:[%s370 + $0x40] sm:$0xff]
      %v456 = vld [vmem:[%s370 + $0x48] sm:$0xff]
      %vm457 = vcmask 326656
      %v459 = vsel %vm457, %v431, 0
      %v462 = vsel %vm457, %v432, 0
      %v465 = vsel %vm457, %v433, 0
      %v468 = vsel %vm457, %v434, 0
      %v471 = vsel %vm457, %v435, 0
      %v474 = vsel %vm457, %v436, 0
      %v477 = vsel %vm457, %v437, 0
      %v480 = vsel %vm457, %v438, 0
      %v483 = vsel %vm457, %v439, 0
      %v486 = vsel %vm457, %v440, 0
      %v489 = vsel %vm457, %v441, 0
      %v492 = vsel %vm457, %v442, 0
      %v495 = vsel %vm457, %v443, 0
      %v498 = vsel %vm457, %v444, 0
      %v501 = vsel %vm457, %v445, 0
      %v504 = vsel %vm457, %v446, 0
      %506 = vmatpush.msra.mxu0 0.0
      %507 = vmatpush.msra.mxu0 0.0
      %508 = vmatpush.msra.mxu0 0.0
      %509 = vmatpush.msra.mxu0 0.0
      %510 = vmatpush.msra.mxu0 0.0
      %511 = vmatpush.msra.mxu0 0.0
      %512 = vmatpush.msra.mxu0 0.0
      %513 = vmatpush.msra.mxu0 0.0
      %514 = vmatpush.msra.mxu0 0.0
      %515 = vmatpush.msra.mxu0 0.0
      %516 = vmatpush.msra.mxu0 0.0
      %517 = vmatpush.msra.mxu0 %v455
      %518 = vmatpush.msra.mxu0 %v453
      %519 = vmatpush.msra.mxu0 %v451
      %520 = vmatpush.msra.mxu0 %v449
      %521 = vmatpush.msra.mxu0 %v447
      %522 = vmatmul.f32.gmra.mxu0 %v459
      %v523 = vpop.f32.mrf.mxu0
      %v524 = vadd.f32 0.0, %v523
      %525 = vmatmul.f32.gmra.mxu0 %v462
      %v526 = vpop.f32.mrf.mxu0
      %v527 = vadd.f32 0.0, %v526
      %528 = vmatmul.f32.gmra.mxu0 %v465
      %v529 = vpop.f32.mrf.mxu0
      %v530 = vadd.f32 0.0, %v529
      %531 = vmatmul.f32.gmra.mxu0 %v468
      %v532 = vpop.f32.mrf.mxu0
      %v533 = vadd.f32 0.0, %v532
      %534 = vmatmul.f32.gmra.mxu0 %v471
      %v535 = vpop.f32.mrf.mxu0
      %v536 = vadd.f32 0.0, %v535
      %537 = vmatmul.f32.gmra.mxu0 %v474
      %v538 = vpop.f32.mrf.mxu0
      %v539 = vadd.f32 0.0, %v538
      %540 = vmatmul.f32.gmra.mxu0 %v477
      %v541 = vpop.f32.mrf.mxu0
      %v542 = vadd.f32 0.0, %v541
      %543 = vmatmul.f32.gmra.mxu0 %v480
      %v544 = vpop.f32.mrf.mxu0
      %v545 = vadd.f32 0.0, %v544
      %546 = vmatmul.f32.gmra.mxu0 %v483
      %v547 = vpop.f32.mrf.mxu0
      %v548 = vadd.f32 0.0, %v547
      %549 = vmatmul.f32.gmra.mxu0 %v486
      %v550 = vpop.f32.mrf.mxu0
      %v551 = vadd.f32 0.0, %v550
      %552 = vmatmul.f32.gmra.mxu0 %v489
      %v553 = vpop.f32.mrf.mxu0
      %v554 = vadd.f32 0.0, %v553
      %555 = vmatmul.f32.gmra.mxu0 %v492
      %v556 = vpop.f32.mrf.mxu0
      %v557 = vadd.f32 0.0, %v556
      %558 = vmatmul.f32.gmra.mxu0 %v495
      %v559 = vpop.f32.mrf.mxu0
      %v560 = vadd.f32 0.0, %v559
      %561 = vmatmul.f32.gmra.mxu0 %v498
      %v562 = vpop.f32.mrf.mxu0
      %v563 = vadd.f32 0.0, %v562
      %564 = vmatmul.f32.gmra.mxu0 %v501
      %v565 = vpop.f32.mrf.mxu0
      %v566 = vadd.f32 0.0, %v565
      %567 = vmatmul.f32.gmra.mxu0 %v504
      %v568 = vpop.f32.mrf.mxu0
      %v569 = vadd.f32 0.0, %v568
      %570 = vdwg.mxu0
      %571 = vmatpush.msra.mxu0 0.0
      %572 = vmatpush.msra.mxu0 0.0
      %573 = vmatpush.msra.mxu0 0.0
      %574 = vmatpush.msra.mxu0 0.0
      %575 = vmatpush.msra.mxu0 0.0
      %576 = vmatpush.msra.mxu0 0.0
      %577 = vmatpush.msra.mxu0 0.0
      %578 = vmatpush.msra.mxu0 0.0
      %579 = vmatpush.msra.mxu0 0.0
      %580 = vmatpush.msra.mxu0 0.0
      %581 = vmatpush.msra.mxu0 0.0
      %582 = vmatpush.msra.mxu0 %v456
      %583 = vmatpush.msra.mxu0 %v454
      %584 = vmatpush.msra.mxu0 %v452
      %585 = vmatpush.msra.mxu0 %v450
      %586 = vmatpush.msra.mxu0 %v448
      %587 = vmatmul.f32.gmra.mxu0 %v459
      %v588 = vpop.f32.mrf.mxu0
      %v589 = vadd.f32 0.0, %v588
      %590 = vmatmul.f32.gmra.mxu0 %v462
      %v591 = vpop.f32.mrf.mxu0
      %v592 = vadd.f32 0.0, %v591
      %593 = vmatmul.f32.gmra.mxu0 %v465
      %v594 = vpop.f32.mrf.mxu0
      %v595 = vadd.f32 0.0, %v594
      %596 = vmatmul.f32.gmra.mxu0 %v468
      %v597 = vpop.f32.mrf.mxu0
      %v598 = vadd.f32 0.0, %v597
      %599 = vmatmul.f32.gmra.mxu0 %v471
      %v600 = vpop.f32.mrf.mxu0
      %v601 = vadd.f32 0.0, %v600
      %602 = vmatmul.f32.gmra.mxu0 %v474
      %v603 = vpop.f32.mrf.mxu0
      %v604 = vadd.f32 0.0, %v603
      %605 = vmatmul.f32.gmra.mxu0 %v477
      %v606 = vpop.f32.mrf.mxu0
      %v607 = vadd.f32 0.0, %v606
      %608 = vmatmul.f32.gmra.mxu0 %v480
      %v609 = vpop.f32.mrf.mxu0
      %v610 = vadd.f32 0.0, %v609
      %611 = vmatmul.f32.gmra.mxu0 %v483
      %v612 = vpop.f32.mrf.mxu0
      %v613 = vadd.f32 0.0, %v612
      %614 = vmatmul.f32.gmra.mxu0 %v486
      %v615 = vpop.f32.mrf.mxu0
      %v616 = vadd.f32 0.0, %v615
      %617 = vmatmul.f32.gmra.mxu0 %v489
      %v618 = vpop.f32.mrf.mxu0
      %v619 = vadd.f32 0.0, %v618
      %620 = vmatmul.f32.gmra.mxu0 %v492
      %v621 = vpop.f32.mrf.mxu0
      %v622 = vadd.f32 0.0, %v621
      %623 = vmatmul.f32.gmra.mxu0 %v495
      %v624 = vpop.f32.mrf.mxu0
      %v625 = vadd.f32 0.0, %v624
      %626 = vmatmul.f32.gmra.mxu0 %v498
      %v627 = vpop.f32.mrf.mxu0
      %v628 = vadd.f32 0.0, %v627
      %629 = vmatmul.f32.gmra.mxu0 %v501
      %v630 = vpop.f32.mrf.mxu0
      %v631 = vadd.f32 0.0, %v630
      %632 = vmatmul.f32.gmra.mxu0 %v504
      %v633 = vpop.f32.mrf.mxu0
      %v634 = vadd.f32 0.0, %v633
      %635 = vdwg.mxu0
      %636 = vst [vmem:[#allocation5] sm:$0xff] %v524
      %637 = vst [vmem:[#allocation5 + $0x8] sm:$0xff] %v589
      %638 = vst [vmem:[#allocation5 + $0x10] sm:$0xff] %v527
      %639 = vst [vmem:[#allocation5 + $0x18] sm:$0xff] %v592
      %640 = vst [vmem:[#allocation5 + $0x20] sm:$0xff] %v530
      %641 = vst [vmem:[#allocation5 + $0x28] sm:$0xff] %v595
      %642 = vst [vmem:[#allocation5 + $0x30] sm:$0xff] %v533
      %643 = vst [vmem:[#allocation5 + $0x38] sm:$0xff] %v598
      %644 = vst [vmem:[#allocation5 + $0x40] sm:$0xff] %v536
      %645 = vst [vmem:[#allocation5 + $0x48] sm:$0xff] %v601
      %646 = vst [vmem:[#allocation5 + $0x50] sm:$0xff] %v539
      %647 = vst [vmem:[#allocation5 + $0x58] sm:$0xff] %v604
      %648 = vst [vmem:[#allocation5 + $0x60] sm:$0xff] %v542
      %649 = vst [vmem:[#allocation5 + $0x68] sm:$0xff] %v607
      %650 = vst [vmem:[#allocation5 + $0x70] sm:$0xff] %v545
      %651 = vst [vmem:[#allocation5 + $0x78] sm:$0xff] %v610
      %652 = vst [vmem:[#allocation5 + $0x80] sm:$0xff] %v548
      %653 = vst [vmem:[#allocation5 + $0x88] sm:$0xff] %v613
      %654 = vst [vmem:[#allocation5 + $0x90] sm:$0xff] %v551
      %655 = vst [vmem:[#allocation5 + $0x98] sm:$0xff] %v616
      %656 = vst [vmem:[#allocation5 + $0xa0] sm:$0xff] %v554
      %657 = vst [vmem:[#allocation5 + $0xa8] sm:$0xff] %v619
      %658 = vst [vmem:[#allocation5 + $0xb0] sm:$0xff] %v557
      %659 = vst [vmem:[#allocation5 + $0xb8] sm:$0xff] %v622
      %660 = vst [vmem:[#allocation5 + $0xc0] sm:$0xff] %v560
      %661 = vst [vmem:[#allocation5 + $0xc8] sm:$0xff] %v625
      %662 = vst [vmem:[#allocation5 + $0xd0] sm:$0xff] %v563
      %663 = vst [vmem:[#allocation5 + $0xd8] sm:$0xff] %v628
      %664 = vst [vmem:[#allocation5 + $0xe0] sm:$0xff] %v566
      %665 = vst [vmem:[#allocation5 + $0xe8] sm:$0xff] %v631
      %666 = vst [vmem:[#allocation5 + $0xf0] sm:$0xff] %v569
      %667 = vst [vmem:[#allocation5 + $0xf8] sm:$0xff] %v634
      %v668 = vld [vmem:[#allocation2] sm:$0xff]
      %v669 = vld [vmem:[#allocation2 + $0x8] sm:$0xff]
      %v670 = vld [vmem:[#allocation2 + $0x10] sm:$0xff]
      %v671 = vld [vmem:[#allocation2 + $0x18] sm:$0xff]
      %v672 = vld [vmem:[#allocation2 + $0x20] sm:$0xff]
      %v673 = vld [vmem:[#allocation2 + $0x28] sm:$0xff]
      %v674 = vld [vmem:[#allocation2 + $0x30] sm:$0xff]
      %v675 = vld [vmem:[#allocation2 + $0x38] sm:$0xff]
      %676 = vrot.lane.b32.xlu0 %v668, 17
      %v677 = vpop.permute.xlu0 %676
      %678 = vrot.lane.b32.xlu0 %v670, 17
      %v679 = vpop.permute.xlu0 %678
      %680 = vrot.lane.b32.xlu0 %v672, 17
      %v681 = vpop.permute.xlu0 %680
      %682 = vrot.lane.b32.xlu0 %v674, 17
      %v683 = vpop.permute.xlu0 %682
      %684 = vrot.lane.b32.xlu0 %v669, 17
      %v685 = vpop.permute.xlu0 %684
      %686 = vrot.lane.b32.xlu0 %v671, 17
      %v687 = vpop.permute.xlu0 %686
      %688 = vrot.lane.b32.xlu0 %v673, 17
      %v689 = vpop.permute.xlu0 %688
      %690 = vrot.lane.b32.xlu0 %v675, 17
      %v691 = vpop.permute.xlu0 %690
      %v692 = vlaneseq
      %v693 = vand.u32 %v692, 127
      %vm694 = vcmp.lt.s32.totalorder %v693, 17
      %v695 = vsel %vm694, %v677, %v685
      %v696 = vsel %vm694, %v679, %v687
      %v697 = vsel %vm694, %v681, %v689
      %v698 = vsel %vm694, %v683, %v691
      %v699 = vsel %vm694, %v685, %v677
      %v700 = vsel %vm694, %v687, %v679
      %v701 = vsel %vm694, %v689, %v681
      %v702 = vsel %vm694, %v691, %v683
      %v703 = vld [vmem:[%s4] sm:$0x3]
      %v705 = vperm.slane %v703, 0
      %v706 = vperm.slane %v703, 1
      %v709 = vmul.f32 %v699, %v705
      %v710 = vmul.f32 %v695, %v706
      %v711 = vmul.f32 %v700, %v705
      %v712 = vmul.f32 %v696, %v706
      %v713 = vmul.f32 %v701, %v705
      %v714 = vmul.f32 %v697, %v706
      %v715 = vmul.f32 %v702, %v705
      %v716 = vmul.f32 %v698, %v706
      %717 = vst [vmem:[#allocation4] sm:$0xff] %v709
      %718 = vst [vmem:[#allocation4 + $0x8] sm:$0xff] %v710
      %719 = vst [vmem:[#allocation4 + $0x10] sm:$0xff] %v711
      %720 = vst [vmem:[#allocation4 + $0x18] sm:$0xff] %v712
      %721 = vst [vmem:[#allocation4 + $0x20] sm:$0xff] %v713
      %722 = vst [vmem:[#allocation4 + $0x28] sm:$0xff] %v714
      %723 = vst [vmem:[#allocation4 + $0x30] sm:$0xff] %v715
      %724 = vst [vmem:[#allocation4 + $0x38] sm:$0xff] %v716
      %725 = vrot.lane.b32.xlu0 %v668, 16
      %v726 = vpop.permute.xlu0 %725
      %727 = vrot.lane.b32.xlu0 %v670, 16
      %v728 = vpop.permute.xlu0 %727
      %729 = vrot.lane.b32.xlu0 %v672, 16
      %v730 = vpop.permute.xlu0 %729
      %731 = vrot.lane.b32.xlu0 %v674, 16
      %v732 = vpop.permute.xlu0 %731
      %733 = vrot.lane.b32.xlu0 %v669, 16
      %v734 = vpop.permute.xlu0 %733
      %735 = vrot.lane.b32.xlu0 %v671, 16
      %v736 = vpop.permute.xlu0 %735
      %737 = vrot.lane.b32.xlu0 %v673, 16
      %v738 = vpop.permute.xlu0 %737
      %739 = vrot.lane.b32.xlu0 %v675, 16
      %v740 = vpop.permute.xlu0 %739
      %vm741 = vcmp.lt.s32.totalorder %v693, 16
      %v742 = vsel %vm741, %v726, %v734
      %v743 = vsel %vm741, %v728, %v736
      %v744 = vsel %vm741, %v730, %v738
      %v745 = vsel %vm741, %v732, %v740
      %v746 = vsel %vm741, %v734, %v726
      %v747 = vsel %vm741, %v736, %v728
      %v748 = vsel %vm741, %v738, %v730
      %v749 = vsel %vm741, %v740, %v732
      %s750 = scalar_lea.vmem %s4, 2
      %v751 = vld [vmem:[%s750] sm:$0x3]
      %v753 = vperm.slane %v751, 0
      %v754 = vperm.slane %v751, 1
      %v757 = vmul.f32 %v746, %v753
      %v758 = vmul.f32 %v742, %v754
      %v759 = vmul.f32 %v747, %v753
      %v760 = vmul.f32 %v743, %v754
      %v761 = vmul.f32 %v748, %v753
      %v762 = vmul.f32 %v744, %v754
      %v763 = vmul.f32 %v749, %v753
      %v764 = vmul.f32 %v745, %v754
      %765 = vst [vmem:[#allocation4 + $0x40] sm:$0xff] %v757
      %766 = vst [vmem:[#allocation4 + $0x48] sm:$0xff] %v758
      %767 = vst [vmem:[#allocation4 + $0x50] sm:$0xff] %v759
      %768 = vst [vmem:[#allocation4 + $0x58] sm:$0xff] %v760
      %769 = vst [vmem:[#allocation4 + $0x60] sm:$0xff] %v761
      %770 = vst [vmem:[#allocation4 + $0x68] sm:$0xff] %v762
      %771 = vst [vmem:[#allocation4 + $0x70] sm:$0xff] %v763
      %772 = vst [vmem:[#allocation4 + $0x78] sm:$0xff] %v764
      %773 = vrot.lane.b32.xlu0 %v668, 15
      %v774 = vpop.permute.xlu0 %773
      %775 = vrot.lane.b32.xlu0 %v670, 15
      %v776 = vpop.permute.xlu0 %775
      %777 = vrot.lane.b32.xlu0 %v672, 15
      %v778 = vpop.permute.xlu0 %777
      %779 = vrot.lane.b32.xlu0 %v674, 15
      %v780 = vpop.permute.xlu0 %779
      %781 = vrot.lane.b32.xlu0 %v669, 15
      %v782 = vpop.permute.xlu0 %781
      %783 = vrot.lane.b32.xlu0 %v671, 15
      %v784 = vpop.permute.xlu0 %783
      %785 = vrot.lane.b32.xlu0 %v673, 15
      %v786 = vpop.permute.xlu0 %785
      %787 = vrot.lane.b32.xlu0 %v675, 15
      %v788 = vpop.permute.xlu0 %787
      %vm789 = vcmp.lt.s32.totalorder %v693, 15
      %v790 = vsel %vm789, %v774, %v782
      %v791 = vsel %vm789, %v776, %v784
      %v792 = vsel %vm789, %v778, %v786
      %v793 = vsel %vm789, %v780, %v788
      %v794 = vsel %vm789, %v782, %v774
      %v795 = vsel %vm789, %v784, %v776
      %v796 = vsel %vm789, %v786, %v778
      %v797 = vsel %vm789, %v788, %v780
      %s798 = scalar_lea.vmem %s4, 4
      %v799 = vld [vmem:[%s798] sm:$0x3]
      %v801 = vperm.slane %v799, 0
      %v802 = vperm.slane %v799, 1
      %v805 = vmul.f32 %v794, %v801
      %v806 = vmul.f32 %v790, %v802
      %v807 = vmul.f32 %v795, %v801
      %v808 = vmul.f32 %v791, %v802
      %v809 = vmul.f32 %v796, %v801
      %v810 = vmul.f32 %v792, %v802
      %v811 = vmul.f32 %v797, %v801
      %v812 = vmul.f32 %v793, %v802
      %813 = vst [vmem:[#allocation4 + $0x80] sm:$0xff] %v805
      %814 = vst [vmem:[#allocation4 + $0x88] sm:$0xff] %v806
      %815 = vst [vmem:[#allocation4 + $0x90] sm:$0xff] %v807
      %816 = vst [vmem:[#allocation4 + $0x98] sm:$0xff] %v808
      %817 = vst [vmem:[#allocation4 + $0xa0] sm:$0xff] %v809
      %818 = vst [vmem:[#allocation4 + $0xa8] sm:$0xff] %v810
      %819 = vst [vmem:[#allocation4 + $0xb0] sm:$0xff] %v811
      %820 = vst [vmem:[#allocation4 + $0xb8] sm:$0xff] %v812
      %821 = vrot.lane.b32.xlu0 %v668, 1
      %v822 = vpop.permute.xlu0 %821
      %823 = vrot.lane.b32.xlu0 %v670, 1
      %v824 = vpop.permute.xlu0 %823
      %825 = vrot.lane.b32.xlu0 %v672, 1
      %v826 = vpop.permute.xlu0 %825
      %827 = vrot.lane.b32.xlu0 %v674, 1
      %v828 = vpop.permute.xlu0 %827
      %829 = vrot.lane.b32.xlu0 %v669, 1
      %v830 = vpop.permute.xlu0 %829
      %831 = vrot.lane.b32.xlu0 %v671, 1
      %v832 = vpop.permute.xlu0 %831
      %833 = vrot.lane.b32.xlu0 %v673, 1
      %v834 = vpop.permute.xlu0 %833
      %835 = vrot.lane.b32.xlu0 %v675, 1
      %v836 = vpop.permute.xlu0 %835
      %vm837 = vcmp.lt.s32.totalorder %v693, 1
      %v838 = vsel %vm837, %v822, %v830
      %v839 = vsel %vm837, %v824, %v832
      %v840 = vsel %vm837, %v826, %v834
      %v841 = vsel %vm837, %v828, %v836
      %v842 = vsel %vm837, %v830, %v822
      %v843 = vsel %vm837, %v832, %v824
      %v844 = vsel %vm837, %v834, %v826
      %v845 = vsel %vm837, %v836, %v828
      %s846 = scalar_lea.vmem %s4, 6
      %v847 = vld [vmem:[%s846] sm:$0x3]
      %v849 = vperm.slane %v847, 0
      %v850 = vperm.slane %v847, 1
      %v853 = vmul.f32 %v842, %v849
      %v854 = vmul.f32 %v838, %v850
      %v855 = vmul.f32 %v843, %v849
      %v856 = vmul.f32 %v839, %v850
      %v857 = vmul.f32 %v844, %v849
      %v858 = vmul.f32 %v840, %v850
      %v859 = vmul.f32 %v845, %v849
      %v860 = vmul.f32 %v841, %v850
      %861 = vst [vmem:[#allocation4 + $0xc0] sm:$0xff] %v853
      %862 = vst [vmem:[#allocation4 + $0xc8] sm:$0xff] %v854
      %863 = vst [vmem:[#allocation4 + $0xd0] sm:$0xff] %v855
      %864 = vst [vmem:[#allocation4 + $0xd8] sm:$0xff] %v856
      %865 = vst [vmem:[#allocation4 + $0xe0] sm:$0xff] %v857
      %866 = vst [vmem:[#allocation4 + $0xe8] sm:$0xff] %v858
      %867 = vst [vmem:[#allocation4 + $0xf0] sm:$0xff] %v859
      %868 = vst [vmem:[#allocation4 + $0xf8] sm:$0xff] %v860
      %869 = vst [vmem:[#allocation4 + $0x100] sm:$0xff] %v668
      %870 = vst [vmem:[#allocation4 + $0x108] sm:$0xff] %v669
      %871 = vst [vmem:[#allocation4 + $0x110] sm:$0xff] %v670
      %872 = vst [vmem:[#allocation4 + $0x118] sm:$0xff] %v671
      %873 = vst [vmem:[#allocation4 + $0x120] sm:$0xff] %v672
      %874 = vst [vmem:[#allocation4 + $0x128] sm:$0xff] %v673
      %875 = vst [vmem:[#allocation4 + $0x130] sm:$0xff] %v674
      %876 = vst [vmem:[#allocation4 + $0x138] sm:$0xff] %v675
      %877 = vrot.lane.b32.xlu0 %v668, 127
      %v878 = vpop.permute.xlu0 %877
      %879 = vrot.lane.b32.xlu0 %v670, 127
      %v880 = vpop.permute.xlu0 %879
      %881 = vrot.lane.b32.xlu0 %v672, 127
      %v882 = vpop.permute.xlu0 %881
      %883 = vrot.lane.b32.xlu0 %v674, 127
      %v884 = vpop.permute.xlu0 %883
      %885 = vrot.lane.b32.xlu0 %v669, 127
      %v886 = vpop.permute.xlu0 %885
      %887 = vrot.lane.b32.xlu0 %v671, 127
      %v888 = vpop.permute.xlu0 %887
      %889 = vrot.lane.b32.xlu0 %v673, 127
      %v890 = vpop.permute.xlu0 %889
      %891 = vrot.lane.b32.xlu0 %v675, 127
      %v892 = vpop.permute.xlu0 %891
      %vm893 = vcmp.lt.s32.totalorder %v693, 127
      %v894 = vsel %vm893, %v878, %v886
      %v895 = vsel %vm893, %v880, %v888
      %v896 = vsel %vm893, %v882, %v890
      %v897 = vsel %vm893, %v884, %v892
      %v898 = vsel %vm893, %v886, %v878
      %v899 = vsel %vm893, %v888, %v880
      %v900 = vsel %vm893, %v890, %v882
      %v901 = vsel %vm893, %v892, %v884
      %s902 = scalar_lea.vmem %s4, 10
      %v903 = vld [vmem:[%s902] sm:$0x3]
      %v905 = vperm.slane %v903, 0
      %v906 = vperm.slane %v903, 1
      %v909 = vmul.f32 %v894, %v905
      %v910 = vmul.f32 %v898, %v906
      %v911 = vmul.f32 %v895, %v905
      %v912 = vmul.f32 %v899, %v906
      %v913 = vmul.f32 %v896, %v905
      %v914 = vmul.f32 %v900, %v906
      %v915 = vmul.f32 %v897, %v905
      %v916 = vmul.f32 %v901, %v906
      %917 = vst [vmem:[#allocation4 + $0x140] sm:$0xff] %v909
      %918 = vst [vmem:[#allocation4 + $0x148] sm:$0xff] %v910
      %919 = vst [vmem:[#allocation4 + $0x150] sm:$0xff] %v911
      %920 = vst [vmem:[#allocation4 + $0x158] sm:$0xff] %v912
      %921 = vst [vmem:[#allocation4 + $0x160] sm:$0xff] %v913
      %922 = vst [vmem:[#allocation4 + $0x168] sm:$0xff] %v914
      %923 = vst [vmem:[#allocation4 + $0x170] sm:$0xff] %v915
      %924 = vst [vmem:[#allocation4 + $0x178] sm:$0xff] %v916
      %925 = vrot.lane.b32.xlu0 %v668, 113
      %v926 = vpop.permute.xlu0 %925
      %927 = vrot.lane.b32.xlu0 %v670, 113
      %v928 = vpop.permute.xlu0 %927
      %929 = vrot.lane.b32.xlu0 %v672, 113
      %v930 = vpop.permute.xlu0 %929
      %931 = vrot.lane.b32.xlu0 %v674, 113
      %v932 = vpop.permute.xlu0 %931
      %933 = vrot.lane.b32.xlu0 %v669, 113
      %v934 = vpop.permute.xlu0 %933
      %935 = vrot.lane.b32.xlu0 %v671, 113
      %v936 = vpop.permute.xlu0 %935
      %937 = vrot.lane.b32.xlu0 %v673, 113
      %v938 = vpop.permute.xlu0 %937
      %939 = vrot.lane.b32.xlu0 %v675, 113
      %v940 = vpop.permute.xlu0 %939
      %vm941 = vcmp.lt.s32.totalorder %v693, 113
      %v942 = vsel %vm941, %v926, %v934
      %v943 = vsel %vm941, %v928, %v936
      %v944 = vsel %vm941, %v930, %v938
      %v945 = vsel %vm941, %v932, %v940
      %v946 = vsel %vm941, %v934, %v926
      %v947 = vsel %vm941, %v936, %v928
      %v948 = vsel %vm941, %v938, %v930
      %v949 = vsel %vm941, %v940, %v932
      %s950 = scalar_lea.vmem %s4, 12
      %v951 = vld [vmem:[%s950] sm:$0x3]
      %v953 = vperm.slane %v951, 0
      %v954 = vperm.slane %v951, 1
      %v957 = vmul.f32 %v942, %v953
      %v958 = vmul.f32 %v946, %v954
      %v959 = vmul.f32 %v943, %v953
      %v960 = vmul.f32 %v947, %v954
      %v961 = vmul.f32 %v944, %v953
      %v962 = vmul.f32 %v948, %v954
      %v963 = vmul.f32 %v945, %v953
      %v964 = vmul.f32 %v949, %v954
      %965 = vst [vmem:[#allocation4 + $0x180] sm:$0xff] %v957
      %966 = vst [vmem:[#allocation4 + $0x188] sm:$0xff] %v958
      %967 = vst [vmem:[#allocation4 + $0x190] sm:$0xff] %v959
      %968 = vst [vmem:[#allocation4 + $0x198] sm:$0xff] %v960
      %969 = vst [vmem:[#allocation4 + $0x1a0] sm:$0xff] %v961
      %970 = vst [vmem:[#allocation4 + $0x1a8] sm:$0xff] %v962
      %971 = vst [vmem:[#allocation4 + $0x1b0] sm:$0xff] %v963
      %972 = vst [vmem:[#allocation4 + $0x1b8] sm:$0xff] %v964
      %973 = vrot.lane.b32.xlu0 %v668, 112
      %v974 = vpop.permute.xlu0 %973
      %975 = vrot.lane.b32.xlu0 %v670, 112
      %v976 = vpop.permute.xlu0 %975
      %977 = vrot.lane.b32.xlu0 %v672, 112
      %v978 = vpop.permute.xlu0 %977
      %979 = vrot.lane.b32.xlu0 %v674, 112
      %v980 = vpop.permute.xlu0 %979
      %981 = vrot.lane.b32.xlu0 %v669, 112
      %v982 = vpop.permute.xlu0 %981
      %983 = vrot.lane.b32.xlu0 %v671, 112
      %v984 = vpop.permute.xlu0 %983
      %985 = vrot.lane.b32.xlu0 %v673, 112
      %v986 = vpop.permute.xlu0 %985
      %987 = vrot.lane.b32.xlu0 %v675, 112
      %v988 = vpop.permute.xlu0 %987
      %vm989 = vcmp.lt.s32.totalorder %v693, 112
      %v990 = vsel %vm989, %v974, %v982
      %v991 = vsel %vm989, %v976, %v984
      %v992 = vsel %vm989, %v978, %v986
      %v993 = vsel %vm989, %v980, %v988
      %v994 = vsel %vm989, %v982, %v974
      %v995 = vsel %vm989, %v984, %v976
      %v996 = vsel %vm989, %v986, %v978
      %v997 = vsel %vm989, %v988, %v980
      %s998 = scalar_lea.vmem %s4, 14
      %v999 = vld [vmem:[%s998] sm:$0x3]
      %v1001 = vperm.slane %v999, 0
      %v1002 = vperm.slane %v999, 1
      %v1005 = vmul.f32 %v990, %v1001
      %v1006 = vmul.f32 %v994, %v1002
      %v1007 = vmul.f32 %v991, %v1001
      %v1008 = vmul.f32 %v995, %v1002
      %v1009 = vmul.f32 %v992, %v1001
      %v1010 = vmul.f32 %v996, %v1002
      %v1011 = vmul.f32 %v993, %v1001
      %v1012 = vmul.f32 %v997, %v1002
      %1013 = vst [vmem:[#allocation4 + $0x1c0] sm:$0xff] %v1005
      %1014 = vst [vmem:[#allocation4 + $0x1c8] sm:$0xff] %v1006
      %1015 = vst [vmem:[#allocation4 + $0x1d0] sm:$0xff] %v1007
      %1016 = vst [vmem:[#allocation4 + $0x1d8] sm:$0xff] %v1008
      %1017 = vst [vmem:[#allocation4 + $0x1e0] sm:$0xff] %v1009
      %1018 = vst [vmem:[#allocation4 + $0x1e8] sm:$0xff] %v1010
      %1019 = vst [vmem:[#allocation4 + $0x1f0] sm:$0xff] %v1011
      %1020 = vst [vmem:[#allocation4 + $0x1f8] sm:$0xff] %v1012
      %1021 = vrot.lane.b32.xlu0 %v668, 111
      %v1022 = vpop.permute.xlu0 %1021
      %1023 = vrot.lane.b32.xlu0 %v670, 111
      %v1024 = vpop.permute.xlu0 %1023
      %1025 = vrot.lane.b32.xlu0 %v672, 111
      %v1026 = vpop.permute.xlu0 %1025
      %1027 = vrot.lane.b32.xlu0 %v674, 111
      %v1028 = vpop.permute.xlu0 %1027
      %1029 = vrot.lane.b32.xlu0 %v669, 111
      %v1030 = vpop.permute.xlu0 %1029
      %1031 = vrot.lane.b32.xlu0 %v671, 111
      %v1032 = vpop.permute.xlu0 %1031
      %1033 = vrot.lane.b32.xlu0 %v673, 111
      %v1034 = vpop.permute.xlu0 %1033
      %1035 = vrot.lane.b32.xlu0 %v675, 111
      %v1036 = vpop.permute.xlu0 %1035
      %vm1037 = vcmp.lt.s32.totalorder %v693, 111
      %v1038 = vsel %vm1037, %v1022, %v1030
      %v1039 = vsel %vm1037, %v1024, %v1032
      %v1040 = vsel %vm1037, %v1026, %v1034
      %v1041 = vsel %vm1037, %v1028, %v1036
      %v1042 = vsel %vm1037, %v1030, %v1022
      %v1043 = vsel %vm1037, %v1032, %v1024
      %v1044 = vsel %vm1037, %v1034, %v1026
      %v1045 = vsel %vm1037, %v1036, %v1028
      %s1046 = scalar_lea.vmem %s4, 16
      %v1047 = vld [vmem:[%s1046] sm:$0x3]
      %v1049 = vperm.slane %v1047, 0
      %v1050 = vperm.slane %v1047, 1
      %v1053 = vmul.f32 %v1038, %v1049
      %v1054 = vmul.f32 %v1042, %v1050
      %v1055 = vmul.f32 %v1039, %v1049
      %v1056 = vmul.f32 %v1043, %v1050
      %v1057 = vmul.f32 %v1040, %v1049
      %v1058 = vmul.f32 %v1044, %v1050
      %v1059 = vmul.f32 %v1041, %v1049
      %v1060 = vmul.f32 %v1045, %v1050
      %1061 = vst [vmem:[#allocation4 + $0x200] sm:$0xff] %v1053
      %1062 = vst [vmem:[#allocation4 + $0x208] sm:$0xff] %v1054
      %1063 = vst [vmem:[#allocation4 + $0x210] sm:$0xff] %v1055
      %1064 = vst [vmem:[#allocation4 + $0x218] sm:$0xff] %v1056
      %1065 = vst [vmem:[#allocation4 + $0x220] sm:$0xff] %v1057
      %1066 = vst [vmem:[#allocation4 + $0x228] sm:$0xff] %v1058
      %1067 = vst [vmem:[#allocation4 + $0x230] sm:$0xff] %v1059
      %1068 = vst [vmem:[#allocation4 + $0x238] sm:$0xff] %v1060
      %v1069 = vld [vmem:[#allocation5] sm:$0xff]
      %v1070 = vld [vmem:[#allocation5 + $0x8] sm:$0xff]
      %v1071 = vld [vmem:[#allocation5 + $0x10] sm:$0xff]
      %v1072 = vld [vmem:[#allocation5 + $0x18] sm:$0xff]
      %v1073 = vld [vmem:[#allocation5 + $0x20] sm:$0xff]
      %v1074 = vld [vmem:[#allocation5 + $0x28] sm:$0xff]
      %v1075 = vld [vmem:[#allocation5 + $0x30] sm:$0xff]
      %v1076 = vld [vmem:[#allocation5 + $0x38] sm:$0xff]
      %v1077 = vld [vmem:[#allocation5 + $0x40] sm:$0xff]
      %v1078 = vld [vmem:[#allocation5 + $0x48] sm:$0xff]
      %v1079 = vld [vmem:[#allocation5 + $0x50] sm:$0xff]
      %v1080 = vld [vmem:[#allocation5 + $0x58] sm:$0xff]
      %v1081 = vld [vmem:[#allocation5 + $0x60] sm:$0xff]
      %v1082 = vld [vmem:[#allocation5 + $0x68] sm:$0xff]
      %v1083 = vld [vmem:[#allocation5 + $0x70] sm:$0xff]
      %v1084 = vld [vmem:[#allocation5 + $0x78] sm:$0xff]
      %v1085 = vld [vmem:[#allocation5 + $0x80] sm:$0xff]
      %v1086 = vld [vmem:[#allocation5 + $0x88] sm:$0xff]
      %v1087 = vld [vmem:[#allocation5 + $0x90] sm:$0xff]
      %v1088 = vld [vmem:[#allocation5 + $0x98] sm:$0xff]
      %v1089 = vld [vmem:[#allocation5 + $0xa0] sm:$0xff]
      %v1090 = vld [vmem:[#allocation5 + $0xa8] sm:$0xff]
      %v1091 = vld [vmem:[#allocation5 + $0xb0] sm:$0xff]
      %v1092 = vld [vmem:[#allocation5 + $0xb8] sm:$0xff]
      %v1093 = vld [vmem:[#allocation5 + $0xc0] sm:$0xff]
      %v1094 = vld [vmem:[#allocation5 + $0xc8] sm:$0xff]
      %v1095 = vld [vmem:[#allocation5 + $0xd0] sm:$0xff]
      %v1096 = vld [vmem:[#allocation5 + $0xd8] sm:$0xff]
      %v1097 = vld [vmem:[#allocation5 + $0xe0] sm:$0xff]
      %v1098 = vld [vmem:[#allocation5 + $0xe8] sm:$0xff]
      %v1099 = vld [vmem:[#allocation5 + $0xf0] sm:$0xff]
      %v1100 = vld [vmem:[#allocation5 + $0xf8] sm:$0xff]
      %v1101 = vld [vmem:[%s2] sm:$0xff]
      %v1102 = vld [vmem:[%s2 + $0x8] sm:$0xff]
      %v1103 = vld [vmem:[%s2 + $0x10] sm:$0xff]
      %v1104 = vld [vmem:[%s2 + $0x18] sm:$0xff]
      %v1105 = vld [vmem:[%s2 + $0x20] sm:$0xff]
      %v1106 = vld [vmem:[%s2 + $0x28] sm:$0xff]
      %v1107 = vld [vmem:[%s2 + $0x30] sm:$0xff]
      %v1108 = vld [vmem:[%s2 + $0x38] sm:$0xff]
      %v1109 = vld [vmem:[%s2 + $0x40] sm:$0xff]
      %v1110 = vld [vmem:[%s2 + $0x48] sm:$0xff]
      %v1111 = vld [vmem:[%s2 + $0x50] sm:$0xff]
      %v1112 = vld [vmem:[%s2 + $0x58] sm:$0xff]
      %v1113 = vld [vmem:[%s2 + $0x60] sm:$0xff]
      %v1114 = vld [vmem:[%s2 + $0x68] sm:$0xff]
      %v1115 = vld [vmem:[%s2 + $0x70] sm:$0xff]
      %v1116 = vld [vmem:[%s2 + $0x78] sm:$0xff]
      %v1117 = vld [vmem:[%s2 + $0x80] sm:$0xff]
      %v1118 = vld [vmem:[%s2 + $0x88] sm:$0xff]
      %v1119 = vld [vmem:[%s2 + $0x90] sm:$0xff]
      %v1120 = vld [vmem:[%s2 + $0x98] sm:$0xff]
      %v1121 = vld [vmem:[%s2 + $0xa0] sm:$0xff]
      %v1122 = vld [vmem:[%s2 + $0xa8] sm:$0xff]
      %v1123 = vld [vmem:[%s2 + $0xb0] sm:$0xff]
      %v1124 = vld [vmem:[%s2 + $0xb8] sm:$0xff]
      %v1125 = vld [vmem:[%s2 + $0xc0] sm:$0xff]
      %v1126 = vld [vmem:[%s2 + $0xc8] sm:$0xff]
      %v1127 = vld [vmem:[%s2 + $0xd0] sm:$0xff]
      %v1128 = vld [vmem:[%s2 + $0xd8] sm:$0xff]
      %v1129 = vld [vmem:[%s2 + $0xe0] sm:$0xff]
      %v1130 = vld [vmem:[%s2 + $0xe8] sm:$0xff]
      %v1131 = vld [vmem:[%s2 + $0xf0] sm:$0xff]
      %v1132 = vld [vmem:[%s2 + $0xf8] sm:$0xff]
      %v1133 = vld [vmem:[%s2 + $0x100] sm:$0xff]
      %v1134 = vld [vmem:[%s2 + $0x108] sm:$0xff]
      %v1135 = vld [vmem:[%s2 + $0x110] sm:$0xff]
      %v1136 = vld [vmem:[%s2 + $0x118] sm:$0xff]
      %v1137 = vld [vmem:[%s2 + $0x120] sm:$0xff]
      %v1138 = vld [vmem:[%s2 + $0x128] sm:$0xff]
      %v1139 = vld [vmem:[%s2 + $0x130] sm:$0xff]
      %v1140 = vld [vmem:[%s2 + $0x138] sm:$0xff]
      %v1141 = vld [vmem:[%s2 + $0x140] sm:$0xff]
      %v1142 = vld [vmem:[%s2 + $0x148] sm:$0xff]
      %v1143 = vld [vmem:[%s2 + $0x150] sm:$0xff]
      %v1144 = vld [vmem:[%s2 + $0x158] sm:$0xff]
      %v1145 = vld [vmem:[%s2 + $0x160] sm:$0xff]
      %v1146 = vld [vmem:[%s2 + $0x168] sm:$0xff]
      %v1147 = vld [vmem:[%s2 + $0x170] sm:$0xff]
      %v1148 = vld [vmem:[%s2 + $0x178] sm:$0xff]
      %v1149 = vld [vmem:[#allocation4] sm:$0xff]
      %v1150 = vld [vmem:[#allocation4 + $0x8] sm:$0xff]
      %v1151 = vld [vmem:[#allocation4 + $0x10] sm:$0xff]
      %v1152 = vld [vmem:[#allocation4 + $0x18] sm:$0xff]
      %v1153 = vld [vmem:[#allocation4 + $0x20] sm:$0xff]
      %v1154 = vld [vmem:[#allocation4 + $0x28] sm:$0xff]
      %v1155 = vld [vmem:[#allocation4 + $0x30] sm:$0xff]
      %v1156 = vld [vmem:[#allocation4 + $0x38] sm:$0xff]
      %v1157 = vld [vmem:[#allocation4 + $0x40] sm:$0xff]
      %v1158 = vld [vmem:[#allocation4 + $0x48] sm:$0xff]
      %v1159 = vld [vmem:[#allocation4 + $0x50] sm:$0xff]
      %v1160 = vld [vmem:[#allocation4 + $0x58] sm:$0xff]
      %v1161 = vld [vmem:[#allocation4 + $0x60] sm:$0xff]
      %v1162 = vld [vmem:[#allocation4 + $0x68] sm:$0xff]
      %v1163 = vld [vmem:[#allocation4 + $0x70] sm:$0xff]
      %v1164 = vld [vmem:[#allocation4 + $0x78] sm:$0xff]
      %v1165 = vld [vmem:[#allocation4 + $0x80] sm:$0xff]
      %v1166 = vld [vmem:[#allocation4 + $0x88] sm:$0xff]
      %v1167 = vld [vmem:[#allocation4 + $0x90] sm:$0xff]
      %v1168 = vld [vmem:[#allocation4 + $0x98] sm:$0xff]
      %v1169 = vld [vmem:[#allocation4 + $0xa0] sm:$0xff]
      %v1170 = vld [vmem:[#allocation4 + $0xa8] sm:$0xff]
      %v1171 = vld [vmem:[#allocation4 + $0xb0] sm:$0xff]
      %v1172 = vld [vmem:[#allocation4 + $0xb8] sm:$0xff]
      %v1173 = vld [vmem:[#allocation4 + $0xc0] sm:$0xff]
      %v1174 = vld [vmem:[#allocation4 + $0xc8] sm:$0xff]
      %v1175 = vld [vmem:[#allocation4 + $0xd0] sm:$0xff]
      %v1176 = vld [vmem:[#allocation4 + $0xd8] sm:$0xff]
      %v1177 = vld [vmem:[#allocation4 + $0xe0] sm:$0xff]
      %v1178 = vld [vmem:[#allocation4 + $0xe8] sm:$0xff]
      %v1179 = vld [vmem:[#allocation4 + $0xf0] sm:$0xff]
      %v1180 = vld [vmem:[#allocation4 + $0xf8] sm:$0xff]
      %v1181 = vld [vmem:[#allocation4 + $0x100] sm:$0xff]
      %v1182 = vld [vmem:[#allocation4 + $0x108] sm:$0xff]
      %v1183 = vld [vmem:[#allocation4 + $0x110] sm:$0xff]
      %v1184 = vld [vmem:[#allocation4 + $0x118] sm:$0xff]
      %v1185 = vld [vmem:[#allocation4 + $0x120] sm:$0xff]
      %v1186 = vld [vmem:[#allocation4 + $0x128] sm:$0xff]
      %v1187 = vld [vmem:[#allocation4 + $0x130] sm:$0xff]
      %v1188 = vld [vmem:[#allocation4 + $0x138] sm:$0xff]
      %v1189 = vld [vmem:[#allocation4 + $0x140] sm:$0xff]
      %v1190 = vld [vmem:[#allocation4 + $0x148] sm:$0xff]
      %v1191 = vld [vmem:[#allocation4 + $0x150] sm:$0xff]
      %v1192 = vld [vmem:[#allocation4 + $0x158] sm:$0xff]
      %v1193 = vld [vmem:[#allocation4 + $0x160] sm:$0xff]
      %v1194 = vld [vmem:[#allocation4 + $0x168] sm:$0xff]
      %v1195 = vld [vmem:[#allocation4 + $0x170] sm:$0xff]
      %v1196 = vld [vmem:[#allocation4 + $0x178] sm:$0xff]
      %v1197 = vld [vmem:[#allocation4 + $0x180] sm:$0xff]
      %v1198 = vld [vmem:[#allocation4 + $0x188] sm:$0xff]
      %v1199 = vld [vmem:[#allocation4 + $0x190] sm:$0xff]
      %v1200 = vld [vmem:[#allocation4 + $0x198] sm:$0xff]
      %v1201 = vld [vmem:[#allocation4 + $0x1a0] sm:$0xff]
      %v1202 = vld [vmem:[#allocation4 + $0x1a8] sm:$0xff]
      %v1203 = vld [vmem:[#allocation4 + $0x1b0] sm:$0xff]
      %v1204 = vld [vmem:[#allocation4 + $0x1b8] sm:$0xff]
      %v1205 = vld [vmem:[#allocation4 + $0x1c0] sm:$0xff]
      %v1206 = vld [vmem:[#allocation4 + $0x1c8] sm:$0xff]
      %v1207 = vld [vmem:[#allocation4 + $0x1d0] sm:$0xff]
      %v1208 = vld [vmem:[#allocation4 + $0x1d8] sm:$0xff]
      %v1209 = vld [vmem:[#allocation4 + $0x1e0] sm:$0xff]
      %v1210 = vld [vmem:[#allocation4 + $0x1e8] sm:$0xff]
      %v1211 = vld [vmem:[#allocation4 + $0x1f0] sm:$0xff]
      %v1212 = vld [vmem:[#allocation4 + $0x1f8] sm:$0xff]
      %v1213 = vld [vmem:[#allocation4 + $0x200] sm:$0xff]
      %v1214 = vld [vmem:[#allocation4 + $0x208] sm:$0xff]
      %v1215 = vld [vmem:[#allocation4 + $0x210] sm:$0xff]
      %v1216 = vld [vmem:[#allocation4 + $0x218] sm:$0xff]
      %v1217 = vld [vmem:[#allocation4 + $0x220] sm:$0xff]
      %v1218 = vld [vmem:[#allocation4 + $0x228] sm:$0xff]
      %v1219 = vld [vmem:[#allocation4 + $0x230] sm:$0xff]
      %v1220 = vld [vmem:[#allocation4 + $0x238] sm:$0xff]
      %vm1221 = vcmask 261120
      %v1223 = vsel %vm1221, %v1103, 0
      %v1226 = vsel %vm1221, %v1106, 0
      %v1229 = vsel %vm1221, %v1109, 0
      %v1232 = vsel %vm1221, %v1112, 0
      %v1235 = vsel %vm1221, %v1115, 0
      %v1238 = vsel %vm1221, %v1118, 0
      %v1241 = vsel %vm1221, %v1121, 0
      %v1244 = vsel %vm1221, %v1124, 0
      %v1247 = vsel %vm1221, %v1127, 0
      %v1250 = vsel %vm1221, %v1130, 0
      %v1253 = vsel %vm1221, %v1133, 0
      %v1256 = vsel %vm1221, %v1136, 0
      %v1259 = vsel %vm1221, %v1139, 0
      %v1262 = vsel %vm1221, %v1142, 0
      %v1265 = vsel %vm1221, %v1145, 0
      %v1268 = vsel %vm1221, %v1148, 0
      %1270 = vmatpush.msra.mxu0 %v1179
      %1271 = vmatpush.msra.mxu0 %v1177
      %1272 = vmatpush.msra.mxu0 %v1175
      %1273 = vmatpush.msra.mxu0 %v1173
      %1274 = vmatpush.msra.mxu0 %v1171
      %1275 = vmatpush.msra.mxu0 %v1169
      %1276 = vmatpush.msra.mxu0 %v1167
      %1277 = vmatpush.msra.mxu0 %v1165
      %1278 = vmatpush.msra.mxu0 %v1163
      %1279 = vmatpush.msra.mxu0 %v1161
      %1280 = vmatpush.msra.mxu0 %v1159
      %1281 = vmatpush.msra.mxu0 %v1157
      %1282 = vmatpush.msra.mxu0 %v1155
      %1283 = vmatpush.msra.mxu0 %v1153
      %1284 = vmatpush.msra.mxu0 %v1151
      %1285 = vmatpush.msra.mxu0 %v1149
      %1286 = vmatmul.f32.gmra.mxu0 %v1101
      %v1287 = vpop.f32.mrf.mxu0
      %v1288 = vadd.f32 0.0, %v1287
      %1289 = vmatmul.f32.gmra.mxu0 %v1104
      %v1290 = vpop.f32.mrf.mxu0
      %v1291 = vadd.f32 0.0, %v1290
      %1292 = vmatmul.f32.gmra.mxu0 %v1107
      %v1293 = vpop.f32.mrf.mxu0
      %v1294 = vadd.f32 0.0, %v1293
      %1295 = vmatmul.f32.gmra.mxu0 %v1110
      %v1296 = vpop.f32.mrf.mxu0
      %v1297 = vadd.f32 0.0, %v1296
      %1298 = vmatmul.f32.gmra.mxu0 %v1113
      %v1299 = vpop.f32.mrf.mxu0
      %v1300 = vadd.f32 0.0, %v1299
      %1301 = vmatmul.f32.gmra.mxu0 %v1116
      %v1302 = vpop.f32.mrf.mxu0
      %v1303 = vadd.f32 0.0, %v1302
      %1304 = vmatmul.f32.gmra.mxu0 %v1119
      %v1305 = vpop.f32.mrf.mxu0
      %v1306 = vadd.f32 0.0, %v1305
      %1307 = vmatmul.f32.gmra.mxu0 %v1122
      %v1308 = vpop.f32.mrf.mxu0
      %v1309 = vadd.f32 0.0, %v1308
      %1310 = vmatmul.f32.gmra.mxu0 %v1125
      %v1311 = vpop.f32.mrf.mxu0
      %v1312 = vadd.f32 0.0, %v1311
      %1313 = vmatmul.f32.gmra.mxu0 %v1128
      %v1314 = vpop.f32.mrf.mxu0
      %v1315 = vadd.f32 0.0, %v1314
      %1316 = vmatmul.f32.gmra.mxu0 %v1131
      %v1317 = vpop.f32.mrf.mxu0
      %v1318 = vadd.f32 0.0, %v1317
      %1319 = vmatmul.f32.gmra.mxu0 %v1134
      %v1320 = vpop.f32.mrf.mxu0
      %v1321 = vadd.f32 0.0, %v1320
      %1322 = vmatmul.f32.gmra.mxu0 %v1137
      %v1323 = vpop.f32.mrf.mxu0
      %v1324 = vadd.f32 0.0, %v1323
      %1325 = vmatmul.f32.gmra.mxu0 %v1140
      %v1326 = vpop.f32.mrf.mxu0
      %v1327 = vadd.f32 0.0, %v1326
      %1328 = vmatmul.f32.gmra.mxu0 %v1143
      %v1329 = vpop.f32.mrf.mxu0
      %v1330 = vadd.f32 0.0, %v1329
      %1331 = vmatmul.f32.gmra.mxu0 %v1146
      %v1332 = vpop.f32.mrf.mxu0
      %v1333 = vadd.f32 0.0, %v1332
      %1334 = vdwg.mxu0
      %1335 = vmatpush.msra.mxu0 %v1211
      %1336 = vmatpush.msra.mxu0 %v1209
      %1337 = vmatpush.msra.mxu0 %v1207
      %1338 = vmatpush.msra.mxu0 %v1205
      %1339 = vmatpush.msra.mxu0 %v1203
      %1340 = vmatpush.msra.mxu0 %v1201
      %1341 = vmatpush.msra.mxu0 %v1199
      %1342 = vmatpush.msra.mxu0 %v1197
      %1343 = vmatpush.msra.mxu0 %v1195
      %1344 = vmatpush.msra.mxu0 %v1193
      %1345 = vmatpush.msra.mxu0 %v1191
      %1346 = vmatpush.msra.mxu0 %v1189
      %1347 = vmatpush.msra.mxu0 %v1187
      %1348 = vmatpush.msra.mxu0 %v1185
      %1349 = vmatpush.msra.mxu0 %v1183
      %1350 = vmatpush.msra.mxu0 %v1181
      %1351 = vmatmul.f32.gmra.mxu0 %v1102
      %v1352 = vpop.f32.mrf.mxu0
      %v1353 = vadd.f32 %v1288, %v1352
      %1354 = vmatmul.f32.gmra.mxu0 %v1105
      %v1355 = vpop.f32.mrf.mxu0
      %v1356 = vadd.f32 %v1291, %v1355
      %1357 = vmatmul.f32.gmra.mxu0 %v1108
      %v1358 = vpop.f32.mrf.mxu0
      %v1359 = vadd.f32 %v1294, %v1358
      %1360 = vmatmul.f32.gmra.mxu0 %v1111
      %v1361 = vpop.f32.mrf.mxu0
      %v1362 = vadd.f32 %v1297, %v1361
      %1363 = vmatmul.f32.gmra.mxu0 %v1114
      %v1364 = vpop.f32.mrf.mxu0
      %v1365 = vadd.f32 %v1300, %v1364
      %1366 = vmatmul.f32.gmra.mxu0 %v1117
      %v1367 = vpop.f32.mrf.mxu0
      %v1368 = vadd.f32 %v1303, %v1367
      %1369 = vmatmul.f32.gmra.mxu0 %v1120
      %v1370 = vpop.f32.mrf.mxu0
      %v1371 = vadd.f32 %v1306, %v1370
      %1372 = vmatmul.f32.gmra.mxu0 %v1123
      %v1373 = vpop.f32.mrf.mxu0
      %v1374 = vadd.f32 %v1309, %v1373
      %1375 = vmatmul.f32.gmra.mxu0 %v1126
      %v1376 = vpop.f32.mrf.mxu0
      %v1377 = vadd.f32 %v1312, %v1376
      %1378 = vmatmul.f32.gmra.mxu0 %v1129
      %v1379 = vpop.f32.mrf.mxu0
      %v1380 = vadd.f32 %v1315, %v1379
      %1381 = vmatmul.f32.gmra.mxu0 %v1132
      %v1382 = vpop.f32.mrf.mxu0
      %v1383 = vadd.f32 %v1318, %v1382
      %1384 = vmatmul.f32.gmra.mxu0 %v1135
      %v1385 = vpop.f32.mrf.mxu0
      %v1386 = vadd.f32 %v1321, %v1385
      %1387 = vmatmul.f32.gmra.mxu0 %v1138
      %v1388 = vpop.f32.mrf.mxu0
      %v1389 = vadd.f32 %v1324, %v1388
      %1390 = vmatmul.f32.gmra.mxu0 %v1141
      %v1391 = vpop.f32.mrf.mxu0
      %v1392 = vadd.f32 %v1327, %v1391
      %1393 = vmatmul.f32.gmra.mxu0 %v1144
      %v1394 = vpop.f32.mrf.mxu0
      %v1395 = vadd.f32 %v1330, %v1394
      %1396 = vmatmul.f32.gmra.mxu0 %v1147
      %v1397 = vpop.f32.mrf.mxu0
      %v1398 = vadd.f32 %v1333, %v1397
      %1399 = vdwg.mxu0
      %1400 = vmatpush.msra.mxu0 0.0
      %1401 = vmatpush.msra.mxu0 0.0
      %1402 = vmatpush.msra.mxu0 0.0
      %1403 = vmatpush.msra.mxu0 0.0
      %1404 = vmatpush.msra.mxu0 0.0
      %1405 = vmatpush.msra.mxu0 0.0
      %1406 = vmatpush.msra.mxu0 0.0
      %1407 = vmatpush.msra.mxu0 0.0
      %1408 = vmatpush.msra.mxu0 0.0
      %1409 = vmatpush.msra.mxu0 0.0
      %1410 = vmatpush.msra.mxu0 0.0
      %1411 = vmatpush.msra.mxu0 0.0
      %1412 = vmatpush.msra.mxu0 %v1219
      %1413 = vmatpush.msra.mxu0 %v1217
      %1414 = vmatpush.msra.mxu0 %v1215
      %1415 = vmatpush.msra.mxu0 %v1213
      %1416 = vmatmul.f32.gmra.mxu0 %v1223
      %v1417 = vpop.f32.mrf.mxu0
      %v1418 = vadd.f32 %v1353, %v1417
      %1419 = vmatmul.f32.gmra.mxu0 %v1226
      %v1420 = vpop.f32.mrf.mxu0
      %v1421 = vadd.f32 %v1356, %v1420
      %1422 = vmatmul.f32.gmra.mxu0 %v1229
      %v1423 = vpop.f32.mrf.mxu0
      %v1424 = vadd.f32 %v1359, %v1423
      %1425 = vmatmul.f32.gmra.mxu0 %v1232
      %v1426 = vpop.f32.mrf.mxu0
      %v1427 = vadd.f32 %v1362, %v1426
      %1428 = vmatmul.f32.gmra.mxu0 %v1235
      %v1429 = vpop.f32.mrf.mxu0
      %v1430 = vadd.f32 %v1365, %v1429
      %1431 = vmatmul.f32.gmra.mxu0 %v1238
      %v1432 = vpop.f32.mrf.mxu0
      %v1433 = vadd.f32 %v1368, %v1432
      %1434 = vmatmul.f32.gmra.mxu0 %v1241
      %v1435 = vpop.f32.mrf.mxu0
      %v1436 = vadd.f32 %v1371, %v1435
      %1437 = vmatmul.f32.gmra.mxu0 %v1244
      %v1438 = vpop.f32.mrf.mxu0
      %v1439 = vadd.f32 %v1374, %v1438
      %1440 = vmatmul.f32.gmra.mxu0 %v1247
      %v1441 = vpop.f32.mrf.mxu0
      %v1442 = vadd.f32 %v1377, %v1441
      %1443 = vmatmul.f32.gmra.mxu0 %v1250
      %v1444 = vpop.f32.mrf.mxu0
      %v1445 = vadd.f32 %v1380, %v1444
      %1446 = vmatmul.f32.gmra.mxu0 %v1253
      %v1447 = vpop.f32.mrf.mxu0
      %v1448 = vadd.f32 %v1383, %v1447
      %1449 = vmatmul.f32.gmra.mxu0 %v1256
      %v1450 = vpop.f32.mrf.mxu0
      %v1451 = vadd.f32 %v1386, %v1450
      %1452 = vmatmul.f32.gmra.mxu0 %v1259
      %v1453 = vpop.f32.mrf.mxu0
      %v1454 = vadd.f32 %v1389, %v1453
      %1455 = vmatmul.f32.gmra.mxu0 %v1262
      %v1456 = vpop.f32.mrf.mxu0
      %v1457 = vadd.f32 %v1392, %v1456
      %1458 = vmatmul.f32.gmra.mxu0 %v1265
      %v1459 = vpop.f32.mrf.mxu0
      %v1460 = vadd.f32 %v1395, %v1459
      %1461 = vmatmul.f32.gmra.mxu0 %v1268
      %v1462 = vpop.f32.mrf.mxu0
      %v1463 = vadd.f32 %v1398, %v1462
      %1464 = vdwg.mxu0
      %1465 = vmatpush.msra.mxu0 %v1180
      %1466 = vmatpush.msra.mxu0 %v1178
      %1467 = vmatpush.msra.mxu0 %v1176
      %1468 = vmatpush.msra.mxu0 %v1174
      %1469 = vmatpush.msra.mxu0 %v1172
      %1470 = vmatpush.msra.mxu0 %v1170
      %1471 = vmatpush.msra.mxu0 %v1168
      %1472 = vmatpush.msra.mxu0 %v1166
      %1473 = vmatpush.msra.mxu0 %v1164
      %1474 = vmatpush.msra.mxu0 %v1162
      %1475 = vmatpush.msra.mxu0 %v1160
      %1476 = vmatpush.msra.mxu0 %v1158
      %1477 = vmatpush.msra.mxu0 %v1156
      %1478 = vmatpush.msra.mxu0 %v1154
      %1479 = vmatpush.msra.mxu0 %v1152
      %1480 = vmatpush.msra.mxu0 %v1150
      %1481 = vmatmul.f32.gmra.mxu0 %v1101
      %v1482 = vpop.f32.mrf.mxu0
      %v1483 = vadd.f32 0.0, %v1482
      %1484 = vmatmul.f32.gmra.mxu0 %v1104
      %v1485 = vpop.f32.mrf.mxu0
      %v1486 = vadd.f32 0.0, %v1485
      %1487 = vmatmul.f32.gmra.mxu0 %v1107
      %v1488 = vpop.f32.mrf.mxu0
      %v1489 = vadd.f32 0.0, %v1488
      %1490 = vmatmul.f32.gmra.mxu0 %v1110
      %v1491 = vpop.f32.mrf.mxu0
      %v1492 = vadd.f32 0.0, %v1491
      %1493 = vmatmul.f32.gmra.mxu0 %v1113
      %v1494 = vpop.f32.mrf.mxu0
      %v1495 = vadd.f32 0.0, %v1494
      %1496 = vmatmul.f32.gmra.mxu0 %v1116
      %v1497 = vpop.f32.mrf.mxu0
      %v1498 = vadd.f32 0.0, %v1497
      %1499 = vmatmul.f32.gmra.mxu0 %v1119
      %v1500 = vpop.f32.mrf.mxu0
      %v1501 = vadd.f32 0.0, %v1500
      %1502 = vmatmul.f32.gmra.mxu0 %v1122
      %v1503 = vpop.f32.mrf.mxu0
      %v1504 = vadd.f32 0.0, %v1503
      %1505 = vmatmul.f32.gmra.mxu0 %v1125
      %v1506 = vpop.f32.mrf.mxu0
      %v1507 = vadd.f32 0.0, %v1506
      %1508 = vmatmul.f32.gmra.mxu0 %v1128
      %v1509 = vpop.f32.mrf.mxu0
      %v1510 = vadd.f32 0.0, %v1509
      %1511 = vmatmul.f32.gmra.mxu0 %v1131
      %v1512 = vpop.f32.mrf.mxu0
      %v1513 = vadd.f32 0.0, %v1512
      %1514 = vmatmul.f32.gmra.mxu0 %v1134
      %v1515 = vpop.f32.mrf.mxu0
      %v1516 = vadd.f32 0.0, %v1515
      %1517 = vmatmul.f32.gmra.mxu0 %v1137
      %v1518 = vpop.f32.mrf.mxu0
      %v1519 = vadd.f32 0.0, %v1518
      %1520 = vmatmul.f32.gmra.mxu0 %v1140
      %v1521 = vpop.f32.mrf.mxu0
      %v1522 = vadd.f32 0.0, %v1521
      %1523 = vmatmul.f32.gmra.mxu0 %v1143
      %v1524 = vpop.f32.mrf.mxu0
      %v1525 = vadd.f32 0.0, %v1524
      %1526 = vmatmul.f32.gmra.mxu0 %v1146
      %v1527 = vpop.f32.mrf.mxu0
      %v1528 = vadd.f32 0.0, %v1527
      %1529 = vdwg.mxu0
      %1530 = vmatpush.msra.mxu0 %v1212
      %1531 = vmatpush.msra.mxu0 %v1210
      %1532 = vmatpush.msra.mxu0 %v1208
      %1533 = vmatpush.msra.mxu0 %v1206
      %1534 = vmatpush.msra.mxu0 %v1204
      %1535 = vmatpush.msra.mxu0 %v1202
      %1536 = vmatpush.msra.mxu0 %v1200
      %1537 = vmatpush.msra.mxu0 %v1198
      %1538 = vmatpush.msra.mxu0 %v1196
      %1539 = vmatpush.msra.mxu0 %v1194
      %1540 = vmatpush.msra.mxu0 %v1192
      %1541 = vmatpush.msra.mxu0 %v1190
      %1542 = vmatpush.msra.mxu0 %v1188
      %1543 = vmatpush.msra.mxu0 %v1186
      %1544 = vmatpush.msra.mxu0 %v1184
      %1545 = vmatpush.msra.mxu0 %v1182
      %1546 = vmatmul.f32.gmra.mxu0 %v1102
      %v1547 = vpop.f32.mrf.mxu0
      %v1548 = vadd.f32 %v1483, %v1547
      %1549 = vmatmul.f32.gmra.mxu0 %v1105
      %v1550 = vpop.f32.mrf.mxu0
      %v1551 = vadd.f32 %v1486, %v1550
      %1552 = vmatmul.f32.gmra.mxu0 %v1108
      %v1553 = vpop.f32.mrf.mxu0
      %v1554 = vadd.f32 %v1489, %v1553
      %1555 = vmatmul.f32.gmra.mxu0 %v1111
      %v1556 = vpop.f32.mrf.mxu0
      %v1557 = vadd.f32 %v1492, %v1556
      %1558 = vmatmul.f32.gmra.mxu0 %v1114
      %v1559 = vpop.f32.mrf.mxu0
      %v1560 = vadd.f32 %v1495, %v1559
      %1561 = vmatmul.f32.gmra.mxu0 %v1117
      %v1562 = vpop.f32.mrf.mxu0
      %v1563 = vadd.f32 %v1498, %v1562
      %1564 = vmatmul.f32.gmra.mxu0 %v1120
      %v1565 = vpop.f32.mrf.mxu0
      %v1566 = vadd.f32 %v1501, %v1565
      %1567 = vmatmul.f32.gmra.mxu0 %v1123
      %v1568 = vpop.f32.mrf.mxu0
      %v1569 = vadd.f32 %v1504, %v1568
      %1570 = vmatmul.f32.gmra.mxu0 %v1126
      %v1571 = vpop.f32.mrf.mxu0
      %v1572 = vadd.f32 %v1507, %v1571
      %1573 = vmatmul.f32.gmra.mxu0 %v1129
      %v1574 = vpop.f32.mrf.mxu0
      %v1575 = vadd.f32 %v1510, %v1574
      %1576 = vmatmul.f32.gmra.mxu0 %v1132
      %v1577 = vpop.f32.mrf.mxu0
      %v1578 = vadd.f32 %v1513, %v1577
      %1579 = vmatmul.f32.gmra.mxu0 %v1135
      %v1580 = vpop.f32.mrf.mxu0
      %v1581 = vadd.f32 %v1516, %v1580
      %1582 = vmatmul.f32.gmra.mxu0 %v1138
      %v1583 = vpop.f32.mrf.mxu0
      %v1584 = vadd.f32 %v1519, %v1583
      %1585 = vmatmul.f32.gmra.mxu0 %v1141
      %v1586 = vpop.f32.mrf.mxu0
      %v1587 = vadd.f32 %v1522, %v1586
      %1588 = vmatmul.f32.gmra.mxu0 %v1144
      %v1589 = vpop.f32.mrf.mxu0
      %v1590 = vadd.f32 %v1525, %v1589
      %1591 = vmatmul.f32.gmra.mxu0 %v1147
      %v1592 = vpop.f32.mrf.mxu0
      %v1593 = vadd.f32 %v1528, %v1592
      %1594 = vdwg.mxu0
      %1595 = vmatpush.msra.mxu0 0.0
      %1596 = vmatpush.msra.mxu0 0.0
      %1597 = vmatpush.msra.mxu0 0.0
      %1598 = vmatpush.msra.mxu0 0.0
      %1599 = vmatpush.msra.mxu0 0.0
      %1600 = vmatpush.msra.mxu0 0.0
      %1601 = vmatpush.msra.mxu0 0.0
      %1602 = vmatpush.msra.mxu0 0.0
      %1603 = vmatpush.msra.mxu0 0.0
      %1604 = vmatpush.msra.mxu0 0.0
      %1605 = vmatpush.msra.mxu0 0.0
      %1606 = vmatpush.msra.mxu0 0.0
      %1607 = vmatpush.msra.mxu0 %v1220
      %1608 = vmatpush.msra.mxu0 %v1218
      %1609 = vmatpush.msra.mxu0 %v1216
      %1610 = vmatpush.msra.mxu0 %v1214
      %1611 = vmatmul.f32.gmra.mxu0 %v1223
      %v1612 = vpop.f32.mrf.mxu0
      %v1613 = vadd.f32 %v1548, %v1612
      %1614 = vmatmul.f32.gmra.mxu0 %v1226
      %v1615 = vpop.f32.mrf.mxu0
      %v1616 = vadd.f32 %v1551, %v1615
      %1617 = vmatmul.f32.gmra.mxu0 %v1229
      %v1618 = vpop.f32.mrf.mxu0
      %v1619 = vadd.f32 %v1554, %v1618
      %1620 = vmatmul.f32.gmra.mxu0 %v1232
      %v1621 = vpop.f32.mrf.mxu0
      %v1622 = vadd.f32 %v1557, %v1621
      %1623 = vmatmul.f32.gmra.mxu0 %v1235
      %v1624 = vpop.f32.mrf.mxu0
      %v1625 = vadd.f32 %v1560, %v1624
      %1626 = vmatmul.f32.gmra.mxu0 %v1238
      %v1627 = vpop.f32.mrf.mxu0
      %v1628 = vadd.f32 %v1563, %v1627
      %1629 = vmatmul.f32.gmra.mxu0 %v1241
      %v1630 = vpop.f32.mrf.mxu0
      %v1631 = vadd.f32 %v1566, %v1630
      %1632 = vmatmul.f32.gmra.mxu0 %v1244
      %v1633 = vpop.f32.mrf.mxu0
      %v1634 = vadd.f32 %v1569, %v1633
      %1635 = vmatmul.f32.gmra.mxu0 %v1247
      %v1636 = vpop.f32.mrf.mxu0
      %v1637 = vadd.f32 %v1572, %v1636
      %1638 = vmatmul.f32.gmra.mxu0 %v1250
      %v1639 = vpop.f32.mrf.mxu0
      %v1640 = vadd.f32 %v1575, %v1639
      %1641 = vmatmul.f32.gmra.mxu0 %v1253
      %v1642 = vpop.f32.mrf.mxu0
      %v1643 = vadd.f32 %v1578, %v1642
      %1644 = vmatmul.f32.gmra.mxu0 %v1256
      %v1645 = vpop.f32.mrf.mxu0
      %v1646 = vadd.f32 %v1581, %v1645
      %1647 = vmatmul.f32.gmra.mxu0 %v1259
      %v1648 = vpop.f32.mrf.mxu0
      %v1649 = vadd.f32 %v1584, %v1648
      %1650 = vmatmul.f32.gmra.mxu0 %v1262
      %v1651 = vpop.f32.mrf.mxu0
      %v1652 = vadd.f32 %v1587, %v1651
      %1653 = vmatmul.f32.gmra.mxu0 %v1265
      %v1654 = vpop.f32.mrf.mxu0
      %v1655 = vadd.f32 %v1590, %v1654
      %1656 = vmatmul.f32.gmra.mxu0 %v1268
      %v1657 = vpop.f32.mrf.mxu0
      %v1658 = vadd.f32 %v1593, %v1657
      %1659 = vdwg.mxu0
      %v1660 = vadd.f32 %v1069, %v1418
      %v1661 = vadd.f32 %v1070, %v1613
      %v1662 = vadd.f32 %v1071, %v1421
      %v1663 = vadd.f32 %v1072, %v1616
      %v1664 = vadd.f32 %v1073, %v1424
      %v1665 = vadd.f32 %v1074, %v1619
      %v1666 = vadd.f32 %v1075, %v1427
      %v1667 = vadd.f32 %v1076, %v1622
      %v1668 = vadd.f32 %v1077, %v1430
      %v1669 = vadd.f32 %v1078, %v1625
      %v1670 = vadd.f32 %v1079, %v1433
      %v1671 = vadd.f32 %v1080, %v1628
      %v1672 = vadd.f32 %v1081, %v1436
      %v1673 = vadd.f32 %v1082, %v1631
      %v1674 = vadd.f32 %v1083, %v1439
      %v1675 = vadd.f32 %v1084, %v1634
      %v1676 = vadd.f32 %v1085, %v1442
      %v1677 = vadd.f32 %v1086, %v1637
      %v1678 = vadd.f32 %v1087, %v1445
      %v1679 = vadd.f32 %v1088, %v1640
      %v1680 = vadd.f32 %v1089, %v1448
      %v1681 = vadd.f32 %v1090, %v1643
      %v1682 = vadd.f32 %v1091, %v1451
      %v1683 = vadd.f32 %v1092, %v1646
      %v1684 = vadd.f32 %v1093, %v1454
      %v1685 = vadd.f32 %v1094, %v1649
      %v1686 = vadd.f32 %v1095, %v1457
      %v1687 = vadd.f32 %v1096, %v1652
      %v1688 = vadd.f32 %v1097, %v1460
      %v1689 = vadd.f32 %v1098, %v1655
      %v1690 = vadd.f32 %v1099, %v1463
      %v1691 = vadd.f32 %v1100, %v1658
      %1692 = vst [vmem:[#allocation5] sm:$0xff] %v1660
      %1693 = vst [vmem:[#allocation5 + $0x8] sm:$0xff] %v1661
      %1694 = vst [vmem:[#allocation5 + $0x10] sm:$0xff] %v1662
      %1695 = vst [vmem:[#allocation5 + $0x18] sm:$0xff] %v1663
      %1696 = vst [vmem:[#allocation5 + $0x20] sm:$0xff] %v1664
      %1697 = vst [vmem:[#allocation5 + $0x28] sm:$0xff] %v1665
      %1698 = vst [vmem:[#allocation5 + $0x30] sm:$0xff] %v1666
      %1699 = vst [vmem:[#allocation5 + $0x38] sm:$0xff] %v1667
      %1700 = vst [vmem:[#allocation5 + $0x40] sm:$0xff] %v1668
      %1701 = vst [vmem:[#allocation5 + $0x48] sm:$0xff] %v1669
      %1702 = vst [vmem:[#allocation5 + $0x50] sm:$0xff] %v1670
      %1703 = vst [vmem:[#allocation5 + $0x58] sm:$0xff] %v1671
      %1704 = vst [vmem:[#allocation5 + $0x60] sm:$0xff] %v1672
      %1705 = vst [vmem:[#allocation5 + $0x68] sm:$0xff] %v1673
      %1706 = vst [vmem:[#allocation5 + $0x70] sm:$0xff] %v1674
      %1707 = vst [vmem:[#allocation5 + $0x78] sm:$0xff] %v1675
      %1708 = vst [vmem:[#allocation5 + $0x80] sm:$0xff] %v1676
      %1709 = vst [vmem:[#allocation5 + $0x88] sm:$0xff] %v1677
      %1710 = vst [vmem:[#allocation5 + $0x90] sm:$0xff] %v1678
      %1711 = vst [vmem:[#allocation5 + $0x98] sm:$0xff] %v1679
      %1712 = vst [vmem:[#allocation5 + $0xa0] sm:$0xff] %v1680
      %1713 = vst [vmem:[#allocation5 + $0xa8] sm:$0xff] %v1681
      %1714 = vst [vmem:[#allocation5 + $0xb0] sm:$0xff] %v1682
      %1715 = vst [vmem:[#allocation5 + $0xb8] sm:$0xff] %v1683
      %1716 = vst [vmem:[#allocation5 + $0xc0] sm:$0xff] %v1684
      %1717 = vst [vmem:[#allocation5 + $0xc8] sm:$0xff] %v1685
      %1718 = vst [vmem:[#allocation5 + $0xd0] sm:$0xff] %v1686
      %1719 = vst [vmem:[#allocation5 + $0xd8] sm:$0xff] %v1687
      %1720 = vst [vmem:[#allocation5 + $0xe0] sm:$0xff] %v1688
      %1721 = vst [vmem:[#allocation5 + $0xe8] sm:$0xff] %v1689
      %1722 = vst [vmem:[#allocation5 + $0xf0] sm:$0xff] %v1690
      %1723 = vst [vmem:[#allocation5 + $0xf8] sm:$0xff] %v1691
      %v1724 = vld [vmem:[#allocation5] sm:$0xff]
      %v1725 = vld [vmem:[#allocation5 + $0x8] sm:$0xff]
      %v1726 = vld [vmem:[#allocation5 + $0x10] sm:$0xff]
      %v1727 = vld [vmem:[#allocation5 + $0x18] sm:$0xff]
      %v1728 = vld [vmem:[#allocation5 + $0x20] sm:$0xff]
      %v1729 = vld [vmem:[#allocation5 + $0x28] sm:$0xff]
      %v1730 = vld [vmem:[#allocation5 + $0x30] sm:$0xff]
      %v1731 = vld [vmem:[#allocation5 + $0x38] sm:$0xff]
      %v1732 = vld [vmem:[%s3] sm:$0xff]
      %v1733 = vld [vmem:[%s3 + $0x8] sm:$0xff]
      %v1734 = vld [vmem:[%s3 + $0x10] sm:$0xff]
      %v1735 = vld [vmem:[%s3 + $0x18] sm:$0xff]
      %1737 = vset.pattern.permute.xlu0 0
      %1738 = vperm.xlu0 %1737, %v1732
      %v1739 = vpop.permute.xlu0 %1738
      %1742 = vset.pattern.permute.xlu0 0
      %1743 = vperm.xlu0 %1742, %v1733
      %v1744 = vpop.permute.xlu0 %1743
      %1747 = vset.pattern.permute.xlu0 0
      %1748 = vperm.xlu0 %1747, %v1734
      %v1749 = vpop.permute.xlu0 %1748
      %1752 = vset.pattern.permute.xlu0 0
      %1753 = vperm.xlu0 %1752, %v1735
      %v1754 = vpop.permute.xlu0 %1753
      %v1756 = vadd.f32 %v1724, %v1739
      %v1757 = vadd.f32 %v1725, %v1739
      %v1758 = vadd.f32 %v1726, %v1744
      %v1759 = vadd.f32 %v1727, %v1744
      %v1760 = vadd.f32 %v1728, %v1749
      %v1761 = vadd.f32 %v1729, %v1749
      %v1762 = vadd.f32 %v1730, %v1754
      %v1763 = vadd.f32 %v1731, %v1754
      %v1764 = vxor.u32 %v1756, 2147483648
      %v1765 = vxor.u32 %v1757, 2147483648
      %v1766 = vxor.u32 %v1758, 2147483648
      %v1767 = vxor.u32 %v1759, 2147483648
      %v1768 = vxor.u32 %v1760, 2147483648
      %v1769 = vxor.u32 %v1761, 2147483648
      %v1770 = vxor.u32 %v1762, 2147483648
      %v1771 = vxor.u32 %v1763, 2147483648
      %v1772 = vmul.f32 %v1764, 1.442695
      %v1773 = vpow.pop %v1772
      %v1774 = vmul.f32 %v1765, 1.442695
      %v1775 = vpow.pop %v1774
      %v1776 = vmul.f32 %v1766, 1.442695
      %v1777 = vpow.pop %v1776
      %v1778 = vmul.f32 %v1767, 1.442695
      %v1779 = vpow.pop %v1778
      %v1780 = vmul.f32 %v1768, 1.442695
      %v1781 = vpow.pop %v1780
      %v1782 = vmul.f32 %v1769, 1.442695
      %v1783 = vpow.pop %v1782
      %v1784 = vmul.f32 %v1770, 1.442695
      %v1785 = vpow.pop %v1784
      %v1786 = vmul.f32 %v1771, 1.442695
      %v1787 = vpow.pop %v1786
      %v1788 = vadd.f32 %v1773, 1.0
      %v1789 = vadd.f32 %v1775, 1.0
      %v1790 = vadd.f32 %v1777, 1.0
      %v1791 = vadd.f32 %v1779, 1.0
      %v1792 = vadd.f32 %v1781, 1.0
      %v1793 = vadd.f32 %v1783, 1.0
      %v1794 = vadd.f32 %v1785, 1.0
      %v1795 = vadd.f32 %v1787, 1.0
      %v1796 = vrcp.pop %v1788
      %v1797 = vmul.f32 %v1788, %v1796
      %v1798 = vsub.f32 1.0, %v1797
      %v1799 = vmul.f32 %v1796, %v1798
      %v1800 = vadd.f32 %v1796, %v1799
      %vm1801 = vweird.f32 %v1788
      %vm1802 = vweird.f32 %v1796
      %vm1803 = vmor %vm1801, %vm1802
      %v1804 = vsel %vm1803, %v1796, %v1800
      %v1805 = vand.u32 2147483647, %v1788
      %vm1806 = vcmp.eq.f32.partialorder %v1805, 8.507059e+37
      %v1807 = vand.u32 %v1788, 2147483648
      %v1808 = vor.u32 1.1754944e-38, %v1807
      %v1809 = vsel %vm1806, %v1808, %v1804
      %v1810 = vmul.f32 1.0, %v1809
      %v1811 = vrcp.pop %v1789
      %v1812 = vmul.f32 %v1789, %v1811
      %v1813 = vsub.f32 1.0, %v1812
      %v1814 = vmul.f32 %v1811, %v1813
      %v1815 = vadd.f32 %v1811, %v1814
      %vm1816 = vweird.f32 %v1789
      %vm1817 = vweird.f32 %v1811
      %vm1818 = vmor %vm1816, %vm1817
      %v1819 = vsel %vm1818, %v1811, %v1815
      %v1820 = vand.u32 2147483647, %v1789
      %vm1821 = vcmp.eq.f32.partialorder %v1820, 8.507059e+37
      %v1822 = vand.u32 %v1789, 2147483648
      %v1823 = vor.u32 1.1754944e-38, %v1822
      %v1824 = vsel %vm1821, %v1823, %v1819
      %v1825 = vmul.f32 1.0, %v1824
      %v1826 = vrcp.pop %v1790
      %v1827 = vmul.f32 %v1790, %v1826
      %v1828 = vsub.f32 1.0, %v1827
      %v1829 = vmul.f32 %v1826, %v1828
      %v1830 = vadd.f32 %v1826, %v1829
      %vm1831 = vweird.f32 %v1790
      %vm1832 = vweird.f32 %v1826
      %vm1833 = vmor %vm1831, %vm1832
      %v1834 = vsel %vm1833, %v1826, %v1830
      %v1835 = vand.u32 2147483647, %v1790
      %vm1836 = vcmp.eq.f32.partialorder %v1835, 8.507059e+37
      %v1837 = vand.u32 %v1790, 2147483648
      %v1838 = vor.u32 1.1754944e-38, %v1837
      %v1839 = vsel %vm1836, %v1838, %v1834
      %v1840 = vmul.f32 1.0, %v1839
      %v1841 = vrcp.pop %v1791
      %v1842 = vmul.f32 %v1791, %v1841
      %v1843 = vsub.f32 1.0, %v1842
      %v1844 = vmul.f32 %v1841, %v1843
      %v1845 = vadd.f32 %v1841, %v1844
      %vm1846 = vweird.f32 %v1791
      %vm1847 = vweird.f32 %v1841
      %vm1848 = vmor %vm1846, %vm1847
      %v1849 = vsel %vm1848, %v1841, %v1845
      %v1850 = vand.u32 2147483647, %v1791
      %vm1851 = vcmp.eq.f32.partialorder %v1850, 8.507059e+37
      %v1852 = vand.u32 %v1791, 2147483648
      %v1853 = vor.u32 1.1754944e-38, %v1852
      %v1854 = vsel %vm1851, %v1853, %v1849
      %v1855 = vmul.f32 1.0, %v1854
      %v1856 = vrcp.pop %v1792
      %v1857 = vmul.f32 %v1792, %v1856
      %v1858 = vsub.f32 1.0, %v1857
      %v1859 = vmul.f32 %v1856, %v1858
      %v1860 = vadd.f32 %v1856, %v1859
      %vm1861 = vweird.f32 %v1792
      %vm1862 = vweird.f32 %v1856
      %vm1863 = vmor %vm1861, %vm1862
      %v1864 = vsel %vm1863, %v1856, %v1860
      %v1865 = vand.u32 2147483647, %v1792
      %vm1866 = vcmp.eq.f32.partialorder %v1865, 8.507059e+37
      %v1867 = vand.u32 %v1792, 2147483648
      %v1868 = vor.u32 1.1754944e-38, %v1867
      %v1869 = vsel %vm1866, %v1868, %v1864
      %v1870 = vmul.f32 1.0, %v1869
      %v1871 = vrcp.pop %v1793
      %v1872 = vmul.f32 %v1793, %v1871
      %v1873 = vsub.f32 1.0, %v1872
      %v1874 = vmul.f32 %v1871, %v1873
      %v1875 = vadd.f32 %v1871, %v1874
      %vm1876 = vweird.f32 %v1793
      %vm1877 = vweird.f32 %v1871
      %vm1878 = vmor %vm1876, %vm1877
      %v1879 = vsel %vm1878, %v1871, %v1875
      %v1880 = vand.u32 2147483647, %v1793
      %vm1881 = vcmp.eq.f32.partialorder %v1880, 8.507059e+37
      %v1882 = vand.u32 %v1793, 2147483648
      %v1883 = vor.u32 1.1754944e-38, %v1882
      %v1884 = vsel %vm1881, %v1883, %v1879
      %v1885 = vmul.f32 1.0, %v1884
      %v1886 = vrcp.pop %v1794
      %v1887 = vmul.f32 %v1794, %v1886
      %v1888 = vsub.f32 1.0, %v1887
      %v1889 = vmul.f32 %v1886, %v1888
      %v1890 = vadd.f32 %v1886, %v1889
      %vm1891 = vweird.f32 %v1794
      %vm1892 = vweird.f32 %v1886
      %vm1893 = vmor %vm1891, %vm1892
      %v1894 = vsel %vm1893, %v1886, %v1890
      %v1895 = vand.u32 2147483647, %v1794
      %vm1896 = vcmp.eq.f32.partialorder %v1895, 8.507059e+37
      %v1897 = vand.u32 %v1794, 2147483648
      %v1898 = vor.u32 1.1754944e-38, %v1897
      %v1899 = vsel %vm1896, %v1898, %v1894
      %v1900 = vmul.f32 1.0, %v1899
      %v1901 = vrcp.pop %v1795
      %v1902 = vmul.f32 %v1795, %v1901
      %v1903 = vsub.f32 1.0, %v1902
      %v1904 = vmul.f32 %v1901, %v1903
      %v1905 = vadd.f32 %v1901, %v1904
      %vm1906 = vweird.f32 %v1795
      %vm1907 = vweird.f32 %v1901
      %vm1908 = vmor %vm1906, %vm1907
      %v1909 = vsel %vm1908, %v1901, %v1905
      %v1910 = vand.u32 2147483647, %v1795
      %vm1911 = vcmp.eq.f32.partialorder %v1910, 8.507059e+37
      %v1912 = vand.u32 %v1795, 2147483648
      %v1913 = vor.u32 1.1754944e-38, %v1912
      %v1914 = vsel %vm1911, %v1913, %v1909
      %v1915 = vmul.f32 1.0, %v1914
      %v1916 = vld [vmem:[#allocation5 + $0x40] sm:$0xff]
      %v1917 = vld [vmem:[#allocation5 + $0x48] sm:$0xff]
      %v1918 = vld [vmem:[#allocation5 + $0x50] sm:$0xff]
      %v1919 = vld [vmem:[#allocation5 + $0x58] sm:$0xff]
      %v1920 = vld [vmem:[#allocation5 + $0x60] sm:$0xff]
      %v1921 = vld [vmem:[#allocation5 + $0x68] sm:$0xff]
      %v1922 = vld [vmem:[#allocation5 + $0x70] sm:$0xff]
      %v1923 = vld [vmem:[#allocation5 + $0x78] sm:$0xff]
      %v1924 = vld [vmem:[%s3 + $0x20] sm:$0xff]
      %v1925 = vld [vmem:[%s3 + $0x28] sm:$0xff]
      %v1926 = vld [vmem:[%s3 + $0x30] sm:$0xff]
      %v1927 = vld [vmem:[%s3 + $0x38] sm:$0xff]
      %1929 = vset.pattern.permute.xlu0 0
      %1930 = vperm.xlu0 %1929, %v1924
      %v1931 = vpop.permute.xlu0 %1930
      %1934 = vset.pattern.permute.xlu0 0
      %1935 = vperm.xlu0 %1934, %v1925
      %v1936 = vpop.permute.xlu0 %1935
      %1939 = vset.pattern.permute.xlu0 0
      %1940 = vperm.xlu0 %1939, %v1926
      %v1941 = vpop.permute.xlu0 %1940
      %1944 = vset.pattern.permute.xlu0 0
      %1945 = vperm.xlu0 %1944, %v1927
      %v1946 = vpop.permute.xlu0 %1945
      %v1948 = vadd.f32 %v1916, %v1931
      %v1949 = vadd.f32 %v1917, %v1931
      %v1950 = vadd.f32 %v1918, %v1936
      %v1951 = vadd.f32 %v1919, %v1936
      %v1952 = vadd.f32 %v1920, %v1941
      %v1953 = vadd.f32 %v1921, %v1941
      %v1954 = vadd.f32 %v1922, %v1946
      %v1955 = vadd.f32 %v1923, %v1946
      %v1956 = vxor.u32 %v1948, 2147483648
      %v1957 = vxor.u32 %v1949, 2147483648
      %v1958 = vxor.u32 %v1950, 2147483648
      %v1959 = vxor.u32 %v1951, 2147483648
      %v1960 = vxor.u32 %v1952, 2147483648
      %v1961 = vxor.u32 %v1953, 2147483648
      %v1962 = vxor.u32 %v1954, 2147483648
      %v1963 = vxor.u32 %v1955, 2147483648
      %v1964 = vmul.f32 %v1956, 1.442695
      %v1965 = vpow.pop %v1964
      %v1966 = vmul.f32 %v1957, 1.442695
      %v1967 = vpow.pop %v1966
      %v1968 = vmul.f32 %v1958, 1.442695
      %v1969 = vpow.pop %v1968
      %v1970 = vmul.f32 %v1959, 1.442695
      %v1971 = vpow.pop %v1970
      %v1972 = vmul.f32 %v1960, 1.442695
      %v1973 = vpow.pop %v1972
      %v1974 = vmul.f32 %v1961, 1.442695
      %v1975 = vpow.pop %v1974
      %v1976 = vmul.f32 %v1962, 1.442695
      %v1977 = vpow.pop %v1976
      %v1978 = vmul.f32 %v1963, 1.442695
      %v1979 = vpow.pop %v1978
      %v1980 = vadd.f32 %v1965, 1.0
      %v1981 = vadd.f32 %v1967, 1.0
      %v1982 = vadd.f32 %v1969, 1.0
      %v1983 = vadd.f32 %v1971, 1.0
      %v1984 = vadd.f32 %v1973, 1.0
      %v1985 = vadd.f32 %v1975, 1.0
      %v1986 = vadd.f32 %v1977, 1.0
      %v1987 = vadd.f32 %v1979, 1.0
      %v1988 = vrcp.pop %v1980
      %v1989 = vmul.f32 %v1980, %v1988
      %v1990 = vsub.f32 1.0, %v1989
      %v1991 = vmul.f32 %v1988, %v1990
      %v1992 = vadd.f32 %v1988, %v1991
      %vm1993 = vweird.f32 %v1980
      %vm1994 = vweird.f32 %v1988
      %vm1995 = vmor %vm1993, %vm1994
      %v1996 = vsel %vm1995, %v1988, %v1992
      %v1997 = vand.u32 2147483647, %v1980
      %vm1998 = vcmp.eq.f32.partialorder %v1997, 8.507059e+37
      %v1999 = vand.u32 %v1980, 2147483648
      %v2000 = vor.u32 1.1754944e-38, %v1999
      %v2001 = vsel %vm1998, %v2000, %v1996
      %v2002 = vmul.f32 1.0, %v2001
      %v2003 = vrcp.pop %v1981
      %v2004 = vmul.f32 %v1981, %v2003
      %v2005 = vsub.f32 1.0, %v2004
      %v2006 = vmul.f32 %v2003, %v2005
      %v2007 = vadd.f32 %v2003, %v2006
      %vm2008 = vweird.f32 %v1981
      %vm2009 = vweird.f32 %v2003
      %vm2010 = vmor %vm2008, %vm2009
      %v2011 = vsel %vm2010, %v2003, %v2007
      %v2012 = vand.u32 2147483647, %v1981
      %vm2013 = vcmp.eq.f32.partialorder %v2012, 8.507059e+37
      %v2014 = vand.u32 %v1981, 2147483648
      %v2015 = vor.u32 1.1754944e-38, %v2014
      %v2016 = vsel %vm2013, %v2015, %v2011
      %v2017 = vmul.f32 1.0, %v2016
      %v2018 = vrcp.pop %v1982
      %v2019 = vmul.f32 %v1982, %v2018
      %v2020 = vsub.f32 1.0, %v2019
      %v2021 = vmul.f32 %v2018, %v2020
      %v2022 = vadd.f32 %v2018, %v2021
      %vm2023 = vweird.f32 %v1982
      %vm2024 = vweird.f32 %v2018
      %vm2025 = vmor %vm2023, %vm2024
      %v2026 = vsel %vm2025, %v2018, %v2022
      %v2027 = vand.u32 2147483647, %v1982
      %vm2028 = vcmp.eq.f32.partialorder %v2027, 8.507059e+37
      %v2029 = vand.u32 %v1982, 2147483648
      %v2030 = vor.u32 1.1754944e-38, %v2029
      %v2031 = vsel %vm2028, %v2030, %v2026
      %v2032 = vmul.f32 1.0, %v2031
      %v2033 = vrcp.pop %v1983
      %v2034 = vmul.f32 %v1983, %v2033
      %v2035 = vsub.f32 1.0, %v2034
      %v2036 = vmul.f32 %v2033, %v2035
      %v2037 = vadd.f32 %v2033, %v2036
      %vm2038 = vweird.f32 %v1983
      %vm2039 = vweird.f32 %v2033
      %vm2040 = vmor %vm2038, %vm2039
      %v2041 = vsel %vm2040, %v2033, %v2037
      %v2042 = vand.u32 2147483647, %v1983
      %vm2043 = vcmp.eq.f32.partialorder %v2042, 8.507059e+37
      %v2044 = vand.u32 %v1983, 2147483648
      %v2045 = vor.u32 1.1754944e-38, %v2044
      %v2046 = vsel %vm2043, %v2045, %v2041
      %v2047 = vmul.f32 1.0, %v2046
      %v2048 = vrcp.pop %v1984
      %v2049 = vmul.f32 %v1984, %v2048
      %v2050 = vsub.f32 1.0, %v2049
      %v2051 = vmul.f32 %v2048, %v2050
      %v2052 = vadd.f32 %v2048, %v2051
      %vm2053 = vweird.f32 %v1984
      %vm2054 = vweird.f32 %v2048
      %vm2055 = vmor %vm2053, %vm2054
      %v2056 = vsel %vm2055, %v2048, %v2052
      %v2057 = vand.u32 2147483647, %v1984
      %vm2058 = vcmp.eq.f32.partialorder %v2057, 8.507059e+37
      %v2059 = vand.u32 %v1984, 2147483648
      %v2060 = vor.u32 1.1754944e-38, %v2059
      %v2061 = vsel %vm2058, %v2060, %v2056
      %v2062 = vmul.f32 1.0, %v2061
      %v2063 = vrcp.pop %v1985
      %v2064 = vmul.f32 %v1985, %v2063
      %v2065 = vsub.f32 1.0, %v2064
      %v2066 = vmul.f32 %v2063, %v2065
      %v2067 = vadd.f32 %v2063, %v2066
      %vm2068 = vweird.f32 %v1985
      %vm2069 = vweird.f32 %v2063
      %vm2070 = vmor %vm2068, %vm2069
      %v2071 = vsel %vm2070, %v2063, %v2067
      %v2072 = vand.u32 2147483647, %v1985
      %vm2073 = vcmp.eq.f32.partialorder %v2072, 8.507059e+37
      %v2074 = vand.u32 %v1985, 2147483648
      %v2075 = vor.u32 1.1754944e-38, %v2074
      %v2076 = vsel %vm2073, %v2075, %v2071
      %v2077 = vmul.f32 1.0, %v2076
      %v2078 = vrcp.pop %v1986
      %v2079 = vmul.f32 %v1986, %v2078
      %v2080 = vsub.f32 1.0, %v2079
      %v2081 = vmul.f32 %v2078, %v2080
      %v2082 = vadd.f32 %v2078, %v2081
      %vm2083 = vweird.f32 %v1986
      %vm2084 = vweird.f32 %v2078
      %vm2085 = vmor %vm2083, %vm2084
      %v2086 = vsel %vm2085, %v2078, %v2082
      %v2087 = vand.u32 2147483647, %v1986
      %vm2088 = vcmp.eq.f32.partialorder %v2087, 8.507059e+37
      %v2089 = vand.u32 %v1986, 2147483648
      %v2090 = vor.u32 1.1754944e-38, %v2089
      %v2091 = vsel %vm2088, %v2090, %v2086
      %v2092 = vmul.f32 1.0, %v2091
      %v2093 = vrcp.pop %v1987
      %v2094 = vmul.f32 %v1987, %v2093
      %v2095 = vsub.f32 1.0, %v2094
      %v2096 = vmul.f32 %v2093, %v2095
      %v2097 = vadd.f32 %v2093, %v2096
      %vm2098 = vweird.f32 %v1987
      %vm2099 = vweird.f32 %v2093
      %vm2100 = vmor %vm2098, %vm2099
      %v2101 = vsel %vm2100, %v2093, %v2097
      %v2102 = vand.u32 2147483647, %v1987
      %vm2103 = vcmp.eq.f32.partialorder %v2102, 8.507059e+37
      %v2104 = vand.u32 %v1987, 2147483648
      %v2105 = vor.u32 1.1754944e-38, %v2104
      %v2106 = vsel %vm2103, %v2105, %v2101
      %v2107 = vmul.f32 1.0, %v2106
      %v2108 = vld [vmem:[#allocation5 + $0x80] sm:$0xff]
      %v2109 = vld [vmem:[#allocation5 + $0x88] sm:$0xff]
      %v2110 = vld [vmem:[#allocation5 + $0x90] sm:$0xff]
      %v2111 = vld [vmem:[#allocation5 + $0x98] sm:$0xff]
      %v2112 = vld [vmem:[#allocation5 + $0xa0] sm:$0xff]
      %v2113 = vld [vmem:[#allocation5 + $0xa8] sm:$0xff]
      %v2114 = vld [vmem:[#allocation5 + $0xb0] sm:$0xff]
      %v2115 = vld [vmem:[#allocation5 + $0xb8] sm:$0xff]
      %v2116 = vld [vmem:[%s3 + $0x40] sm:$0xff]
      %v2117 = vld [vmem:[%s3 + $0x48] sm:$0xff]
      %v2118 = vld [vmem:[%s3 + $0x50] sm:$0xff]
      %v2119 = vld [vmem:[%s3 + $0x58] sm:$0xff]
      %2121 = vset.pattern.permute.xlu0 0
      %2122 = vperm.xlu0 %2121, %v2116
      %v2123 = vpop.permute.xlu0 %2122
      %2126 = vset.pattern.permute.xlu0 0
      %2127 = vperm.xlu0 %2126, %v2117
      %v2128 = vpop.permute.xlu0 %2127
      %2131 = vset.pattern.permute.xlu0 0
      %2132 = vperm.xlu0 %2131, %v2118
      %v2133 = vpop.permute.xlu0 %2132
      %2136 = vset.pattern.permute.xlu0 0
      %2137 = vperm.xlu0 %2136, %v2119
      %v2138 = vpop.permute.xlu0 %2137
      %v2140 = vadd.f32 %v2108, %v2123
      %v2141 = vadd.f32 %v2109, %v2123
      %v2142 = vadd.f32 %v2110, %v2128
      %v2143 = vadd.f32 %v2111, %v2128
      %v2144 = vadd.f32 %v2112, %v2133
      %v2145 = vadd.f32 %v2113, %v2133
      %v2146 = vadd.f32 %v2114, %v2138
      %v2147 = vadd.f32 %v2115, %v2138
      %v2148 = vtanh.pop %v2140
      %v2149 = vtanh.pop %v2141
      %v2150 = vtanh.pop %v2142
      %v2151 = vtanh.pop %v2143
      %v2152 = vtanh.pop %v2144
      %v2153 = vtanh.pop %v2145
      %v2154 = vtanh.pop %v2146
      %v2155 = vtanh.pop %v2147
      %v2156 = vld [vmem:[#allocation5 + $0xc0] sm:$0xff]
      %v2157 = vld [vmem:[#allocation5 + $0xc8] sm:$0xff]
      %v2158 = vld [vmem:[#allocation5 + $0xd0] sm:$0xff]
      %v2159 = vld [vmem:[#allocation5 + $0xd8] sm:$0xff]
      %v2160 = vld [vmem:[#allocation5 + $0xe0] sm:$0xff]
      %v2161 = vld [vmem:[#allocation5 + $0xe8] sm:$0xff]
      %v2162 = vld [vmem:[#allocation5 + $0xf0] sm:$0xff]
      %v2163 = vld [vmem:[#allocation5 + $0xf8] sm:$0xff]
      %v2164 = vld [vmem:[%s3 + $0x60] sm:$0xff]
      %v2165 = vld [vmem:[%s3 + $0x68] sm:$0xff]
      %v2166 = vld [vmem:[%s3 + $0x70] sm:$0xff]
      %v2167 = vld [vmem:[%s3 + $0x78] sm:$0xff]
      %2169 = vset.pattern.permute.xlu0 0
      %2170 = vperm.xlu0 %2169, %v2164
      %v2171 = vpop.permute.xlu0 %2170
      %2174 = vset.pattern.permute.xlu0 0
      %2175 = vperm.xlu0 %2174, %v2165
      %v2176 = vpop.permute.xlu0 %2175
      %2179 = vset.pattern.permute.xlu0 0
      %2180 = vperm.xlu0 %2179, %v2166
      %v2181 = vpop.permute.xlu0 %2180
      %2184 = vset.pattern.permute.xlu0 0
      %2185 = vperm.xlu0 %2184, %v2167
      %v2186 = vpop.permute.xlu0 %2185
      %v2188 = vadd.f32 %v2156, %v2171
      %v2189 = vadd.f32 %v2157, %v2171
      %v2190 = vadd.f32 %v2158, %v2176
      %v2191 = vadd.f32 %v2159, %v2176
      %v2192 = vadd.f32 %v2160, %v2181
      %v2193 = vadd.f32 %v2161, %v2181
      %v2194 = vadd.f32 %v2162, %v2186
      %v2195 = vadd.f32 %v2163, %v2186
      %v2196 = vxor.u32 %v2188, 2147483648
      %v2197 = vxor.u32 %v2189, 2147483648
      %v2198 = vxor.u32 %v2190, 2147483648
      %v2199 = vxor.u32 %v2191, 2147483648
      %v2200 = vxor.u32 %v2192, 2147483648
      %v2201 = vxor.u32 %v2193, 2147483648
      %v2202 = vxor.u32 %v2194, 2147483648
      %v2203 = vxor.u32 %v2195, 2147483648
      %v2204 = vmul.f32 %v2196, 1.442695
      %v2205 = vpow.pop %v2204
      %v2206 = vmul.f32 %v2197, 1.442695
      %v2207 = vpow.pop %v2206
      %v2208 = vmul.f32 %v2198, 1.442695
      %v2209 = vpow.pop %v2208
      %v2210 = vmul.f32 %v2199, 1.442695
      %v2211 = vpow.pop %v2210
      %v2212 = vmul.f32 %v2200, 1.442695
      %v2213 = vpow.pop %v2212
      %v2214 = vmul.f32 %v2201, 1.442695
      %v2215 = vpow.pop %v2214
      %v2216 = vmul.f32 %v2202, 1.442695
      %v2217 = vpow.pop %v2216
      %v2218 = vmul.f32 %v2203, 1.442695
      %v2219 = vpow.pop %v2218
      %v2220 = vadd.f32 %v2205, 1.0
      %v2221 = vadd.f32 %v2207, 1.0
      %v2222 = vadd.f32 %v2209, 1.0
      %v2223 = vadd.f32 %v2211, 1.0
      %v2224 = vadd.f32 %v2213, 1.0
      %v2225 = vadd.f32 %v2215, 1.0
      %v2226 = vadd.f32 %v2217, 1.0
      %v2227 = vadd.f32 %v2219, 1.0
      %v2228 = vrcp.pop %v2220
      %v2229 = vmul.f32 %v2220, %v2228
      %v2230 = vsub.f32 1.0, %v2229
      %v2231 = vmul.f32 %v2228, %v2230
      %v2232 = vadd.f32 %v2228, %v2231
      %vm2233 = vweird.f32 %v2220
      %vm2234 = vweird.f32 %v2228
      %vm2235 = vmor %vm2233, %vm2234
      %v2236 = vsel %vm2235, %v2228, %v2232
      %v2237 = vand.u32 2147483647, %v2220
      %vm2238 = vcmp.eq.f32.partialorder %v2237, 8.507059e+37
      %v2239 = vand.u32 %v2220, 2147483648
      %v2240 = vor.u32 1.1754944e-38, %v2239
      %v2241 = vsel %vm2238, %v2240, %v2236
      %v2242 = vmul.f32 1.0, %v2241
      %v2243 = vrcp.pop %v2221
      %v2244 = vmul.f32 %v2221, %v2243
      %v2245 = vsub.f32 1.0, %v2244
      %v2246 = vmul.f32 %v2243, %v2245
      %v2247 = vadd.f32 %v2243, %v2246
      %vm2248 = vweird.f32 %v2221
      %vm2249 = vweird.f32 %v2243
      %vm2250 = vmor %vm2248, %vm2249
      %v2251 = vsel %vm2250, %v2243, %v2247
      %v2252 = vand.u32 2147483647, %v2221
      %vm2253 = vcmp.eq.f32.partialorder %v2252, 8.507059e+37
      %v2254 = vand.u32 %v2221, 2147483648
      %v2255 = vor.u32 1.1754944e-38, %v2254
      %v2256 = vsel %vm2253, %v2255, %v2251
      %v2257 = vmul.f32 1.0, %v2256
      %v2258 = vrcp.pop %v2222
      %v2259 = vmul.f32 %v2222, %v2258
      %v2260 = vsub.f32 1.0, %v2259
      %v2261 = vmul.f32 %v2258, %v2260
      %v2262 = vadd.f32 %v2258, %v2261
      %vm2263 = vweird.f32 %v2222
      %vm2264 = vweird.f32 %v2258
      %vm2265 = vmor %vm2263, %vm2264
      %v2266 = vsel %vm2265, %v2258, %v2262
      %v2267 = vand.u32 2147483647, %v2222
      %vm2268 = vcmp.eq.f32.partialorder %v2267, 8.507059e+37
      %v2269 = vand.u32 %v2222, 2147483648
      %v2270 = vor.u32 1.1754944e-38, %v2269
      %v2271 = vsel %vm2268, %v2270, %v2266
      %v2272 = vmul.f32 1.0, %v2271
      %v2273 = vrcp.pop %v2223
      %v2274 = vmul.f32 %v2223, %v2273
      %v2275 = vsub.f32 1.0, %v2274
      %v2276 = vmul.f32 %v2273, %v2275
      %v2277 = vadd.f32 %v2273, %v2276
      %vm2278 = vweird.f32 %v2223
      %vm2279 = vweird.f32 %v2273
      %vm2280 = vmor %vm2278, %vm2279
      %v2281 = vsel %vm2280, %v2273, %v2277
      %v2282 = vand.u32 2147483647, %v2223
      %vm2283 = vcmp.eq.f32.partialorder %v2282, 8.507059e+37
      %v2284 = vand.u32 %v2223, 2147483648
      %v2285 = vor.u32 1.1754944e-38, %v2284
      %v2286 = vsel %vm2283, %v2285, %v2281
      %v2287 = vmul.f32 1.0, %v2286
      %v2288 = vrcp.pop %v2224
      %v2289 = vmul.f32 %v2224, %v2288
      %v2290 = vsub.f32 1.0, %v2289
      %v2291 = vmul.f32 %v2288, %v2290
      %v2292 = vadd.f32 %v2288, %v2291
      %vm2293 = vweird.f32 %v2224
      %vm2294 = vweird.f32 %v2288
      %vm2295 = vmor %vm2293, %vm2294
      %v2296 = vsel %vm2295, %v2288, %v2292
      %v2297 = vand.u32 2147483647, %v2224
      %vm2298 = vcmp.eq.f32.partialorder %v2297, 8.507059e+37
      %v2299 = vand.u32 %v2224, 2147483648
      %v2300 = vor.u32 1.1754944e-38, %v2299
      %v2301 = vsel %vm2298, %v2300, %v2296
      %v2302 = vmul.f32 1.0, %v2301
      %v2303 = vrcp.pop %v2225
      %v2304 = vmul.f32 %v2225, %v2303
      %v2305 = vsub.f32 1.0, %v2304
      %v2306 = vmul.f32 %v2303, %v2305
      %v2307 = vadd.f32 %v2303, %v2306
      %vm2308 = vweird.f32 %v2225
      %vm2309 = vweird.f32 %v2303
      %vm2310 = vmor %vm2308, %vm2309
      %v2311 = vsel %vm2310, %v2303, %v2307
      %v2312 = vand.u32 2147483647, %v2225
      %vm2313 = vcmp.eq.f32.partialorder %v2312, 8.507059e+37
      %v2314 = vand.u32 %v2225, 2147483648
      %v2315 = vor.u32 1.1754944e-38, %v2314
      %v2316 = vsel %vm2313, %v2315, %v2311
      %v2317 = vmul.f32 1.0, %v2316
      %v2318 = vrcp.pop %v2226
      %v2319 = vmul.f32 %v2226, %v2318
      %v2320 = vsub.f32 1.0, %v2319
      %v2321 = vmul.f32 %v2318, %v2320
      %v2322 = vadd.f32 %v2318, %v2321
      %vm2323 = vweird.f32 %v2226
      %vm2324 = vweird.f32 %v2318
      %vm2325 = vmor %vm2323, %vm2324
      %v2326 = vsel %vm2325, %v2318, %v2322
      %v2327 = vand.u32 2147483647, %v2226
      %vm2328 = vcmp.eq.f32.partialorder %v2327, 8.507059e+37
      %v2329 = vand.u32 %v2226, 2147483648
      %v2330 = vor.u32 1.1754944e-38, %v2329
      %v2331 = vsel %vm2328, %v2330, %v2326
      %v2332 = vmul.f32 1.0, %v2331
      %v2333 = vrcp.pop %v2227
      %v2334 = vmul.f32 %v2227, %v2333
      %v2335 = vsub.f32 1.0, %v2334
      %v2336 = vmul.f32 %v2333, %v2335
      %v2337 = vadd.f32 %v2333, %v2336
      %vm2338 = vweird.f32 %v2227
      %vm2339 = vweird.f32 %v2333
      %vm2340 = vmor %vm2338, %vm2339
      %v2341 = vsel %vm2340, %v2333, %v2337
      %v2342 = vand.u32 2147483647, %v2227
      %vm2343 = vcmp.eq.f32.partialorder %v2342, 8.507059e+37
      %v2344 = vand.u32 %v2227, 2147483648
      %v2345 = vor.u32 1.1754944e-38, %v2344
      %v2346 = vsel %vm2343, %v2345, %v2341
      %v2347 = vmul.f32 1.0, %v2346
      %v2348 = vld [vmem:[#allocation3] sm:$0xff]
      %v2349 = vld [vmem:[#allocation3 + $0x8] sm:$0xff]
      %v2350 = vld [vmem:[#allocation3 + $0x10] sm:$0xff]
      %v2351 = vld [vmem:[#allocation3 + $0x18] sm:$0xff]
      %v2352 = vld [vmem:[#allocation3 + $0x20] sm:$0xff]
      %v2353 = vld [vmem:[#allocation3 + $0x28] sm:$0xff]
      %v2354 = vld [vmem:[#allocation3 + $0x30] sm:$0xff]
      %v2355 = vld [vmem:[#allocation3 + $0x38] sm:$0xff]
      %v2356 = vmul.f32 %v2002, %v2348
      %v2357 = vmul.f32 %v2017, %v2349
      %v2358 = vmul.f32 %v2032, %v2350
      %v2359 = vmul.f32 %v2047, %v2351
      %v2360 = vmul.f32 %v2062, %v2352
      %v2361 = vmul.f32 %v2077, %v2353
      %v2362 = vmul.f32 %v2092, %v2354
      %v2363 = vmul.f32 %v2107, %v2355
      %v2364 = vmul.f32 %v1810, %v2148
      %v2365 = vmul.f32 %v1825, %v2149
      %v2366 = vmul.f32 %v1840, %v2150
      %v2367 = vmul.f32 %v1855, %v2151
      %v2368 = vmul.f32 %v1870, %v2152
      %v2369 = vmul.f32 %v1885, %v2153
      %v2370 = vmul.f32 %v1900, %v2154
      %v2371 = vmul.f32 %v1915, %v2155
      %v2372 = vadd.f32 %v2356, %v2364
      %v2373 = vadd.f32 %v2357, %v2365
      %v2374 = vadd.f32 %v2358, %v2366
      %v2375 = vadd.f32 %v2359, %v2367
      %v2376 = vadd.f32 %v2360, %v2368
      %v2377 = vadd.f32 %v2361, %v2369
      %v2378 = vadd.f32 %v2362, %v2370
      %v2379 = vadd.f32 %v2363, %v2371
      %v2380 = vtanh.pop %v2372
      %v2381 = vtanh.pop %v2373
      %v2382 = vtanh.pop %v2374
      %v2383 = vtanh.pop %v2375
      %v2384 = vtanh.pop %v2376
      %v2385 = vtanh.pop %v2377
      %v2386 = vtanh.pop %v2378
      %v2387 = vtanh.pop %v2379
      %v2388 = vmul.f32 %v2242, %v2380
      %v2389 = vmul.f32 %v2257, %v2381
      %v2390 = vmul.f32 %v2272, %v2382
      %v2391 = vmul.f32 %v2287, %v2383
      %v2392 = vmul.f32 %v2302, %v2384
      %v2393 = vmul.f32 %v2317, %v2385
      %v2394 = vmul.f32 %v2332, %v2386
      %v2395 = vmul.f32 %v2347, %v2387
      %2396 = vst [vmem:[#allocation2] sm:$0xff] %v2388
      %2397 = vst [vmem:[#allocation2 + $0x8] sm:$0xff] %v2389
      %2398 = vst [vmem:[#allocation2 + $0x10] sm:$0xff] %v2390
      %2399 = vst [vmem:[#allocation2 + $0x18] sm:$0xff] %v2391
      %2400 = vst [vmem:[#allocation2 + $0x20] sm:$0xff] %v2392
      %2401 = vst [vmem:[#allocation2 + $0x28] sm:$0xff] %v2393
      %2402 = vst [vmem:[#allocation2 + $0x30] sm:$0xff] %v2394
      %2403 = vst [vmem:[#allocation2 + $0x38] sm:$0xff] %v2395
      %2404 = vst [vmem:[#allocation3] sm:$0xff] %v2372
      %2405 = vst [vmem:[#allocation3 + $0x8] sm:$0xff] %v2373
      %2406 = vst [vmem:[#allocation3 + $0x10] sm:$0xff] %v2374
      %2407 = vst [vmem:[#allocation3 + $0x18] sm:$0xff] %v2375
      %2408 = vst [vmem:[#allocation3 + $0x20] sm:$0xff] %v2376
      %2409 = vst [vmem:[#allocation3 + $0x28] sm:$0xff] %v2377
      %2410 = vst [vmem:[#allocation3 + $0x30] sm:$0xff] %v2378
      %2411 = vst [vmem:[#allocation3 + $0x38] sm:$0xff] %v2379
      %2412 = vst [vmem:[%s389] sm:$0xff] %v2388
      %2413 = vst [vmem:[%s389 + $0x8] sm:$0xff] %v2389
      %2414 = vst [vmem:[%s389 + $0x10] sm:$0xff] %v2390
      %2415 = vst [vmem:[%s389 + $0x18] sm:$0xff] %v2391
      %2416 = vst [vmem:[%s389 + $0x20] sm:$0xff] %v2392
      %2417 = vst [vmem:[%s389 + $0x28] sm:$0xff] %v2393
      %2418 = vst [vmem:[%s389 + $0x30] sm:$0xff] %v2394
      %2419 = vst [vmem:[%s389 + $0x38] sm:$0xff] %v2395
      %p2420 = scmp.eq.s32.totalorder %s25, 7
      // Predicated region
      $region53: #{conv_lstm_module_forward.2} parent=47 // pred_check
        %p2421 = pneg %p2420
      $region54: #{conv_lstm_module_forward.2} parent=47 // pred_check_branch
        %2423 = sbr.rel (%p2421) target = $region56
      $region55: #{conv_lstm_module_forward.2} parent=47 // pred_region
        %2424 = vst [vmem:[%s394] sm:$0xff] %v2372
        %2425 = vst [vmem:[%s394 + $0x8] sm:$0xff] %v2373
        %2426 = vst [vmem:[%s394 + $0x10] sm:$0xff] %v2374
        %2427 = vst [vmem:[%s394 + $0x18] sm:$0xff] %v2375
        %2428 = vst [vmem:[%s394 + $0x20] sm:$0xff] %v2376
        %2429 = vst [vmem:[%s394 + $0x28] sm:$0xff] %v2377
        %2430 = vst [vmem:[%s394 + $0x30] sm:$0xff] %v2378
        %2431 = vst [vmem:[%s394 + $0x38] sm:$0xff] %v2379
      $region56: #{conv_lstm_module_forward.2} parent=47 // pred_fallthru
        _
      %p2432 = scmp.lt.s32.totalorder %s24, 1
      %s2433 = scalar_select %p2432, %s24, 1
      %p2434 = scmp.lt.s32.totalorder %s25, 7
      %s2435 = scalar_select %p2434, %s25, 7
      %s2436 = smul.addr %s2435, 8
      %s2437 = smul.addr %s2433, 64
      %s2438 = sadd.s32 %s2436, %s2437
      %s2439 = smul.addr %s2438, 8
      %s2440 = scalar_lea.vmem %s7, %s2439
      %p2441 = scmp.lt.s32.totalorder %s24, 1
      %s2442 = scalar_select %p2441, %s24, 1
      %s2443 = smul.addr %s2442, 8
      %s2444 = smul.addr %s2443, 8
      %s2445 = scalar_lea.vmem %s8, %s2444
      // Predicated region
      $region57: #{conv_lstm_module_forward.2} parent=47 // pred_check
        %p2446 = pneg %p216
      $region58: #{conv_lstm_module_forward.2} parent=47 // pred_check_branch
        %2448 = sbr.rel (%p2446) target = $region60
      $region59: #{conv_lstm_module_forward.2} parent=47 // pred_region
        _
      $region60: #{conv_lstm_module_forward.2} parent=47 // pred_fallthru
        _
      // Predicated region
      $region61: #{conv_lstm_module_forward.2} parent=47 // pred_check
        %p2449 = pneg %p242
      $region62: #{conv_lstm_module_forward.2} parent=47 // pred_check_branch
        %2451 = sbr.rel (%p2449) target = $region64
      $region63: #{conv_lstm_module_forward.2} parent=47 // pred_region
        _
      $region64: #{conv_lstm_module_forward.2} parent=47 // pred_fallthru
        _
    $region48: #{conv_lstm_module_forward.2} parent=5 // pred_fallthru
      _
    %p2452 = scmp.le.s32.totalorder 2, %s15
    // Predicated region
    $region65: #{conv_lstm_module_forward.2} parent=5 // pred_check
      %p2453 = pneg %p2452
    $region66: #{conv_lstm_module_forward.2} parent=5 // pred_check_branch
      %2455 = sbr.rel (%p2453) target = $region68
    $region67: #{conv_lstm_module_forward.2} parent=5 // pred_region
      %s2456 = ssub.s32 %s15, 2
      // Predicated region
      $region69: #{conv_lstm_module_forward.2} parent=67 // pred_check
        %p2457 = pneg %p222
      $region70: #{conv_lstm_module_forward.2} parent=67 // pred_check_branch
        %2459 = sbr.rel (%p2457) target = $region72
      $region71: #{conv_lstm_module_forward.2} parent=67 // pred_region
        %p2460 = scmp.lt.s32.totalorder %s26, 1
        %s2461 = scalar_select %p2460, %s26, 1
        %p2462 = scmp.lt.s32.totalorder %s27, 7
        %s2463 = scalar_select %p2462, %s27, 7
        %s2464 = smul.addr %s2463, 8
        %s2465 = smul.addr %s2461, 64
        %s2466 = sadd.s32 %s2464, %s2465
        %s2467 = smul.addr %s2466, 8
        %s2468 = scalar_lea.vmem %s7, %s2467
      $region72: #{conv_lstm_module_forward.2} parent=67 // pred_fallthru
        _
      // Predicated region
      $region73: #{conv_lstm_module_forward.2} parent=67 // pred_check
        %p2469 = pneg %p248
      $region74: #{conv_lstm_module_forward.2} parent=67 // pred_check_branch
        %2471 = sbr.rel (%p2469) target = $region76
      $region75: #{conv_lstm_module_forward.2} parent=67 // pred_region
        %p2472 = scmp.lt.s32.totalorder %s26, 1
        %s2473 = scalar_select %p2472, %s26, 1
        %s2474 = smul.addr %s2473, 8
        %s2475 = smul.addr %s2474, 8
        %s2476 = scalar_lea.vmem %s8, %s2475
      $region76: #{conv_lstm_module_forward.2} parent=67 // pred_fallthru
        _
    $region68: #{conv_lstm_module_forward.2} parent=5 // pred_fallthru
      _
  $region6: #{conv_lstm_module_forward.2} parent=0 // loop_footer
    %s19 = sadd.s32 1, %s15
  $region7: #{conv_lstm_module_forward.2} parent=0 // loop_footer_branch
    %14 = sbr.rel target = $region3
  $region8: #{conv_lstm_module_forward.2} parent=0 // loop_exit
    _

// kernel: conv_lstm_module_forward.3
$region0: #{conv_lstm_module_forward.3}
  #allocation0 [shape = 'u32[]', space=smem, size = 0x4, offset = 0x4, fixed_abs, tag = 'smem constant byte address 0x4 - core index']
  #allocation1 [shape = 'u32[72,128]{1,0:T(1,128)}', space=vmem, size = 0x9000, scoped, tag = 'internal scratch']
  #allocation2 [shape = 'f32[32,256]{1,0:T(8,128)}', space=vmem, size = 0x8000, scoped, tag = 'scratch operand']
  #allocation3 [shape = 'f32[32,256]{1,0:T(8,128)}', space=vmem, size = 0x8000, scoped, tag = 'scratch operand']
  #allocation4 [shape = 'f32[288,256]{1,0:T(8,128)}', space=vmem, size = 0x48000, scoped, tag = 'scratch operand']
  #allocation5 [shape = 'f32[128,256]{1,0:T(8,128)}', space=vmem, size = 0x20000, scoped, tag = 'scratch operand']
  %s0 = inlined_call_operand.vmem [shape: f32[2,8,288,256], index: 0, kind: input, shape index: {}]
  %s1 = inlined_call_operand.vmem [shape: f32[128,288], index: 1, kind: input, shape index: {}]
  %s2 = inlined_call_operand.vmem [shape: f32[128,288], index: 2, kind: input, shape index: {}]
  %s3 = inlined_call_operand.vmem [shape: f32[128,1], index: 3, kind: input, shape index: {}]
  %s4 = inlined_call_operand.vmem [shape: f32[9,1,256], index: 4, kind: input, shape index: {}]
  %s5 = inlined_call_operand.vmem [shape: f32[2,32,256], index: 5, kind: input, shape index: {}, may-alias: {5,6}]
  %s6 = inlined_call_operand.vmem [shape: f32[2,32,256], index: 6, kind: input, shape index: {}, may-alias: {5,6}]
  %s7 = inlined_call_operand.vmem [shape: f32[2,8,32,256], index: 7, kind: output, shape index: {0}]
  %s8 = inlined_call_operand.vmem [shape: f32[2,32,256], index: 8, kind: output, shape index: {1}]
  %9 = xla_tuple %s7, %s8
  %s10 = sld [smem:[#allocation0]]
  $region77: #{conv_lstm_module_forward.3} parent=0
    _
  %s12 = ssub.s32 1, %s10
  %s13 = scalar_select 0, %s12, %s10
  loop: start=0, step=1, limit=18
  $region2: #{conv_lstm_module_forward.3} parent=0 // loop_pre_header
    _
  $region3: #{conv_lstm_module_forward.3} parent=0 // loop_header
    %s15 = sphi 0, %s19
    %p16 = scmp.ge.s32.totalorder %s15, 18
    %s22 = sphi 0, %s34
    %s23 = sphi 0, %s30
    %s24 = sphi 0, %s22
    %s25 = sphi 0, %s23
    %s26 = sphi 0, %s24
    %s27 = sphi 0, %s25
    %s39 = sphi 0, %s41
    %s42 = sphi 0, %s39
    %s43 = sphi 0, %s42
    %s59 = sphi 0, %s43
    %s63 = sphi 0, %s63
    %s65 = sphi 0, %s63
    %s66 = sphi 0, %s65
    %s80 = sphi 0, %s66
    %s84 = sphi 0, %s84
    %s86 = sphi 0, %s84
    %s87 = sphi 0, %s86
    %s101 = sphi 0, %s87
    %s105 = sphi 0, %s105
    %s107 = sphi 0, %s105
    %s108 = sphi 0, %s107
    %s122 = sphi 0, %s108
    %s126 = sphi 0, %s126
    %s128 = sphi 0, %s126
    %s129 = sphi 0, %s128
    %s143 = sphi 0, %s129
    %s149 = sphi 0, %s151
    %s152 = sphi 0, %s149
    %s153 = sphi 0, %s152
    %s169 = sphi 0, %s153
    %s175 = sphi 0, %s177
    %s178 = sphi 0, %s175
    %s179 = sphi 0, %s178
    %s195 = sphi 0, %s179
    %s203 = sphi 0, %s205
    %s206 = sphi 0, %s203
    %s207 = sphi 0, %s206
    %s223 = sphi 0, %s207
    %s229 = sphi 0, %s231
    %s232 = sphi 0, %s229
    %s233 = sphi 0, %s232
    %s249 = sphi 0, %s233
  $region4: #{conv_lstm_module_forward.3} parent=0 // loop_header_branch
    %18 = sbr.rel (%p16) target = $region8
  $region5: #{conv_lstm_module_forward.3} parent=0 // loop_body
    %s20 = ssub.s32 %s15, 1
    %s21 = ssub.s32 %s15, 2
    %s28 = sadd.s32 1, %s23
    %p29 = scmp.ge.s32.totalorder %s28, 8
    %s30 = scalar_select %p29, 0, %s28
    %s31 = sadd.s32 1, %s22
    %s32 = scalar_select %p29, %s31, %s22
    %p33 = scmp.ge.s32.totalorder %s32, 2
    %s34 = scalar_select %p33, 0, %s32
    %s35 = ssub.s32 %s22, %s34
    %s36 = ssub.s32 %s23, %s30
    %s37 = sor.u32 %s35, %s36
    %p38 = scmp.eq.s32.totalorder %s37, 0
    %s40 = sadd.s32 %s39, 1
    %s41 = scalar_select %p38, %s39, %s40
    %p44 = pneg %p38
    %p45 = scmp.eq.s32.totalorder %s15, 15
    %p46 = por %p44, %p45
    %p47 = scmp.ne.s32.totalorder %s39, %s42
    %p48 = scmp.eq.s32.totalorder %s15, 0
    %p49 = por %p47, %p48
    %p50 = scmp.ne.s32.totalorder %s39, %s42
    %p51 = scmp.eq.s32.totalorder %s20, 15
    %p52 = por %p50, %p51
    %p53 = scmp.ne.s32.totalorder %s42, %s43
    %p54 = scmp.eq.s32.totalorder %s20, 0
    %p55 = por %p53, %p54
    %p56 = scmp.ne.s32.totalorder %s42, %s43
    %p57 = scmp.eq.s32.totalorder %s21, 15
    %p58 = por %p56, %p57
    %p60 = scmp.ne.s32.totalorder %s43, %s59
    %p61 = scmp.eq.s32.totalorder %s21, 0
    %p62 = por %p60, %p61
    %s64 = sadd.s32 %s63, 1
    %p67 = scmp.eq.s32.totalorder %s15, 15
    %p68 = scmp.ne.s32.totalorder %s63, %s65
    %p69 = scmp.eq.s32.totalorder %s15, 0
    %p70 = por %p68, %p69
    %p71 = scmp.ne.s32.totalorder %s63, %s65
    %p72 = scmp.eq.s32.totalorder %s20, 15
    %p73 = por %p71, %p72
    %p74 = scmp.ne.s32.totalorder %s65, %s66
    %p75 = scmp.eq.s32.totalorder %s20, 0
    %p76 = por %p74, %p75
    %p77 = scmp.ne.s32.totalorder %s65, %s66
    %p78 = scmp.eq.s32.totalorder %s21, 15
    %p79 = por %p77, %p78
    %p81 = scmp.ne.s32.totalorder %s66, %s80
    %p82 = scmp.eq.s32.totalorder %s21, 0
    %p83 = por %p81, %p82
    %s85 = sadd.s32 %s84, 1
    %p88 = scmp.eq.s32.totalorder %s15, 15
    %p89 = scmp.ne.s32.totalorder %s84, %s86
    %p90 = scmp.eq.s32.totalorder %s15, 0
    %p91 = por %p89, %p90
    %p92 = scmp.ne.s32.totalorder %s84, %s86
    %p93 = scmp.eq.s32.totalorder %s20, 15
    %p94 = por %p92, %p93
    %p95 = scmp.ne.s32.totalorder %s86, %s87
    %p96 = scmp.eq.s32.totalorder %s20, 0
    %p97 = por %p95, %p96
    %p98 = scmp.ne.s32.totalorder %s86, %s87
    %p99 = scmp.eq.s32.totalorder %s21, 15
    %p100 = por %p98, %p99
    %p102 = scmp.ne.s32.totalorder %s87, %s101
    %p103 = scmp.eq.s32.totalorder %s21, 0
    %p104 = por %p102, %p103
    %s106 = sadd.s32 %s105, 1
    %p109 = scmp.eq.s32.totalorder %s15, 15
    %p110 = scmp.ne.s32.totalorder %s105, %s107
    %p111 = scmp.eq.s32.totalorder %s15, 0
    %p112 = por %p110, %p111
    %p113 = scmp.ne.s32.totalorder %s105, %s107
    %p114 = scmp.eq.s32.totalorder %s20, 15
    %p115 = por %p113, %p114
    %p116 = scmp.ne.s32.totalorder %s107, %s108
    %p117 = scmp.eq.s32.totalorder %s20, 0
    %p118 = por %p116, %p117
    %p119 = scmp.ne.s32.totalorder %s107, %s108
    %p120 = scmp.eq.s32.totalorder %s21, 15
    %p121 = por %p119, %p120
    %p123 = scmp.ne.s32.totalorder %s108, %s122
    %p124 = scmp.eq.s32.totalorder %s21, 0
    %p125 = por %p123, %p124
    %s127 = sadd.s32 %s126, 1
    %p130 = scmp.eq.s32.totalorder %s15, 15
    %p131 = scmp.ne.s32.totalorder %s126, %s128
    %p132 = scmp.eq.s32.totalorder %s15, 0
    %p133 = por %p131, %p132
    %p134 = scmp.ne.s32.totalorder %s126, %s128
    %p135 = scmp.eq.s32.totalorder %s20, 15
    %p136 = por %p134, %p135
    %p137 = scmp.ne.s32.totalorder %s128, %s129
    %p138 = scmp.eq.s32.totalorder %s20, 0
    %p139 = por %p137, %p138
    %p140 = scmp.ne.s32.totalorder %s128, %s129
    %p141 = scmp.eq.s32.totalorder %s21, 15
    %p142 = por %p140, %p141
    %p144 = scmp.ne.s32.totalorder %s129, %s143
    %p145 = scmp.eq.s32.totalorder %s21, 0
    %p146 = por %p144, %p145
    %s147 = ssub.s32 %s22, %s34
    %p148 = scmp.eq.s32.totalorder %s147, 0
    %s150 = sadd.s32 %s149, 1
    %s151 = scalar_select %p148, %s149, %s150
    %p154 = pneg %p148
    %p155 = scmp.eq.s32.totalorder %s15, 15
    %p156 = por %p154, %p155
    %p157 = scmp.ne.s32.totalorder %s149, %s152
    %p158 = scmp.eq.s32.totalorder %s15, 0
    %p159 = por %p157, %p158
    %p160 = scmp.ne.s32.totalorder %s149, %s152
    %p161 = scmp.eq.s32.totalorder %s20, 15
    %p162 = por %p160, %p161
    %p163 = scmp.ne.s32.totalorder %s152, %s153
    %p164 = scmp.eq.s32.totalorder %s20, 0
    %p165 = por %p163, %p164
    %p166 = scmp.ne.s32.totalorder %s152, %s153
    %p167 = scmp.eq.s32.totalorder %s21, 15
    %p168 = por %p166, %p167
    %p170 = scmp.ne.s32.totalorder %s153, %s169
    %p171 = scmp.eq.s32.totalorder %s21, 0
    %p172 = por %p170, %p171
    %s173 = ssub.s32 %s22, %s34
    %p174 = scmp.eq.s32.totalorder %s173, 0
    %s176 = sadd.s32 %s175, 1
    %s177 = scalar_select %p174, %s175, %s176
    %p180 = pneg %p174
    %p181 = scmp.eq.s32.totalorder %s15, 15
    %p182 = por %p180, %p181
    %p183 = scmp.ne.s32.totalorder %s175, %s178
    %p184 = scmp.eq.s32.totalorder %s15, 0
    %p185 = por %p183, %p184
    %p186 = scmp.ne.s32.totalorder %s175, %s178
    %p187 = scmp.eq.s32.totalorder %s20, 15
    %p188 = por %p186, %p187
    %p189 = scmp.ne.s32.totalorder %s178, %s179
    %p190 = scmp.eq.s32.totalorder %s20, 0
    %p191 = por %p189, %p190
    %p192 = scmp.ne.s32.totalorder %s178, %s179
    %p193 = scmp.eq.s32.totalorder %s21, 15
    %p194 = por %p192, %p193
    %p196 = scmp.ne.s32.totalorder %s179, %s195
    %p197 = scmp.eq.s32.totalorder %s21, 0
    %p198 = por %p196, %p197
    %s199 = ssub.s32 %s22, %s34
    %s200 = ssub.s32 %s23, %s30
    %s201 = sor.u32 %s199, %s200
    %p202 = scmp.eq.s32.totalorder %s201, 0
    %s204 = sadd.s32 %s203, 1
    %s205 = scalar_select %p202, %s203, %s204
    %p208 = pneg %p202
    %p209 = scmp.eq.s32.totalorder %s15, 15
    %p210 = por %p208, %p209
    %p211 = scmp.ne.s32.totalorder %s203, %s206
    %p212 = scmp.eq.s32.totalorder %s15, 0
    %p213 = por %p211, %p212
    %p214 = scmp.ne.s32.totalorder %s203, %s206
    %p215 = scmp.eq.s32.totalorder %s20, 15
    %p216 = por %p214, %p215
    %p217 = scmp.ne.s32.totalorder %s206, %s207
    %p218 = scmp.eq.s32.totalorder %s20, 0
    %p219 = por %p217, %p218
    %p220 = scmp.ne.s32.totalorder %s206, %s207
    %p221 = scmp.eq.s32.totalorder %s21, 15
    %p222 = por %p220, %p221
    %p224 = scmp.ne.s32.totalorder %s207, %s223
    %p225 = scmp.eq.s32.totalorder %s21, 0
    %p226 = por %p224, %p225
    %s227 = ssub.s32 %s22, %s34
    %p228 = scmp.eq.s32.totalorder %s227, 0
    %s230 = sadd.s32 %s229, 1
    %s231 = scalar_select %p228, %s229, %s230
    %p234 = pneg %p228
    %p235 = scmp.eq.s32.totalorder %s15, 15
    %p236 = por %p234, %p235
    %p237 = scmp.ne.s32.totalorder %s229, %s232
    %p238 = scmp.eq.s32.totalorder %s15, 0
    %p239 = por %p237, %p238
    %p240 = scmp.ne.s32.totalorder %s229, %s232
    %p241 = scmp.eq.s32.totalorder %s20, 15
    %p242 = por %p240, %p241
    %p243 = scmp.ne.s32.totalorder %s232, %s233
    %p244 = scmp.eq.s32.totalorder %s20, 0
    %p245 = por %p243, %p244
    %p246 = scmp.ne.s32.totalorder %s232, %s233
    %p247 = scmp.eq.s32.totalorder %s21, 15
    %p248 = por %p246, %p247
    %p250 = scmp.ne.s32.totalorder %s233, %s249
    %p251 = scmp.eq.s32.totalorder %s21, 0
    %p252 = por %p250, %p251
    %p253 = scmp.le.s32.totalorder 1, %s15
    %p254 = scmp.lt.s32.totalorder %s15, 17
    %p255 = pnand %p253, %p254
    %p256 = pneg %p255
    // Predicated region
    $region9: #{conv_lstm_module_forward.3} parent=5 // pred_check
      _
    $region10: #{conv_lstm_module_forward.3} parent=5 // pred_check_branch
      %258 = sbr.rel (%p255) target = $region12
    $region11: #{conv_lstm_module_forward.3} parent=5 // pred_region
      %s259 = ssub.s32 %s15, 1
      // Predicated region
      $region13: #{conv_lstm_module_forward.3} parent=11 // pred_check
        %p260 = pneg %p76
      $region14: #{conv_lstm_module_forward.3} parent=11 // pred_check_branch
        %262 = sbr.rel (%p260) target = $region16
      $region15: #{conv_lstm_module_forward.3} parent=11 // pred_region
        _
      $region16: #{conv_lstm_module_forward.3} parent=11 // pred_fallthru
        _
      // Predicated region
      $region17: #{conv_lstm_module_forward.3} parent=11 // pred_check
        %p263 = pneg %p97
      $region18: #{conv_lstm_module_forward.3} parent=11 // pred_check_branch
        %265 = sbr.rel (%p263) target = $region20
      $region19: #{conv_lstm_module_forward.3} parent=11 // pred_region
        _
      $region20: #{conv_lstm_module_forward.3} parent=11 // pred_fallthru
        _
      // Predicated region
      $region21: #{conv_lstm_module_forward.3} parent=11 // pred_check
        %p266 = pneg %p118
      $region22: #{conv_lstm_module_forward.3} parent=11 // pred_check_branch
        %268 = sbr.rel (%p266) target = $region24
      $region23: #{conv_lstm_module_forward.3} parent=11 // pred_region
        _
      $region24: #{conv_lstm_module_forward.3} parent=11 // pred_fallthru
        _
      // Predicated region
      $region25: #{conv_lstm_module_forward.3} parent=11 // pred_check
        %p269 = pneg %p139
      $region26: #{conv_lstm_module_forward.3} parent=11 // pred_check_branch
        %271 = sbr.rel (%p269) target = $region28
      $region27: #{conv_lstm_module_forward.3} parent=11 // pred_region
        _
      $region28: #{conv_lstm_module_forward.3} parent=11 // pred_fallthru
        _
    $region12: #{conv_lstm_module_forward.3} parent=5 // pred_fallthru
      _
    %p272 = scmp.lt.s32.totalorder %s15, 16
    // Predicated region
    $region29: #{conv_lstm_module_forward.3} parent=5 // pred_check
      %p273 = pneg %p272
    $region30: #{conv_lstm_module_forward.3} parent=5 // pred_check_branch
      %275 = sbr.rel (%p273) target = $region32
    $region31: #{conv_lstm_module_forward.3} parent=5 // pred_region
      // Predicated region
      $region33: #{conv_lstm_module_forward.3} parent=31 // pred_check
        %p276 = pneg %p49
      $region34: #{conv_lstm_module_forward.3} parent=31 // pred_check_branch
        %278 = sbr.rel (%p276) target = $region36
      $region35: #{conv_lstm_module_forward.3} parent=31 // pred_region
        %p279 = scmp.lt.s32.totalorder %s22, 1
        %s280 = scalar_select %p279, %s22, 1
        %p281 = scmp.lt.s32.totalorder %s23, 7
        %s282 = scalar_select %p281, %s23, 7
        %s283 = smul.addr %s282, 72
        %s284 = smul.addr %s280, 576
        %s285 = sadd.s32 %s283, %s284
        %s286 = smul.addr %s285, 8
        %s287 = scalar_lea.vmem %s0, %s286
      $region36: #{conv_lstm_module_forward.3} parent=31 // pred_fallthru
        _
      // Predicated region
      $region37: #{conv_lstm_module_forward.3} parent=31 // pred_check
        %p288 = pneg %p159
      $region38: #{conv_lstm_module_forward.3} parent=31 // pred_check_branch
        %290 = sbr.rel (%p288) target = $region40
      $region39: #{conv_lstm_module_forward.3} parent=31 // pred_region
        %p291 = scmp.lt.s32.totalorder %s22, 1
        %s292 = scalar_select %p291, %s22, 1
        %s293 = smul.addr %s292, 8
        %s294 = smul.addr %s293, 8
        %s295 = scalar_lea.vmem %s5, %s294
      $region40: #{conv_lstm_module_forward.3} parent=31 // pred_fallthru
        _
      // Predicated region
      $region41: #{conv_lstm_module_forward.3} parent=31 // pred_check
        %p296 = pneg %p185
      $region42: #{conv_lstm_module_forward.3} parent=31 // pred_check_branch
        %298 = sbr.rel (%p296) target = $region44
      $region43: #{conv_lstm_module_forward.3} parent=31 // pred_region
        %p299 = scmp.lt.s32.totalorder %s22, 1
        %s300 = scalar_select %p299, %s22, 1
        %s301 = smul.addr %s300, 8
        %s302 = smul.addr %s301, 8
        %s303 = scalar_lea.vmem %s6, %s302
      $region44: #{conv_lstm_module_forward.3} parent=31 // pred_fallthru
        _
    $region32: #{conv_lstm_module_forward.3} parent=5 // pred_fallthru
      _
    %p304 = scmp.le.s32.totalorder 1, %s15
    %p305 = scmp.lt.s32.totalorder %s15, 17
    %p306 = pnand %p304, %p305
    %p307 = pneg %p306
    // Predicated region
    $region45: #{conv_lstm_module_forward.3} parent=5 // pred_check
      _
    $region46: #{conv_lstm_module_forward.3} parent=5 // pred_check_branch
      %309 = sbr.rel (%p306) target = $region48
    $region47: #{conv_lstm_module_forward.3} parent=5 // pred_region
      %s310 = ssub.s32 %s15, 1
      %p311 = scmp.lt.s32.totalorder %s24, 1
      %s312 = scalar_select %p311, %s24, 1
      %p313 = scmp.lt.s32.totalorder %s25, 7
      %s314 = scalar_select %p313, %s25, 7
      %s315 = smul.addr %s314, 72
      %s316 = smul.addr %s312, 576
      %s317 = sadd.s32 %s315, %s316
      %s318 = smul.addr %s317, 8
      %s319 = scalar_lea.vmem %s0, %s318
      %p320 = pneg %p55
      %p321 = pneg %p52
      %p322 = pneg %p76
      %p323 = pneg %p73
      %p324 = pneg %p97
      %p325 = pneg %p94
      %p326 = pneg %p118
      %p327 = pneg %p115
      %p328 = pneg %p139
      %p329 = pneg %p136
      %p330 = scmp.lt.s32.totalorder %s24, 1
      %s331 = scalar_select %p330, %s24, 1
      %s332 = smul.addr %s331, 8
      %s333 = smul.addr %s332, 8
      %s334 = scalar_lea.vmem %s5, %s333
      %p335 = pneg %p165
      %p336 = pneg %p162
      %p337 = scmp.lt.s32.totalorder %s24, 1
      %s338 = scalar_select %p337, %s24, 1
      %s339 = smul.addr %s338, 8
      %s340 = smul.addr %s339, 8
      %s341 = scalar_lea.vmem %s6, %s340
      %p342 = pneg %p191
      %p343 = pneg %p188
      %p344 = pneg %p219
      %p345 = pneg %p216
      %p346 = scmp.lt.s32.totalorder %s24, 1
      %s347 = scalar_select %p346, %s24, 1
      %p348 = scmp.lt.s32.totalorder %s25, 7
      %s349 = scalar_select %p348, %s25, 7
      %s350 = smul.addr %s349, 8
      %s351 = smul.addr %s347, 64
      %s352 = sadd.s32 %s350, %s351
      %s353 = smul.addr %s352, 8
      %s354 = scalar_lea.vmem %s7, %s353
      %p355 = pneg %p245
      %p356 = pneg %p242
      %p357 = scmp.lt.s32.totalorder %s24, 1
      %s358 = scalar_select %p357, %s24, 1
      %s359 = smul.addr %s358, 8
      %s360 = smul.addr %s359, 8
      %s361 = scalar_lea.vmem %s8, %s360
      %p362 = scmp.lt.s32.totalorder %s24, 1
      %s363 = scalar_select %p362, %s24, 1
      %p364 = scmp.lt.s32.totalorder %s25, 7
      %s365 = scalar_select %p364, %s25, 7
      %s366 = smul.addr %s365, 72
      %s367 = smul.addr %s363, 576
      %s368 = sadd.s32 %s366, %s367
      %s369 = smul.addr %s368, 8
      %s370 = scalar_lea.vmem %s0, %s369
      %p371 = scmp.lt.s32.totalorder %s24, 1
      %s372 = scalar_select %p371, %s24, 1
      %s373 = smul.addr %s372, 8
      %s374 = smul.addr %s373, 8
      %s375 = scalar_lea.vmem %s5, %s374
      %p376 = scmp.lt.s32.totalorder %s24, 1
      %s377 = scalar_select %p376, %s24, 1
      %s378 = smul.addr %s377, 8
      %s379 = smul.addr %s378, 8
      %s380 = scalar_lea.vmem %s6, %s379
      %p381 = scmp.lt.s32.totalorder %s24, 1
      %s382 = scalar_select %p381, %s24, 1
      %p383 = scmp.lt.s32.totalorder %s25, 7
      %s384 = scalar_select %p383, %s25, 7
      %s385 = smul.addr %s384, 8
      %s386 = smul.addr %s382, 64
      %s387 = sadd.s32 %s385, %s386
      %s388 = smul.addr %s387, 8
      %s389 = scalar_lea.vmem %s7, %s388
      %p390 = scmp.lt.s32.totalorder %s24, 1
      %s391 = scalar_select %p390, %s24, 1
      %s392 = smul.addr %s391, 8
      %s393 = smul.addr %s392, 8
      %s394 = scalar_lea.vmem %s8, %s393
      %p395 = scmp.eq.s32.totalorder %s25, 0
      // Predicated region
      $region49: #{conv_lstm_module_forward.3} parent=47 // pred_check
        %p396 = pneg %p395
      $region50: #{conv_lstm_module_forward.3} parent=47 // pred_check_branch
        %398 = sbr.rel (%p396) target = $region52
      $region51: #{conv_lstm_module_forward.3} parent=47 // pred_region
        %v399 = vld [vmem:[%s375] sm:$0xff]
        %v400 = vld [vmem:[%s375 + $0x8] sm:$0xff]
        %v401 = vld [vmem:[%s375 + $0x10] sm:$0xff]
        %v402 = vld [vmem:[%s375 + $0x18] sm:$0xff]
        %v403 = vld [vmem:[%s375 + $0x20] sm:$0xff]
        %v404 = vld [vmem:[%s375 + $0x28] sm:$0xff]
        %v405 = vld [vmem:[%s375 + $0x30] sm:$0xff]
        %v406 = vld [vmem:[%s375 + $0x38] sm:$0xff]
        %407 = vst [vmem:[#allocation2] sm:$0xff] %v399
        %408 = vst [vmem:[#allocation2 + $0x8] sm:$0xff] %v400
        %409 = vst [vmem:[#allocation2 + $0x10] sm:$0xff] %v401
        %410 = vst [vmem:[#allocation2 + $0x18] sm:$0xff] %v402
        %411 = vst [vmem:[#allocation2 + $0x20] sm:$0xff] %v403
        %412 = vst [vmem:[#allocation2 + $0x28] sm:$0xff] %v404
        %413 = vst [vmem:[#allocation2 + $0x30] sm:$0xff] %v405
        %414 = vst [vmem:[#allocation2 + $0x38] sm:$0xff] %v406
        %v415 = vld [vmem:[%s380] sm:$0xff]
        %v416 = vld [vmem:[%s380 + $0x8] sm:$0xff]
        %v417 = vld [vmem:[%s380 + $0x10] sm:$0xff]
        %v418 = vld [vmem:[%s380 + $0x18] sm:$0xff]
        %v419 = vld [vmem:[%s380 + $0x20] sm:$0xff]
        %v420 = vld [vmem:[%s380 + $0x28] sm:$0xff]
        %v421 = vld [vmem:[%s380 + $0x30] sm:$0xff]
        %v422 = vld [vmem:[%s380 + $0x38] sm:$0xff]
        %423 = vst [vmem:[#allocation3] sm:$0xff] %v415
        %424 = vst [vmem:[#allocation3 + $0x8] sm:$0xff] %v416
        %425 = vst [vmem:[#allocation3 + $0x10] sm:$0xff] %v417
        %426 = vst [vmem:[#allocation3 + $0x18] sm:$0xff] %v418
        %427 = vst [vmem:[#allocation3 + $0x20] sm:$0xff] %v419
        %428 = vst [vmem:[#allocation3 + $0x28] sm:$0xff] %v420
        %429 = vst [vmem:[#allocation3 + $0x30] sm:$0xff] %v421
        %430 = vst [vmem:[#allocation3 + $0x38] sm:$0xff] %v422
      $region52: #{conv_lstm_module_forward.3} parent=47 // pred_fallthru
        _
      %v431 = vld [vmem:[%s1] sm:$0xff]
      %v432 = vld [vmem:[%s1 + $0x8] sm:$0xff]
      %v433 = vld [vmem:[%s1 + $0x10] sm:$0xff]
      %v434 = vld [vmem:[%s1 + $0x18] sm:$0xff]
      %v435 = vld [vmem:[%s1 + $0x20] sm:$0xff]
      %v436 = vld [vmem:[%s1 + $0x28] sm:$0xff]
      %v437 = vld [vmem:[%s1 + $0x30] sm:$0xff]
      %v438 = vld [vmem:[%s1 + $0x38] sm:$0xff]
      %v439 = vld [vmem:[%s1 + $0x40] sm:$0xff]
      %v440 = vld [vmem:[%s1 + $0x48] sm:$0xff]
      %v441 = vld [vmem:[%s1 + $0x50] sm:$0xff]
      %v442 = vld [vmem:[%s1 + $0x58] sm:$0xff]
      %v443 = vld [vmem:[%s1 + $0x60] sm:$0xff]
      %v444 = vld [vmem:[%s1 + $0x68] sm:$0xff]
      %v445 = vld [vmem:[%s1 + $0x70] sm:$0xff]
      %v446 = vld [vmem:[%s1 + $0x78] sm:$0xff]
      %v447 = vld [vmem:[%s1 + $0x80] sm:$0xff]
      %v448 = vld [vmem:[%s1 + $0x88] sm:$0xff]
      %v449 = vld [vmem:[%s1 + $0x90] sm:$0xff]
      %v450 = vld [vmem:[%s1 + $0x98] sm:$0xff]
      %v451 = vld [vmem:[%s1 + $0xa0] sm:$0xff]
      %v452 = vld [vmem:[%s1 + $0xa8] sm:$0xff]
      %v453 = vld [vmem:[%s1 + $0xb0] sm:$0xff]
      %v454 = vld [vmem:[%s1 + $0xb8] sm:$0xff]
      %v455 = vld [vmem:[%s1 + $0xc0] sm:$0xff]
      %v456 = vld [vmem:[%s1 + $0xc8] sm:$0xff]
      %v457 = vld [vmem:[%s1 + $0xd0] sm:$0xff]
      %v458 = vld [vmem:[%s1 + $0xd8] sm:$0xff]
      %v459 = vld [vmem:[%s1 + $0xe0] sm:$0xff]
      %v460 = vld [vmem:[%s1 + $0xe8] sm:$0xff]
      %v461 = vld [vmem:[%s1 + $0xf0] sm:$0xff]
      %v462 = vld [vmem:[%s1 + $0xf8] sm:$0xff]
      %v463 = vld [vmem:[%s1 + $0x100] sm:$0xff]
      %v464 = vld [vmem:[%s1 + $0x108] sm:$0xff]
      %v465 = vld [vmem:[%s1 + $0x110] sm:$0xff]
      %v466 = vld [vmem:[%s1 + $0x118] sm:$0xff]
      %v467 = vld [vmem:[%s1 + $0x120] sm:$0xff]
      %v468 = vld [vmem:[%s1 + $0x128] sm:$0xff]
      %v469 = vld [vmem:[%s1 + $0x130] sm:$0xff]
      %v470 = vld [vmem:[%s1 + $0x138] sm:$0xff]
      %v471 = vld [vmem:[%s1 + $0x140] sm:$0xff]
      %v472 = vld [vmem:[%s1 + $0x148] sm:$0xff]
      %v473 = vld [vmem:[%s1 + $0x150] sm:$0xff]
      %v474 = vld [vmem:[%s1 + $0x158] sm:$0xff]
      %v475 = vld [vmem:[%s1 + $0x160] sm:$0xff]
      %v476 = vld [vmem:[%s1 + $0x168] sm:$0xff]
      %v477 = vld [vmem:[%s1 + $0x170] sm:$0xff]
      %v478 = vld [vmem:[%s1 + $0x178] sm:$0xff]
      %v479 = vld [vmem:[%s370] sm:$0xff]
      %v480 = vld [vmem:[%s370 + $0x8] sm:$0xff]
      %v481 = vld [vmem:[%s370 + $0x10] sm:$0xff]
      %v482 = vld [vmem:[%s370 + $0x18] sm:$0xff]
      %v483 = vld [vmem:[%s370 + $0x20] sm:$0xff]
      %v484 = vld [vmem:[%s370 + $0x28] sm:$0xff]
      %v485 = vld [vmem:[%s370 + $0x30] sm:$0xff]
      %v486 = vld [vmem:[%s370 + $0x38] sm:$0xff]
      %v487 = vld [vmem:[%s370 + $0x40] sm:$0xff]
      %v488 = vld [vmem:[%s370 + $0x48] sm:$0xff]
      %v489 = vld [vmem:[%s370 + $0x50] sm:$0xff]
      %v490 = vld [vmem:[%s370 + $0x58] sm:$0xff]
      %v491 = vld [vmem:[%s370 + $0x60] sm:$0xff]
      %v492 = vld [vmem:[%s370 + $0x68] sm:$0xff]
      %v493 = vld [vmem:[%s370 + $0x70] sm:$0xff]
      %v494 = vld [vmem:[%s370 + $0x78] sm:$0xff]
      %v495 = vld [vmem:[%s370 + $0x80] sm:$0xff]
      %v496 = vld [vmem:[%s370 + $0x88] sm:$0xff]
      %v497 = vld [vmem:[%s370 + $0x90] sm:$0xff]
      %v498 = vld [vmem:[%s370 + $0x98] sm:$0xff]
      %v499 = vld [vmem:[%s370 + $0xa0] sm:$0xff]
      %v500 = vld [vmem:[%s370 + $0xa8] sm:$0xff]
      %v501 = vld [vmem:[%s370 + $0xb0] sm:$0xff]
      %v502 = vld [vmem:[%s370 + $0xb8] sm:$0xff]
      %v503 = vld [vmem:[%s370 + $0xc0] sm:$0xff]
      %v504 = vld [vmem:[%s370 + $0xc8] sm:$0xff]
      %v505 = vld [vmem:[%s370 + $0xd0] sm:$0xff]
      %v506 = vld [vmem:[%s370 + $0xd8] sm:$0xff]
      %v507 = vld [vmem:[%s370 + $0xe0] sm:$0xff]
      %v508 = vld [vmem:[%s370 + $0xe8] sm:$0xff]
      %v509 = vld [vmem:[%s370 + $0xf0] sm:$0xff]
      %v510 = vld [vmem:[%s370 + $0xf8] sm:$0xff]
      %v511 = vld [vmem:[%s370 + $0x100] sm:$0xff]
      %v512 = vld [vmem:[%s370 + $0x108] sm:$0xff]
      %v513 = vld [vmem:[%s370 + $0x110] sm:$0xff]
      %v514 = vld [vmem:[%s370 + $0x118] sm:$0xff]
      %v515 = vld [vmem:[%s370 + $0x120] sm:$0xff]
      %v516 = vld [vmem:[%s370 + $0x128] sm:$0xff]
      %v517 = vld [vmem:[%s370 + $0x130] sm:$0xff]
      %v518 = vld [vmem:[%s370 + $0x138] sm:$0xff]
      %v519 = vld [vmem:[%s370 + $0x140] sm:$0xff]
      %v520 = vld [vmem:[%s370 + $0x148] sm:$0xff]
      %v521 = vld [vmem:[%s370 + $0x150] sm:$0xff]
      %v522 = vld [vmem:[%s370 + $0x158] sm:$0xff]
      %v523 = vld [vmem:[%s370 + $0x160] sm:$0xff]
      %v524 = vld [vmem:[%s370 + $0x168] sm:$0xff]
      %v525 = vld [vmem:[%s370 + $0x170] sm:$0xff]
      %v526 = vld [vmem:[%s370 + $0x178] sm:$0xff]
      %v527 = vld [vmem:[%s370 + $0x180] sm:$0xff]
      %v528 = vld [vmem:[%s370 + $0x188] sm:$0xff]
      %v529 = vld [vmem:[%s370 + $0x190] sm:$0xff]
      %v530 = vld [vmem:[%s370 + $0x198] sm:$0xff]
      %v531 = vld [vmem:[%s370 + $0x1a0] sm:$0xff]
      %v532 = vld [vmem:[%s370 + $0x1a8] sm:$0xff]
      %v533 = vld [vmem:[%s370 + $0x1b0] sm:$0xff]
      %v534 = vld [vmem:[%s370 + $0x1b8] sm:$0xff]
      %v535 = vld [vmem:[%s370 + $0x1c0] sm:$0xff]
      %v536 = vld [vmem:[%s370 + $0x1c8] sm:$0xff]
      %v537 = vld [vmem:[%s370 + $0x1d0] sm:$0xff]
      %v538 = vld [vmem:[%s370 + $0x1d8] sm:$0xff]
      %v539 = vld [vmem:[%s370 + $0x1e0] sm:$0xff]
      %v540 = vld [vmem:[%s370 + $0x1e8] sm:$0xff]
      %v541 = vld [vmem:[%s370 + $0x1f0] sm:$0xff]
      %v542 = vld [vmem:[%s370 + $0x1f8] sm:$0xff]
      %v543 = vld [vmem:[%s370 + $0x200] sm:$0xff]
      %v544 = vld [vmem:[%s370 + $0x208] sm:$0xff]
      %v545 = vld [vmem:[%s370 + $0x210] sm:$0xff]
      %v546 = vld [vmem:[%s370 + $0x218] sm:$0xff]
      %v547 = vld [vmem:[%s370 + $0x220] sm:$0xff]
      %v548 = vld [vmem:[%s370 + $0x228] sm:$0xff]
      %v549 = vld [vmem:[%s370 + $0x230] sm:$0xff]
      %v550 = vld [vmem:[%s370 + $0x238] sm:$0xff]
      %vm551 = vcmask 261120
      %v553 = vsel %vm551, %v433, 0
      %v556 = vsel %vm551, %v436, 0
      %v559 = vsel %vm551, %v439, 0
      %v562 = vsel %vm551, %v442, 0
      %v565 = vsel %vm551, %v445, 0
      %v568 = vsel %vm551, %v448, 0
      %v571 = vsel %vm551, %v451, 0
      %v574 = vsel %vm551, %v454, 0
      %v577 = vsel %vm551, %v457, 0
      %v580 = vsel %vm551, %v460, 0
      %v583 = vsel %vm551, %v463, 0
      %v586 = vsel %vm551, %v466, 0
      %v589 = vsel %vm551, %v469, 0
      %v592 = vsel %vm551, %v472, 0
      %v595 = vsel %vm551, %v475, 0
      %v598 = vsel %vm551, %v478, 0
      %600 = vmatpush.msra.mxu0 %v509
      %601 = vmatpush.msra.mxu0 %v507
      %602 = vmatpush.msra.mxu0 %v505
      %603 = vmatpush.msra.mxu0 %v503
      %604 = vmatpush.msra.mxu0 %v501
      %605 = vmatpush.msra.mxu0 %v499
      %606 = vmatpush.msra.mxu0 %v497
      %607 = vmatpush.msra.mxu0 %v495
      %608 = vmatpush.msra.mxu0 %v493
      %609 = vmatpush.msra.mxu0 %v491
      %610 = vmatpush.msra.mxu0 %v489
      %611 = vmatpush.msra.mxu0 %v487
      %612 = vmatpush.msra.mxu0 %v485
      %613 = vmatpush.msra.mxu0 %v483
      %614 = vmatpush.msra.mxu0 %v481
      %615 = vmatpush.msra.mxu0 %v479
      %616 = vmatmul.f32.gmra.mxu0 %v431
      %v617 = vpop.f32.mrf.mxu0
      %v618 = vadd.f32 0.0, %v617
      %619 = vmatmul.f32.gmra.mxu0 %v434
      %v620 = vpop.f32.mrf.mxu0
      %v621 = vadd.f32 0.0, %v620
      %622 = vmatmul.f32.gmra.mxu0 %v437
      %v623 = vpop.f32.mrf.mxu0
      %v624 = vadd.f32 0.0, %v623
      %625 = vmatmul.f32.gmra.mxu0 %v440
      %v626 = vpop.f32.mrf.mxu0
      %v627 = vadd.f32 0.0, %v626
      %628 = vmatmul.f32.gmra.mxu0 %v443
      %v629 = vpop.f32.mrf.mxu0
      %v630 = vadd.f32 0.0, %v629
      %631 = vmatmul.f32.gmra.mxu0 %v446
      %v632 = vpop.f32.mrf.mxu0
      %v633 = vadd.f32 0.0, %v632
      %634 = vmatmul.f32.gmra.mxu0 %v449
      %v635 = vpop.f32.mrf.mxu0
      %v636 = vadd.f32 0.0, %v635
      %637 = vmatmul.f32.gmra.mxu0 %v452
      %v638 = vpop.f32.mrf.mxu0
      %v639 = vadd.f32 0.0, %v638
      %640 = vmatmul.f32.gmra.mxu0 %v455
      %v641 = vpop.f32.mrf.mxu0
      %v642 = vadd.f32 0.0, %v641
      %643 = vmatmul.f32.gmra.mxu0 %v458
      %v644 = vpop.f32.mrf.mxu0
      %v645 = vadd.f32 0.0, %v644
      %646 = vmatmul.f32.gmra.mxu0 %v461
      %v647 = vpop.f32.mrf.mxu0
      %v648 = vadd.f32 0.0, %v647
      %649 = vmatmul.f32.gmra.mxu0 %v464
      %v650 = vpop.f32.mrf.mxu0
      %v651 = vadd.f32 0.0, %v650
      %652 = vmatmul.f32.gmra.mxu0 %v467
      %v653 = vpop.f32.mrf.mxu0
      %v654 = vadd.f32 0.0, %v653
      %655 = vmatmul.f32.gmra.mxu0 %v470
      %v656 = vpop.f32.mrf.mxu0
      %v657 = vadd.f32 0.0, %v656
      %658 = vmatmul.f32.gmra.mxu0 %v473
      %v659 = vpop.f32.mrf.mxu0
      %v660 = vadd.f32 0.0, %v659
      %661 = vmatmul.f32.gmra.mxu0 %v476
      %v662 = vpop.f32.mrf.mxu0
      %v663 = vadd.f32 0.0, %v662
      %664 = vdwg.mxu0
      %665 = vmatpush.msra.mxu0 %v541
      %666 = vmatpush.msra.mxu0 %v539
      %667 = vmatpush.msra.mxu0 %v537
      %668 = vmatpush.msra.mxu0 %v535
      %669 = vmatpush.msra.mxu0 %v533
      %670 = vmatpush.msra.mxu0 %v531
      %671 = vmatpush.msra.mxu0 %v529
      %672 = vmatpush.msra.mxu0 %v527
      %673 = vmatpush.msra.mxu0 %v525
      %674 = vmatpush.msra.mxu0 %v523
      %675 = vmatpush.msra.mxu0 %v521
      %676 = vmatpush.msra.mxu0 %v519
      %677 = vmatpush.msra.mxu0 %v517
      %678 = vmatpush.msra.mxu0 %v515
      %679 = vmatpush.msra.mxu0 %v513
      %680 = vmatpush.msra.mxu0 %v511
      %681 = vmatmul.f32.gmra.mxu0 %v432
      %v682 = vpop.f32.mrf.mxu0
      %v683 = vadd.f32 %v618, %v682
      %684 = vmatmul.f32.gmra.mxu0 %v435
      %v685 = vpop.f32.mrf.mxu0
      %v686 = vadd.f32 %v621, %v685
      %687 = vmatmul.f32.gmra.mxu0 %v438
      %v688 = vpop.f32.mrf.mxu0
      %v689 = vadd.f32 %v624, %v688
      %690 = vmatmul.f32.gmra.mxu0 %v441
      %v691 = vpop.f32.mrf.mxu0
      %v692 = vadd.f32 %v627, %v691
      %693 = vmatmul.f32.gmra.mxu0 %v444
      %v694 = vpop.f32.mrf.mxu0
      %v695 = vadd.f32 %v630, %v694
      %696 = vmatmul.f32.gmra.mxu0 %v447
      %v697 = vpop.f32.mrf.mxu0
      %v698 = vadd.f32 %v633, %v697
      %699 = vmatmul.f32.gmra.mxu0 %v450
      %v700 = vpop.f32.mrf.mxu0
      %v701 = vadd.f32 %v636, %v700
      %702 = vmatmul.f32.gmra.mxu0 %v453
      %v703 = vpop.f32.mrf.mxu0
      %v704 = vadd.f32 %v639, %v703
      %705 = vmatmul.f32.gmra.mxu0 %v456
      %v706 = vpop.f32.mrf.mxu0
      %v707 = vadd.f32 %v642, %v706
      %708 = vmatmul.f32.gmra.mxu0 %v459
      %v709 = vpop.f32.mrf.mxu0
      %v710 = vadd.f32 %v645, %v709
      %711 = vmatmul.f32.gmra.mxu0 %v462
      %v712 = vpop.f32.mrf.mxu0
      %v713 = vadd.f32 %v648, %v712
      %714 = vmatmul.f32.gmra.mxu0 %v465
      %v715 = vpop.f32.mrf.mxu0
      %v716 = vadd.f32 %v651, %v715
      %717 = vmatmul.f32.gmra.mxu0 %v468
      %v718 = vpop.f32.mrf.mxu0
      %v719 = vadd.f32 %v654, %v718
      %720 = vmatmul.f32.gmra.mxu0 %v471
      %v721 = vpop.f32.mrf.mxu0
      %v722 = vadd.f32 %v657, %v721
      %723 = vmatmul.f32.gmra.mxu0 %v474
      %v724 = vpop.f32.mrf.mxu0
      %v725 = vadd.f32 %v660, %v724
      %726 = vmatmul.f32.gmra.mxu0 %v477
      %v727 = vpop.f32.mrf.mxu0
      %v728 = vadd.f32 %v663, %v727
      %729 = vdwg.mxu0
      %730 = vmatpush.msra.mxu0 0.0
      %731 = vmatpush.msra.mxu0 0.0
      %732 = vmatpush.msra.mxu0 0.0
      %733 = vmatpush.msra.mxu0 0.0
      %734 = vmatpush.msra.mxu0 0.0
      %735 = vmatpush.msra.mxu0 0.0
      %736 = vmatpush.msra.mxu0 0.0
      %737 = vmatpush.msra.mxu0 0.0
      %738 = vmatpush.msra.mxu0 0.0
      %739 = vmatpush.msra.mxu0 0.0
      %740 = vmatpush.msra.mxu0 0.0
      %741 = vmatpush.msra.mxu0 0.0
      %742 = vmatpush.msra.mxu0 %v549
      %743 = vmatpush.msra.mxu0 %v547
      %744 = vmatpush.msra.mxu0 %v545
      %745 = vmatpush.msra.mxu0 %v543
      %746 = vmatmul.f32.gmra.mxu0 %v553
      %v747 = vpop.f32.mrf.mxu0
      %v748 = vadd.f32 %v683, %v747
      %749 = vmatmul.f32.gmra.mxu0 %v556
      %v750 = vpop.f32.mrf.mxu0
      %v751 = vadd.f32 %v686, %v750
      %752 = vmatmul.f32.gmra.mxu0 %v559
      %v753 = vpop.f32.mrf.mxu0
      %v754 = vadd.f32 %v689, %v753
      %755 = vmatmul.f32.gmra.mxu0 %v562
      %v756 = vpop.f32.mrf.mxu0
      %v757 = vadd.f32 %v692, %v756
      %758 = vmatmul.f32.gmra.mxu0 %v565
      %v759 = vpop.f32.mrf.mxu0
      %v760 = vadd.f32 %v695, %v759
      %761 = vmatmul.f32.gmra.mxu0 %v568
      %v762 = vpop.f32.mrf.mxu0
      %v763 = vadd.f32 %v698, %v762
      %764 = vmatmul.f32.gmra.mxu0 %v571
      %v765 = vpop.f32.mrf.mxu0
      %v766 = vadd.f32 %v701, %v765
      %767 = vmatmul.f32.gmra.mxu0 %v574
      %v768 = vpop.f32.mrf.mxu0
      %v769 = vadd.f32 %v704, %v768
      %770 = vmatmul.f32.gmra.mxu0 %v577
      %v771 = vpop.f32.mrf.mxu0
      %v772 = vadd.f32 %v707, %v771
      %773 = vmatmul.f32.gmra.mxu0 %v580
      %v774 = vpop.f32.mrf.mxu0
      %v775 = vadd.f32 %v710, %v774
      %776 = vmatmul.f32.gmra.mxu0 %v583
      %v777 = vpop.f32.mrf.mxu0
      %v778 = vadd.f32 %v713, %v777
      %779 = vmatmul.f32.gmra.mxu0 %v586
      %v780 = vpop.f32.mrf.mxu0
      %v781 = vadd.f32 %v716, %v780
      %782 = vmatmul.f32.gmra.mxu0 %v589
      %v783 = vpop.f32.mrf.mxu0
      %v784 = vadd.f32 %v719, %v783
      %785 = vmatmul.f32.gmra.mxu0 %v592
      %v786 = vpop.f32.mrf.mxu0
      %v787 = vadd.f32 %v722, %v786
      %788 = vmatmul.f32.gmra.mxu0 %v595
      %v789 = vpop.f32.mrf.mxu0
      %v790 = vadd.f32 %v725, %v789
      %791 = vmatmul.f32.gmra.mxu0 %v598
      %v792 = vpop.f32.mrf.mxu0
      %v793 = vadd.f32 %v728, %v792
      %794 = vdwg.mxu0
      %795 = vmatpush.msra.mxu0 %v510
      %796 = vmatpush.msra.mxu0 %v508
      %797 = vmatpush.msra.mxu0 %v506
      %798 = vmatpush.msra.mxu0 %v504
      %799 = vmatpush.msra.mxu0 %v502
      %800 = vmatpush.msra.mxu0 %v500
      %801 = vmatpush.msra.mxu0 %v498
      %802 = vmatpush.msra.mxu0 %v496
      %803 = vmatpush.msra.mxu0 %v494
      %804 = vmatpush.msra.mxu0 %v492
      %805 = vmatpush.msra.mxu0 %v490
      %806 = vmatpush.msra.mxu0 %v488
      %807 = vmatpush.msra.mxu0 %v486
      %808 = vmatpush.msra.mxu0 %v484
      %809 = vmatpush.msra.mxu0 %v482
      %810 = vmatpush.msra.mxu0 %v480
      %811 = vmatmul.f32.gmra.mxu0 %v431
      %v812 = vpop.f32.mrf.mxu0
      %v813 = vadd.f32 0.0, %v812
      %814 = vmatmul.f32.gmra.mxu0 %v434
      %v815 = vpop.f32.mrf.mxu0
      %v816 = vadd.f32 0.0, %v815
      %817 = vmatmul.f32.gmra.mxu0 %v437
      %v818 = vpop.f32.mrf.mxu0
      %v819 = vadd.f32 0.0, %v818
      %820 = vmatmul.f32.gmra.mxu0 %v440
      %v821 = vpop.f32.mrf.mxu0
      %v822 = vadd.f32 0.0, %v821
      %823 = vmatmul.f32.gmra.mxu0 %v443
      %v824 = vpop.f32.mrf.mxu0
      %v825 = vadd.f32 0.0, %v824
      %826 = vmatmul.f32.gmra.mxu0 %v446
      %v827 = vpop.f32.mrf.mxu0
      %v828 = vadd.f32 0.0, %v827
      %829 = vmatmul.f32.gmra.mxu0 %v449
      %v830 = vpop.f32.mrf.mxu0
      %v831 = vadd.f32 0.0, %v830
      %832 = vmatmul.f32.gmra.mxu0 %v452
      %v833 = vpop.f32.mrf.mxu0
      %v834 = vadd.f32 0.0, %v833
      %835 = vmatmul.f32.gmra.mxu0 %v455
      %v836 = vpop.f32.mrf.mxu0
      %v837 = vadd.f32 0.0, %v836
      %838 = vmatmul.f32.gmra.mxu0 %v458
      %v839 = vpop.f32.mrf.mxu0
      %v840 = vadd.f32 0.0, %v839
      %841 = vmatmul.f32.gmra.mxu0 %v461
      %v842 = vpop.f32.mrf.mxu0
      %v843 = vadd.f32 0.0, %v842
      %844 = vmatmul.f32.gmra.mxu0 %v464
      %v845 = vpop.f32.mrf.mxu0
      %v846 = vadd.f32 0.0, %v845
      %847 = vmatmul.f32.gmra.mxu0 %v467
      %v848 = vpop.f32.mrf.mxu0
      %v849 = vadd.f32 0.0, %v848
      %850 = vmatmul.f32.gmra.mxu0 %v470
      %v851 = vpop.f32.mrf.mxu0
      %v852 = vadd.f32 0.0, %v851
      %853 = vmatmul.f32.gmra.mxu0 %v473
      %v854 = vpop.f32.mrf.mxu0
      %v855 = vadd.f32 0.0, %v854
      %856 = vmatmul.f32.gmra.mxu0 %v476
      %v857 = vpop.f32.mrf.mxu0
      %v858 = vadd.f32 0.0, %v857
      %859 = vdwg.mxu0
      %860 = vmatpush.msra.mxu0 %v542
      %861 = vmatpush.msra.mxu0 %v540
      %862 = vmatpush.msra.mxu0 %v538
      %863 = vmatpush.msra.mxu0 %v536
      %864 = vmatpush.msra.mxu0 %v534
      %865 = vmatpush.msra.mxu0 %v532
      %866 = vmatpush.msra.mxu0 %v530
      %867 = vmatpush.msra.mxu0 %v528
      %868 = vmatpush.msra.mxu0 %v526
      %869 = vmatpush.msra.mxu0 %v524
      %870 = vmatpush.msra.mxu0 %v522
      %871 = vmatpush.msra.mxu0 %v520
      %872 = vmatpush.msra.mxu0 %v518
      %873 = vmatpush.msra.mxu0 %v516
      %874 = vmatpush.msra.mxu0 %v514
      %875 = vmatpush.msra.mxu0 %v512
      %876 = vmatmul.f32.gmra.mxu0 %v432
      %v877 = vpop.f32.mrf.mxu0
      %v878 = vadd.f32 %v813, %v877
      %879 = vmatmul.f32.gmra.mxu0 %v435
      %v880 = vpop.f32.mrf.mxu0
      %v881 = vadd.f32 %v816, %v880
      %882 = vmatmul.f32.gmra.mxu0 %v438
      %v883 = vpop.f32.mrf.mxu0
      %v884 = vadd.f32 %v819, %v883
      %885 = vmatmul.f32.gmra.mxu0 %v441
      %v886 = vpop.f32.mrf.mxu0
      %v887 = vadd.f32 %v822, %v886
      %888 = vmatmul.f32.gmra.mxu0 %v444
      %v889 = vpop.f32.mrf.mxu0
      %v890 = vadd.f32 %v825, %v889
      %891 = vmatmul.f32.gmra.mxu0 %v447
      %v892 = vpop.f32.mrf.mxu0
      %v893 = vadd.f32 %v828, %v892
      %894 = vmatmul.f32.gmra.mxu0 %v450
      %v895 = vpop.f32.mrf.mxu0
      %v896 = vadd.f32 %v831, %v895
      %897 = vmatmul.f32.gmra.mxu0 %v453
      %v898 = vpop.f32.mrf.mxu0
      %v899 = vadd.f32 %v834, %v898
      %900 = vmatmul.f32.gmra.mxu0 %v456
      %v901 = vpop.f32.mrf.mxu0
      %v902 = vadd.f32 %v837, %v901
      %903 = vmatmul.f32.gmra.mxu0 %v459
      %v904 = vpop.f32.mrf.mxu0
      %v905 = vadd.f32 %v840, %v904
      %906 = vmatmul.f32.gmra.mxu0 %v462
      %v907 = vpop.f32.mrf.mxu0
      %v908 = vadd.f32 %v843, %v907
      %909 = vmatmul.f32.gmra.mxu0 %v465
      %v910 = vpop.f32.mrf.mxu0
      %v911 = vadd.f32 %v846, %v910
      %912 = vmatmul.f32.gmra.mxu0 %v468
      %v913 = vpop.f32.mrf.mxu0
      %v914 = vadd.f32 %v849, %v913
      %915 = vmatmul.f32.gmra.mxu0 %v471
      %v916 = vpop.f32.mrf.mxu0
      %v917 = vadd.f32 %v852, %v916
      %918 = vmatmul.f32.gmra.mxu0 %v474
      %v919 = vpop.f32.mrf.mxu0
      %v920 = vadd.f32 %v855, %v919
      %921 = vmatmul.f32.gmra.mxu0 %v477
      %v922 = vpop.f32.mrf.mxu0
      %v923 = vadd.f32 %v858, %v922
      %924 = vdwg.mxu0
      %925 = vmatpush.msra.mxu0 0.0
      %926 = vmatpush.msra.mxu0 0.0
      %927 = vmatpush.msra.mxu0 0.0
      %928 = vmatpush.msra.mxu0 0.0
      %929 = vmatpush.msra.mxu0 0.0
      %930 = vmatpush.msra.mxu0 0.0
      %931 = vmatpush.msra.mxu0 0.0
      %932 = vmatpush.msra.mxu0 0.0
      %933 = vmatpush.msra.mxu0 0.0
      %934 = vmatpush.msra.mxu0 0.0
      %935 = vmatpush.msra.mxu0 0.0
      %936 = vmatpush.msra.mxu0 0.0
      %937 = vmatpush.msra.mxu0 %v550
      %938 = vmatpush.msra.mxu0 %v548
      %939 = vmatpush.msra.mxu0 %v546
      %940 = vmatpush.msra.mxu0 %v544
      %941 = vmatmul.f32.gmra.mxu0 %v553
      %v942 = vpop.f32.mrf.mxu0
      %v943 = vadd.f32 %v878, %v942
      %944 = vmatmul.f32.gmra.mxu0 %v556
      %v945 = vpop.f32.mrf.mxu0
      %v946 = vadd.f32 %v881, %v945
      %947 = vmatmul.f32.gmra.mxu0 %v559
      %v948 = vpop.f32.mrf.mxu0
      %v949 = vadd.f32 %v884, %v948
      %950 = vmatmul.f32.gmra.mxu0 %v562
      %v951 = vpop.f32.mrf.mxu0
      %v952 = vadd.f32 %v887, %v951
      %953 = vmatmul.f32.gmra.mxu0 %v565
      %v954 = vpop.f32.mrf.mxu0
      %v955 = vadd.f32 %v890, %v954
      %956 = vmatmul.f32.gmra.mxu0 %v568
      %v957 = vpop.f32.mrf.mxu0
      %v958 = vadd.f32 %v893, %v957
      %959 = vmatmul.f32.gmra.mxu0 %v571
      %v960 = vpop.f32.mrf.mxu0
      %v961 = vadd.f32 %v896, %v960
      %962 = vmatmul.f32.gmra.mxu0 %v574
      %v963 = vpop.f32.mrf.mxu0
      %v964 = vadd.f32 %v899, %v963
      %965 = vmatmul.f32.gmra.mxu0 %v577
      %v966 = vpop.f32.mrf.mxu0
      %v967 = vadd.f32 %v902, %v966
      %968 = vmatmul.f32.gmra.mxu0 %v580
      %v969 = vpop.f32.mrf.mxu0
      %v970 = vadd.f32 %v905, %v969
      %971 = vmatmul.f32.gmra.mxu0 %v583
      %v972 = vpop.f32.mrf.mxu0
      %v973 = vadd.f32 %v908, %v972
      %974 = vmatmul.f32.gmra.mxu0 %v586
      %v975 = vpop.f32.mrf.mxu0
      %v976 = vadd.f32 %v911, %v975
      %977 = vmatmul.f32.gmra.mxu0 %v589
      %v978 = vpop.f32.mrf.mxu0
      %v979 = vadd.f32 %v914, %v978
      %980 = vmatmul.f32.gmra.mxu0 %v592
      %v981 = vpop.f32.mrf.mxu0
      %v982 = vadd.f32 %v917, %v981
      %983 = vmatmul.f32.gmra.mxu0 %v595
      %v984 = vpop.f32.mrf.mxu0
      %v985 = vadd.f32 %v920, %v984
      %986 = vmatmul.f32.gmra.mxu0 %v598
      %v987 = vpop.f32.mrf.mxu0
      %v988 = vadd.f32 %v923, %v987
      %989 = vdwg.mxu0
      %990 = vst [vmem:[#allocation5] sm:$0xff] %v748
      %991 = vst [vmem:[#allocation5 + $0x8] sm:$0xff] %v943
      %992 = vst [vmem:[#allocation5 + $0x10] sm:$0xff] %v751
      %993 = vst [vmem:[#allocation5 + $0x18] sm:$0xff] %v946
      %994 = vst [vmem:[#allocation5 + $0x20] sm:$0xff] %v754
      %995 = vst [vmem:[#allocation5 + $0x28] sm:$0xff] %v949
      %996 = vst [vmem:[#allocation5 + $0x30] sm:$0xff] %v757
      %997 = vst [vmem:[#allocation5 + $0x38] sm:$0xff] %v952
      %998 = vst [vmem:[#allocation5 + $0x40] sm:$0xff] %v760
      %999 = vst [vmem:[#allocation5 + $0x48] sm:$0xff] %v955
      %1000 = vst [vmem:[#allocation5 + $0x50] sm:$0xff] %v763
      %1001 = vst [vmem:[#allocation5 + $0x58] sm:$0xff] %v958
      %1002 = vst [vmem:[#allocation5 + $0x60] sm:$0xff] %v766
      %1003 = vst [vmem:[#allocation5 + $0x68] sm:$0xff] %v961
      %1004 = vst [vmem:[#allocation5 + $0x70] sm:$0xff] %v769
      %1005 = vst [vmem:[#allocation5 + $0x78] sm:$0xff] %v964
      %1006 = vst [vmem:[#allocation5 + $0x80] sm:$0xff] %v772
      %1007 = vst [vmem:[#allocation5 + $0x88] sm:$0xff] %v967
      %1008 = vst [vmem:[#allocation5 + $0x90] sm:$0xff] %v775
      %1009 = vst [vmem:[#allocation5 + $0x98] sm:$0xff] %v970
      %1010 = vst [vmem:[#allocation5 + $0xa0] sm:$0xff] %v778
      %1011 = vst [vmem:[#allocation5 + $0xa8] sm:$0xff] %v973
      %1012 = vst [vmem:[#allocation5 + $0xb0] sm:$0xff] %v781
      %1013 = vst [vmem:[#allocation5 + $0xb8] sm:$0xff] %v976
      %1014 = vst [vmem:[#allocation5 + $0xc0] sm:$0xff] %v784
      %1015 = vst [vmem:[#allocation5 + $0xc8] sm:$0xff] %v979
      %1016 = vst [vmem:[#allocation5 + $0xd0] sm:$0xff] %v787
      %1017 = vst [vmem:[#allocation5 + $0xd8] sm:$0xff] %v982
      %1018 = vst [vmem:[#allocation5 + $0xe0] sm:$0xff] %v790
      %1019 = vst [vmem:[#allocation5 + $0xe8] sm:$0xff] %v985
      %1020 = vst [vmem:[#allocation5 + $0xf0] sm:$0xff] %v793
      %1021 = vst [vmem:[#allocation5 + $0xf8] sm:$0xff] %v988
      %v1022 = vld [vmem:[#allocation2] sm:$0xff]
      %v1023 = vld [vmem:[#allocation2 + $0x8] sm:$0xff]
      %v1024 = vld [vmem:[#allocation2 + $0x10] sm:$0xff]
      %v1025 = vld [vmem:[#allocation2 + $0x18] sm:$0xff]
      %v1026 = vld [vmem:[#allocation2 + $0x20] sm:$0xff]
      %v1027 = vld [vmem:[#allocation2 + $0x28] sm:$0xff]
      %v1028 = vld [vmem:[#allocation2 + $0x30] sm:$0xff]
      %v1029 = vld [vmem:[#allocation2 + $0x38] sm:$0xff]
      %1030 = vrot.lane.b32.xlu0 %v1022, 17
      %v1031 = vpop.permute.xlu0 %1030
      %1032 = vrot.lane.b32.xlu0 %v1024, 17
      %v1033 = vpop.permute.xlu0 %1032
      %1034 = vrot.lane.b32.xlu0 %v1026, 17
      %v1035 = vpop.permute.xlu0 %1034
      %1036 = vrot.lane.b32.xlu0 %v1028, 17
      %v1037 = vpop.permute.xlu0 %1036
      %1038 = vrot.lane.b32.xlu0 %v1023, 17
      %v1039 = vpop.permute.xlu0 %1038
      %1040 = vrot.lane.b32.xlu0 %v1025, 17
      %v1041 = vpop.permute.xlu0 %1040
      %1042 = vrot.lane.b32.xlu0 %v1027, 17
      %v1043 = vpop.permute.xlu0 %1042
      %1044 = vrot.lane.b32.xlu0 %v1029, 17
      %v1045 = vpop.permute.xlu0 %1044
      %v1046 = vlaneseq
      %v1047 = vand.u32 %v1046, 127
      %vm1048 = vcmp.lt.s32.totalorder %v1047, 17
      %v1049 = vsel %vm1048, %v1031, %v1039
      %v1050 = vsel %vm1048, %v1033, %v1041
      %v1051 = vsel %vm1048, %v1035, %v1043
      %v1052 = vsel %vm1048, %v1037, %v1045
      %v1053 = vsel %vm1048, %v1039, %v1031
      %v1054 = vsel %vm1048, %v1041, %v1033
      %v1055 = vsel %vm1048, %v1043, %v1035
      %v1056 = vsel %vm1048, %v1045, %v1037
      %v1057 = vld [vmem:[%s4] sm:$0x3]
      %v1059 = vperm.slane %v1057, 0
      %v1060 = vperm.slane %v1057, 1
      %v1063 = vmul.f32 %v1053, %v1059
      %v1064 = vmul.f32 %v1049, %v1060
      %v1065 = vmul.f32 %v1054, %v1059
      %v1066 = vmul.f32 %v1050, %v1060
      %v1067 = vmul.f32 %v1055, %v1059
      %v1068 = vmul.f32 %v1051, %v1060
      %v1069 = vmul.f32 %v1056, %v1059
      %v1070 = vmul.f32 %v1052, %v1060
      %1071 = vst [vmem:[#allocation4] sm:$0xff] %v1063
      %1072 = vst [vmem:[#allocation4 + $0x8] sm:$0xff] %v1064
      %1073 = vst [vmem:[#allocation4 + $0x10] sm:$0xff] %v1065
      %1074 = vst [vmem:[#allocation4 + $0x18] sm:$0xff] %v1066
      %1075 = vst [vmem:[#allocation4 + $0x20] sm:$0xff] %v1067
      %1076 = vst [vmem:[#allocation4 + $0x28] sm:$0xff] %v1068
      %1077 = vst [vmem:[#allocation4 + $0x30] sm:$0xff] %v1069
      %1078 = vst [vmem:[#allocation4 + $0x38] sm:$0xff] %v1070
      %1079 = vrot.lane.b32.xlu0 %v1022, 16
      %v1080 = vpop.permute.xlu0 %1079
      %1081 = vrot.lane.b32.xlu0 %v1024, 16
      %v1082 = vpop.permute.xlu0 %1081
      %1083 = vrot.lane.b32.xlu0 %v1026, 16
      %v1084 = vpop.permute.xlu0 %1083
      %1085 = vrot.lane.b32.xlu0 %v1028, 16
      %v1086 = vpop.permute.xlu0 %1085
      %1087 = vrot.lane.b32.xlu0 %v1023, 16
      %v1088 = vpop.permute.xlu0 %1087
      %1089 = vrot.lane.b32.xlu0 %v1025, 16
      %v1090 = vpop.permute.xlu0 %1089
      %1091 = vrot.lane.b32.xlu0 %v1027, 16
      %v1092 = vpop.permute.xlu0 %1091
      %1093 = vrot.lane.b32.xlu0 %v1029, 16
      %v1094 = vpop.permute.xlu0 %1093
      %vm1095 = vcmp.lt.s32.totalorder %v1047, 16
      %v1096 = vsel %vm1095, %v1080, %v1088
      %v1097 = vsel %vm1095, %v1082, %v1090
      %v1098 = vsel %vm1095, %v1084, %v1092
      %v1099 = vsel %vm1095, %v1086, %v1094
      %v1100 = vsel %vm1095, %v1088, %v1080
      %v1101 = vsel %vm1095, %v1090, %v1082
      %v1102 = vsel %vm1095, %v1092, %v1084
      %v1103 = vsel %vm1095, %v1094, %v1086
      %s1104 = scalar_lea.vmem %s4, 2
      %v1105 = vld [vmem:[%s1104] sm:$0x3]
      %v1107 = vperm.slane %v1105, 0
      %v1108 = vperm.slane %v1105, 1
      %v1111 = vmul.f32 %v1100, %v1107
      %v1112 = vmul.f32 %v1096, %v1108
      %v1113 = vmul.f32 %v1101, %v1107
      %v1114 = vmul.f32 %v1097, %v1108
      %v1115 = vmul.f32 %v1102, %v1107
      %v1116 = vmul.f32 %v1098, %v1108
      %v1117 = vmul.f32 %v1103, %v1107
      %v1118 = vmul.f32 %v1099, %v1108
      %1119 = vst [vmem:[#allocation4 + $0x40] sm:$0xff] %v1111
      %1120 = vst [vmem:[#allocation4 + $0x48] sm:$0xff] %v1112
      %1121 = vst [vmem:[#allocation4 + $0x50] sm:$0xff] %v1113
      %1122 = vst [vmem:[#allocation4 + $0x58] sm:$0xff] %v1114
      %1123 = vst [vmem:[#allocation4 + $0x60] sm:$0xff] %v1115
      %1124 = vst [vmem:[#allocation4 + $0x68] sm:$0xff] %v1116
      %1125 = vst [vmem:[#allocation4 + $0x70] sm:$0xff] %v1117
      %1126 = vst [vmem:[#allocation4 + $0x78] sm:$0xff] %v1118
      %1127 = vrot.lane.b32.xlu0 %v1022, 15
      %v1128 = vpop.permute.xlu0 %1127
      %1129 = vrot.lane.b32.xlu0 %v1024, 15
      %v1130 = vpop.permute.xlu0 %1129
      %1131 = vrot.lane.b32.xlu0 %v1026, 15
      %v1132 = vpop.permute.xlu0 %1131
      %1133 = vrot.lane.b32.xlu0 %v1028, 15
      %v1134 = vpop.permute.xlu0 %1133
      %1135 = vrot.lane.b32.xlu0 %v1023, 15
      %v1136 = vpop.permute.xlu0 %1135
      %1137 = vrot.lane.b32.xlu0 %v1025, 15
      %v1138 = vpop.permute.xlu0 %1137
      %1139 = vrot.lane.b32.xlu0 %v1027, 15
      %v1140 = vpop.permute.xlu0 %1139
      %1141 = vrot.lane.b32.xlu0 %v1029, 15
      %v1142 = vpop.permute.xlu0 %1141
      %vm1143 = vcmp.lt.s32.totalorder %v1047, 15
      %v1144 = vsel %vm1143, %v1128, %v1136
      %v1145 = vsel %vm1143, %v1130, %v1138
      %v1146 = vsel %vm1143, %v1132, %v1140
      %v1147 = vsel %vm1143, %v1134, %v1142
      %v1148 = vsel %vm1143, %v1136, %v1128
      %v1149 = vsel %vm1143, %v1138, %v1130
      %v1150 = vsel %vm1143, %v1140, %v1132
      %v1151 = vsel %vm1143, %v1142, %v1134
      %s1152 = scalar_lea.vmem %s4, 4
      %v1153 = vld [vmem:[%s1152] sm:$0x3]
      %v1155 = vperm.slane %v1153, 0
      %v1156 = vperm.slane %v1153, 1
      %v1159 = vmul.f32 %v1148, %v1155
      %v1160 = vmul.f32 %v1144, %v1156
      %v1161 = vmul.f32 %v1149, %v1155
      %v1162 = vmul.f32 %v1145, %v1156
      %v1163 = vmul.f32 %v1150, %v1155
      %v1164 = vmul.f32 %v1146, %v1156
      %v1165 = vmul.f32 %v1151, %v1155
      %v1166 = vmul.f32 %v1147, %v1156
      %1167 = vst [vmem:[#allocation4 + $0x80] sm:$0xff] %v1159
      %1168 = vst [vmem:[#allocation4 + $0x88] sm:$0xff] %v1160
      %1169 = vst [vmem:[#allocation4 + $0x90] sm:$0xff] %v1161
      %1170 = vst [vmem:[#allocation4 + $0x98] sm:$0xff] %v1162
      %1171 = vst [vmem:[#allocation4 + $0xa0] sm:$0xff] %v1163
      %1172 = vst [vmem:[#allocation4 + $0xa8] sm:$0xff] %v1164
      %1173 = vst [vmem:[#allocation4 + $0xb0] sm:$0xff] %v1165
      %1174 = vst [vmem:[#allocation4 + $0xb8] sm:$0xff] %v1166
      %1175 = vrot.lane.b32.xlu0 %v1022, 1
      %v1176 = vpop.permute.xlu0 %1175
      %1177 = vrot.lane.b32.xlu0 %v1024, 1
      %v1178 = vpop.permute.xlu0 %1177
      %1179 = vrot.lane.b32.xlu0 %v1026, 1
      %v1180 = vpop.permute.xlu0 %1179
      %1181 = vrot.lane.b32.xlu0 %v1028, 1
      %v1182 = vpop.permute.xlu0 %1181
      %1183 = vrot.lane.b32.xlu0 %v1023, 1
      %v1184 = vpop.permute.xlu0 %1183
      %1185 = vrot.lane.b32.xlu0 %v1025, 1
      %v1186 = vpop.permute.xlu0 %1185
      %1187 = vrot.lane.b32.xlu0 %v1027, 1
      %v1188 = vpop.permute.xlu0 %1187
      %1189 = vrot.lane.b32.xlu0 %v1029, 1
      %v1190 = vpop.permute.xlu0 %1189
      %vm1191 = vcmp.lt.s32.totalorder %v1047, 1
      %v1192 = vsel %vm1191, %v1176, %v1184
      %v1193 = vsel %vm1191, %v1178, %v1186
      %v1194 = vsel %vm1191, %v1180, %v1188
      %v1195 = vsel %vm1191, %v1182, %v1190
      %v1196 = vsel %vm1191, %v1184, %v1176
      %v1197 = vsel %vm1191, %v1186, %v1178
      %v1198 = vsel %vm1191, %v1188, %v1180
      %v1199 = vsel %vm1191, %v1190, %v1182
      %s1200 = scalar_lea.vmem %s4, 6
      %v1201 = vld [vmem:[%s1200] sm:$0x3]
      %v1203 = vperm.slane %v1201, 0
      %v1204 = vperm.slane %v1201, 1
      %v1207 = vmul.f32 %v1196, %v1203
      %v1208 = vmul.f32 %v1192, %v1204
      %v1209 = vmul.f32 %v1197, %v1203
      %v1210 = vmul.f32 %v1193, %v1204
      %v1211 = vmul.f32 %v1198, %v1203
      %v1212 = vmul.f32 %v1194, %v1204
      %v1213 = vmul.f32 %v1199, %v1203
      %v1214 = vmul.f32 %v1195, %v1204
      %1215 = vst [vmem:[#allocation4 + $0xc0] sm:$0xff] %v1207
      %1216 = vst [vmem:[#allocation4 + $0xc8] sm:$0xff] %v1208
      %1217 = vst [vmem:[#allocation4 + $0xd0] sm:$0xff] %v1209
      %1218 = vst [vmem:[#allocation4 + $0xd8] sm:$0xff] %v1210
      %1219 = vst [vmem:[#allocation4 + $0xe0] sm:$0xff] %v1211
      %1220 = vst [vmem:[#allocation4 + $0xe8] sm:$0xff] %v1212
      %1221 = vst [vmem:[#allocation4 + $0xf0] sm:$0xff] %v1213
      %1222 = vst [vmem:[#allocation4 + $0xf8] sm:$0xff] %v1214
      %1223 = vst [vmem:[#allocation4 + $0x100] sm:$0xff] %v1022
      %1224 = vst [vmem:[#allocation4 + $0x108] sm:$0xff] %v1023
      %1225 = vst [vmem:[#allocation4 + $0x110] sm:$0xff] %v1024
      %1226 = vst [vmem:[#allocation4 + $0x118] sm:$0xff] %v1025
      %1227 = vst [vmem:[#allocation4 + $0x120] sm:$0xff] %v1026
      %1228 = vst [vmem:[#allocation4 + $0x128] sm:$0xff] %v1027
      %1229 = vst [vmem:[#allocation4 + $0x130] sm:$0xff] %v1028
      %1230 = vst [vmem:[#allocation4 + $0x138] sm:$0xff] %v1029
      %1231 = vrot.lane.b32.xlu0 %v1022, 127
      %v1232 = vpop.permute.xlu0 %1231
      %1233 = vrot.lane.b32.xlu0 %v1024, 127
      %v1234 = vpop.permute.xlu0 %1233
      %1235 = vrot.lane.b32.xlu0 %v1026, 127
      %v1236 = vpop.permute.xlu0 %1235
      %1237 = vrot.lane.b32.xlu0 %v1028, 127
      %v1238 = vpop.permute.xlu0 %1237
      %1239 = vrot.lane.b32.xlu0 %v1023, 127
      %v1240 = vpop.permute.xlu0 %1239
      %1241 = vrot.lane.b32.xlu0 %v1025, 127
      %v1242 = vpop.permute.xlu0 %1241
      %1243 = vrot.lane.b32.xlu0 %v1027, 127
      %v1244 = vpop.permute.xlu0 %1243
      %1245 = vrot.lane.b32.xlu0 %v1029, 127
      %v1246 = vpop.permute.xlu0 %1245
      %vm1247 = vcmp.lt.s32.totalorder %v1047, 127
      %v1248 = vsel %vm1247, %v1232, %v1240
      %v1249 = vsel %vm1247, %v1234, %v1242
      %v1250 = vsel %vm1247, %v1236, %v1244
      %v1251 = vsel %vm1247, %v1238, %v1246
      %v1252 = vsel %vm1247, %v1240, %v1232
      %v1253 = vsel %vm1247, %v1242, %v1234
      %v1254 = vsel %vm1247, %v1244, %v1236
      %v1255 = vsel %vm1247, %v1246, %v1238
      %s1256 = scalar_lea.vmem %s4, 10
      %v1257 = vld [vmem:[%s1256] sm:$0x3]
      %v1259 = vperm.slane %v1257, 0
      %v1260 = vperm.slane %v1257, 1
      %v1263 = vmul.f32 %v1248, %v1259
      %v1264 = vmul.f32 %v1252, %v1260
      %v1265 = vmul.f32 %v1249, %v1259
      %v1266 = vmul.f32 %v1253, %v1260
      %v1267 = vmul.f32 %v1250, %v1259
      %v1268 = vmul.f32 %v1254, %v1260
      %v1269 = vmul.f32 %v1251, %v1259
      %v1270 = vmul.f32 %v1255, %v1260
      %1271 = vst [vmem:[#allocation4 + $0x140] sm:$0xff] %v1263
      %1272 = vst [vmem:[#allocation4 + $0x148] sm:$0xff] %v1264
      %1273 = vst [vmem:[#allocation4 + $0x150] sm:$0xff] %v1265
      %1274 = vst [vmem:[#allocation4 + $0x158] sm:$0xff] %v1266
      %1275 = vst [vmem:[#allocation4 + $0x160] sm:$0xff] %v1267
      %1276 = vst [vmem:[#allocation4 + $0x168] sm:$0xff] %v1268
      %1277 = vst [vmem:[#allocation4 + $0x170] sm:$0xff] %v1269
      %1278 = vst [vmem:[#allocation4 + $0x178] sm:$0xff] %v1270
      %1279 = vrot.lane.b32.xlu0 %v1022, 113
      %v1280 = vpop.permute.xlu0 %1279
      %1281 = vrot.lane.b32.xlu0 %v1024, 113
      %v1282 = vpop.permute.xlu0 %1281
      %1283 = vrot.lane.b32.xlu0 %v1026, 113
      %v1284 = vpop.permute.xlu0 %1283
      %1285 = vrot.lane.b32.xlu0 %v1028, 113
      %v1286 = vpop.permute.xlu0 %1285
      %1287 = vrot.lane.b32.xlu0 %v1023, 113
      %v1288 = vpop.permute.xlu0 %1287
      %1289 = vrot.lane.b32.xlu0 %v1025, 113
      %v1290 = vpop.permute.xlu0 %1289
      %1291 = vrot.lane.b32.xlu0 %v1027, 113
      %v1292 = vpop.permute.xlu0 %1291
      %1293 = vrot.lane.b32.xlu0 %v1029, 113
      %v1294 = vpop.permute.xlu0 %1293
      %vm1295 = vcmp.lt.s32.totalorder %v1047, 113
      %v1296 = vsel %vm1295, %v1280, %v1288
      %v1297 = vsel %vm1295, %v1282, %v1290
      %v1298 = vsel %vm1295, %v1284, %v1292
      %v1299 = vsel %vm1295, %v1286, %v1294
      %v1300 = vsel %vm1295, %v1288, %v1280
      %v1301 = vsel %vm1295, %v1290, %v1282
      %v1302 = vsel %vm1295, %v1292, %v1284
      %v1303 = vsel %vm1295, %v1294, %v1286
      %s1304 = scalar_lea.vmem %s4, 12
      %v1305 = vld [vmem:[%s1304] sm:$0x3]
      %v1307 = vperm.slane %v1305, 0
      %v1308 = vperm.slane %v1305, 1
      %v1311 = vmul.f32 %v1296, %v1307
      %v1312 = vmul.f32 %v1300, %v1308
      %v1313 = vmul.f32 %v1297, %v1307
      %v1314 = vmul.f32 %v1301, %v1308
      %v1315 = vmul.f32 %v1298, %v1307
      %v1316 = vmul.f32 %v1302, %v1308
      %v1317 = vmul.f32 %v1299, %v1307
      %v1318 = vmul.f32 %v1303, %v1308
      %1319 = vst [vmem:[#allocation4 + $0x180] sm:$0xff] %v1311
      %1320 = vst [vmem:[#allocation4 + $0x188] sm:$0xff] %v1312
      %1321 = vst [vmem:[#allocation4 + $0x190] sm:$0xff] %v1313
      %1322 = vst [vmem:[#allocation4 + $0x198] sm:$0xff] %v1314
      %1323 = vst [vmem:[#allocation4 + $0x1a0] sm:$0xff] %v1315
      %1324 = vst [vmem:[#allocation4 + $0x1a8] sm:$0xff] %v1316
      %1325 = vst [vmem:[#allocation4 + $0x1b0] sm:$0xff] %v1317
      %1326 = vst [vmem:[#allocation4 + $0x1b8] sm:$0xff] %v1318
      %1327 = vrot.lane.b32.xlu0 %v1022, 112
      %v1328 = vpop.permute.xlu0 %1327
      %1329 = vrot.lane.b32.xlu0 %v1024, 112
      %v1330 = vpop.permute.xlu0 %1329
      %1331 = vrot.lane.b32.xlu0 %v1026, 112
      %v1332 = vpop.permute.xlu0 %1331
      %1333 = vrot.lane.b32.xlu0 %v1028, 112
      %v1334 = vpop.permute.xlu0 %1333
      %1335 = vrot.lane.b32.xlu0 %v1023, 112
      %v1336 = vpop.permute.xlu0 %1335
      %1337 = vrot.lane.b32.xlu0 %v1025, 112
      %v1338 = vpop.permute.xlu0 %1337
      %1339 = vrot.lane.b32.xlu0 %v1027, 112
      %v1340 = vpop.permute.xlu0 %1339
      %1341 = vrot.lane.b32.xlu0 %v1029, 112
      %v1342 = vpop.permute.xlu0 %1341
      %vm1343 = vcmp.lt.s32.totalorder %v1047, 112
      %v1344 = vsel %vm1343, %v1328, %v1336
      %v1345 = vsel %vm1343, %v1330, %v1338
      %v1346 = vsel %vm1343, %v1332, %v1340
      %v1347 = vsel %vm1343, %v1334, %v1342
      %v1348 = vsel %vm1343, %v1336, %v1328
      %v1349 = vsel %vm1343, %v1338, %v1330
      %v1350 = vsel %vm1343, %v1340, %v1332
      %v1351 = vsel %vm1343, %v1342, %v1334
      %s1352 = scalar_lea.vmem %s4, 14
      %v1353 = vld [vmem:[%s1352] sm:$0x3]
      %v1355 = vperm.slane %v1353, 0
      %v1356 = vperm.slane %v1353, 1
      %v1359 = vmul.f32 %v1344, %v1355
      %v1360 = vmul.f32 %v1348, %v1356
      %v1361 = vmul.f32 %v1345, %v1355
      %v1362 = vmul.f32 %v1349, %v1356
      %v1363 = vmul.f32 %v1346, %v1355
      %v1364 = vmul.f32 %v1350, %v1356
      %v1365 = vmul.f32 %v1347, %v1355
      %v1366 = vmul.f32 %v1351, %v1356
      %1367 = vst [vmem:[#allocation4 + $0x1c0] sm:$0xff] %v1359
      %1368 = vst [vmem:[#allocation4 + $0x1c8] sm:$0xff] %v1360
      %1369 = vst [vmem:[#allocation4 + $0x1d0] sm:$0xff] %v1361
      %1370 = vst [vmem:[#allocation4 + $0x1d8] sm:$0xff] %v1362
      %1371 = vst [vmem:[#allocation4 + $0x1e0] sm:$0xff] %v1363
      %1372 = vst [vmem:[#allocation4 + $0x1e8] sm:$0xff] %v1364
      %1373 = vst [vmem:[#allocation4 + $0x1f0] sm:$0xff] %v1365
      %1374 = vst [vmem:[#allocation4 + $0x1f8] sm:$0xff] %v1366
      %1375 = vrot.lane.b32.xlu0 %v1022, 111
      %v1376 = vpop.permute.xlu0 %1375
      %1377 = vrot.lane.b32.xlu0 %v1024, 111
      %v1378 = vpop.permute.xlu0 %1377
      %1379 = vrot.lane.b32.xlu0 %v1026, 111
      %v1380 = vpop.permute.xlu0 %1379
      %1381 = vrot.lane.b32.xlu0 %v1028, 111
      %v1382 = vpop.permute.xlu0 %1381
      %1383 = vrot.lane.b32.xlu0 %v1023, 111
      %v1384 = vpop.permute.xlu0 %1383
      %1385 = vrot.lane.b32.xlu0 %v1025, 111
      %v1386 = vpop.permute.xlu0 %1385
      %1387 = vrot.lane.b32.xlu0 %v1027, 111
      %v1388 = vpop.permute.xlu0 %1387
      %1389 = vrot.lane.b32.xlu0 %v1029, 111
      %v1390 = vpop.permute.xlu0 %1389
      %vm1391 = vcmp.lt.s32.totalorder %v1047, 111
      %v1392 = vsel %vm1391, %v1376, %v1384
      %v1393 = vsel %vm1391, %v1378, %v1386
      %v1394 = vsel %vm1391, %v1380, %v1388
      %v1395 = vsel %vm1391, %v1382, %v1390
      %v1396 = vsel %vm1391, %v1384, %v1376
      %v1397 = vsel %vm1391, %v1386, %v1378
      %v1398 = vsel %vm1391, %v1388, %v1380
      %v1399 = vsel %vm1391, %v1390, %v1382
      %s1400 = scalar_lea.vmem %s4, 16
      %v1401 = vld [vmem:[%s1400] sm:$0x3]
      %v1403 = vperm.slane %v1401, 0
      %v1404 = vperm.slane %v1401, 1
      %v1407 = vmul.f32 %v1392, %v1403
      %v1408 = vmul.f32 %v1396, %v1404
      %v1409 = vmul.f32 %v1393, %v1403
      %v1410 = vmul.f32 %v1397, %v1404
      %v1411 = vmul.f32 %v1394, %v1403
      %v1412 = vmul.f32 %v1398, %v1404
      %v1413 = vmul.f32 %v1395, %v1403
      %v1414 = vmul.f32 %v1399, %v1404
      %1415 = vst [vmem:[#allocation4 + $0x200] sm:$0xff] %v1407
      %1416 = vst [vmem:[#allocation4 + $0x208] sm:$0xff] %v1408
      %1417 = vst [vmem:[#allocation4 + $0x210] sm:$0xff] %v1409
      %1418 = vst [vmem:[#allocation4 + $0x218] sm:$0xff] %v1410
      %1419 = vst [vmem:[#allocation4 + $0x220] sm:$0xff] %v1411
      %1420 = vst [vmem:[#allocation4 + $0x228] sm:$0xff] %v1412
      %1421 = vst [vmem:[#allocation4 + $0x230] sm:$0xff] %v1413
      %1422 = vst [vmem:[#allocation4 + $0x238] sm:$0xff] %v1414
      %v1423 = vld [vmem:[#allocation5] sm:$0xff]
      %v1424 = vld [vmem:[#allocation5 + $0x8] sm:$0xff]
      %v1425 = vld [vmem:[#allocation5 + $0x10] sm:$0xff]
      %v1426 = vld [vmem:[#allocation5 + $0x18] sm:$0xff]
      %v1427 = vld [vmem:[#allocation5 + $0x20] sm:$0xff]
      %v1428 = vld [vmem:[#allocation5 + $0x28] sm:$0xff]
      %v1429 = vld [vmem:[#allocation5 + $0x30] sm:$0xff]
      %v1430 = vld [vmem:[#allocation5 + $0x38] sm:$0xff]
      %v1431 = vld [vmem:[#allocation5 + $0x40] sm:$0xff]
      %v1432 = vld [vmem:[#allocation5 + $0x48] sm:$0xff]
      %v1433 = vld [vmem:[#allocation5 + $0x50] sm:$0xff]
      %v1434 = vld [vmem:[#allocation5 + $0x58] sm:$0xff]
      %v1435 = vld [vmem:[#allocation5 + $0x60] sm:$0xff]
      %v1436 = vld [vmem:[#allocation5 + $0x68] sm:$0xff]
      %v1437 = vld [vmem:[#allocation5 + $0x70] sm:$0xff]
      %v1438 = vld [vmem:[#allocation5 + $0x78] sm:$0xff]
      %v1439 = vld [vmem:[#allocation5 + $0x80] sm:$0xff]
      %v1440 = vld [vmem:[#allocation5 + $0x88] sm:$0xff]
      %v1441 = vld [vmem:[#allocation5 + $0x90] sm:$0xff]
      %v1442 = vld [vmem:[#allocation5 + $0x98] sm:$0xff]
      %v1443 = vld [vmem:[#allocation5 + $0xa0] sm:$0xff]
      %v1444 = vld [vmem:[#allocation5 + $0xa8] sm:$0xff]
      %v1445 = vld [vmem:[#allocation5 + $0xb0] sm:$0xff]
      %v1446 = vld [vmem:[#allocation5 + $0xb8] sm:$0xff]
      %v1447 = vld [vmem:[#allocation5 + $0xc0] sm:$0xff]
      %v1448 = vld [vmem:[#allocation5 + $0xc8] sm:$0xff]
      %v1449 = vld [vmem:[#allocation5 + $0xd0] sm:$0xff]
      %v1450 = vld [vmem:[#allocation5 + $0xd8] sm:$0xff]
      %v1451 = vld [vmem:[#allocation5 + $0xe0] sm:$0xff]
      %v1452 = vld [vmem:[#allocation5 + $0xe8] sm:$0xff]
      %v1453 = vld [vmem:[#allocation5 + $0xf0] sm:$0xff]
      %v1454 = vld [vmem:[#allocation5 + $0xf8] sm:$0xff]
      %v1455 = vld [vmem:[%s2] sm:$0xff]
      %v1456 = vld [vmem:[%s2 + $0x8] sm:$0xff]
      %v1457 = vld [vmem:[%s2 + $0x10] sm:$0xff]
      %v1458 = vld [vmem:[%s2 + $0x18] sm:$0xff]
      %v1459 = vld [vmem:[%s2 + $0x20] sm:$0xff]
      %v1460 = vld [vmem:[%s2 + $0x28] sm:$0xff]
      %v1461 = vld [vmem:[%s2 + $0x30] sm:$0xff]
      %v1462 = vld [vmem:[%s2 + $0x38] sm:$0xff]
      %v1463 = vld [vmem:[%s2 + $0x40] sm:$0xff]
      %v1464 = vld [vmem:[%s2 + $0x48] sm:$0xff]
      %v1465 = vld [vmem:[%s2 + $0x50] sm:$0xff]
      %v1466 = vld [vmem:[%s2 + $0x58] sm:$0xff]
      %v1467 = vld [vmem:[%s2 + $0x60] sm:$0xff]
      %v1468 = vld [vmem:[%s2 + $0x68] sm:$0xff]
      %v1469 = vld [vmem:[%s2 + $0x70] sm:$0xff]
      %v1470 = vld [vmem:[%s2 + $0x78] sm:$0xff]
      %v1471 = vld [vmem:[%s2 + $0x80] sm:$0xff]
      %v1472 = vld [vmem:[%s2 + $0x88] sm:$0xff]
      %v1473 = vld [vmem:[%s2 + $0x90] sm:$0xff]
      %v1474 = vld [vmem:[%s2 + $0x98] sm:$0xff]
      %v1475 = vld [vmem:[%s2 + $0xa0] sm:$0xff]
      %v1476 = vld [vmem:[%s2 + $0xa8] sm:$0xff]
      %v1477 = vld [vmem:[%s2 + $0xb0] sm:$0xff]
      %v1478 = vld [vmem:[%s2 + $0xb8] sm:$0xff]
      %v1479 = vld [vmem:[%s2 + $0xc0] sm:$0xff]
      %v1480 = vld [vmem:[%s2 + $0xc8] sm:$0xff]
      %v1481 = vld [vmem:[%s2 + $0xd0] sm:$0xff]
      %v1482 = vld [vmem:[%s2 + $0xd8] sm:$0xff]
      %v1483 = vld [vmem:[%s2 + $0xe0] sm:$0xff]
      %v1484 = vld [vmem:[%s2 + $0xe8] sm:$0xff]
      %v1485 = vld [vmem:[%s2 + $0xf0] sm:$0xff]
      %v1486 = vld [vmem:[%s2 + $0xf8] sm:$0xff]
      %v1487 = vld [vmem:[%s2 + $0x100] sm:$0xff]
      %v1488 = vld [vmem:[%s2 + $0x108] sm:$0xff]
      %v1489 = vld [vmem:[%s2 + $0x110] sm:$0xff]
      %v1490 = vld [vmem:[%s2 + $0x118] sm:$0xff]
      %v1491 = vld [vmem:[%s2 + $0x120] sm:$0xff]
      %v1492 = vld [vmem:[%s2 + $0x128] sm:$0xff]
      %v1493 = vld [vmem:[%s2 + $0x130] sm:$0xff]
      %v1494 = vld [vmem:[%s2 + $0x138] sm:$0xff]
      %v1495 = vld [vmem:[%s2 + $0x140] sm:$0xff]
      %v1496 = vld [vmem:[%s2 + $0x148] sm:$0xff]
      %v1497 = vld [vmem:[%s2 + $0x150] sm:$0xff]
      %v1498 = vld [vmem:[%s2 + $0x158] sm:$0xff]
      %v1499 = vld [vmem:[%s2 + $0x160] sm:$0xff]
      %v1500 = vld [vmem:[%s2 + $0x168] sm:$0xff]
      %v1501 = vld [vmem:[%s2 + $0x170] sm:$0xff]
      %v1502 = vld [vmem:[%s2 + $0x178] sm:$0xff]
      %v1503 = vld [vmem:[#allocation4] sm:$0xff]
      %v1504 = vld [vmem:[#allocation4 + $0x8] sm:$0xff]
      %v1505 = vld [vmem:[#allocation4 + $0x10] sm:$0xff]
      %v1506 = vld [vmem:[#allocation4 + $0x18] sm:$0xff]
      %v1507 = vld [vmem:[#allocation4 + $0x20] sm:$0xff]
      %v1508 = vld [vmem:[#allocation4 + $0x28] sm:$0xff]
      %v1509 = vld [vmem:[#allocation4 + $0x30] sm:$0xff]
      %v1510 = vld [vmem:[#allocation4 + $0x38] sm:$0xff]
      %v1511 = vld [vmem:[#allocation4 + $0x40] sm:$0xff]
      %v1512 = vld [vmem:[#allocation4 + $0x48] sm:$0xff]
      %v1513 = vld [vmem:[#allocation4 + $0x50] sm:$0xff]
      %v1514 = vld [vmem:[#allocation4 + $0x58] sm:$0xff]
      %v1515 = vld [vmem:[#allocation4 + $0x60] sm:$0xff]
      %v1516 = vld [vmem:[#allocation4 + $0x68] sm:$0xff]
      %v1517 = vld [vmem:[#allocation4 + $0x70] sm:$0xff]
      %v1518 = vld [vmem:[#allocation4 + $0x78] sm:$0xff]
      %v1519 = vld [vmem:[#allocation4 + $0x80] sm:$0xff]
      %v1520 = vld [vmem:[#allocation4 + $0x88] sm:$0xff]
      %v1521 = vld [vmem:[#allocation4 + $0x90] sm:$0xff]
      %v1522 = vld [vmem:[#allocation4 + $0x98] sm:$0xff]
      %v1523 = vld [vmem:[#allocation4 + $0xa0] sm:$0xff]
      %v1524 = vld [vmem:[#allocation4 + $0xa8] sm:$0xff]
      %v1525 = vld [vmem:[#allocation4 + $0xb0] sm:$0xff]
      %v1526 = vld [vmem:[#allocation4 + $0xb8] sm:$0xff]
      %v1527 = vld [vmem:[#allocation4 + $0xc0] sm:$0xff]
      %v1528 = vld [vmem:[#allocation4 + $0xc8] sm:$0xff]
      %v1529 = vld [vmem:[#allocation4 + $0xd0] sm:$0xff]
      %v1530 = vld [vmem:[#allocation4 + $0xd8] sm:$0xff]
      %v1531 = vld [vmem:[#allocation4 + $0xe0] sm:$0xff]
      %v1532 = vld [vmem:[#allocation4 + $0xe8] sm:$0xff]
      %v1533 = vld [vmem:[#allocation4 + $0xf0] sm:$0xff]
      %v1534 = vld [vmem:[#allocation4 + $0xf8] sm:$0xff]
      %v1535 = vld [vmem:[#allocation4 + $0x100] sm:$0xff]
      %v1536 = vld [vmem:[#allocation4 + $0x108] sm:$0xff]
      %v1537 = vld [vmem:[#allocation4 + $0x110] sm:$0xff]
      %v1538 = vld [vmem:[#allocation4 + $0x118] sm:$0xff]
      %v1539 = vld [vmem:[#allocation4 + $0x120] sm:$0xff]
      %v1540 = vld [vmem:[#allocation4 + $0x128] sm:$0xff]
      %v1541 = vld [vmem:[#allocation4 + $0x130] sm:$0xff]
      %v1542 = vld [vmem:[#allocation4 + $0x138] sm:$0xff]
      %v1543 = vld [vmem:[#allocation4 + $0x140] sm:$0xff]
      %v1544 = vld [vmem:[#allocation4 + $0x148] sm:$0xff]
      %v1545 = vld [vmem:[#allocation4 + $0x150] sm:$0xff]
      %v1546 = vld [vmem:[#allocation4 + $0x158] sm:$0xff]
      %v1547 = vld [vmem:[#allocation4 + $0x160] sm:$0xff]
      %v1548 = vld [vmem:[#allocation4 + $0x168] sm:$0xff]
      %v1549 = vld [vmem:[#allocation4 + $0x170] sm:$0xff]
      %v1550 = vld [vmem:[#allocation4 + $0x178] sm:$0xff]
      %v1551 = vld [vmem:[#allocation4 + $0x180] sm:$0xff]
      %v1552 = vld [vmem:[#allocation4 + $0x188] sm:$0xff]
      %v1553 = vld [vmem:[#allocation4 + $0x190] sm:$0xff]
      %v1554 = vld [vmem:[#allocation4 + $0x198] sm:$0xff]
      %v1555 = vld [vmem:[#allocation4 + $0x1a0] sm:$0xff]
      %v1556 = vld [vmem:[#allocation4 + $0x1a8] sm:$0xff]
      %v1557 = vld [vmem:[#allocation4 + $0x1b0] sm:$0xff]
      %v1558 = vld [vmem:[#allocation4 + $0x1b8] sm:$0xff]
      %v1559 = vld [vmem:[#allocation4 + $0x1c0] sm:$0xff]
      %v1560 = vld [vmem:[#allocation4 + $0x1c8] sm:$0xff]
      %v1561 = vld [vmem:[#allocation4 + $0x1d0] sm:$0xff]
      %v1562 = vld [vmem:[#allocation4 + $0x1d8] sm:$0xff]
      %v1563 = vld [vmem:[#allocation4 + $0x1e0] sm:$0xff]
      %v1564 = vld [vmem:[#allocation4 + $0x1e8] sm:$0xff]
      %v1565 = vld [vmem:[#allocation4 + $0x1f0] sm:$0xff]
      %v1566 = vld [vmem:[#allocation4 + $0x1f8] sm:$0xff]
      %v1567 = vld [vmem:[#allocation4 + $0x200] sm:$0xff]
      %v1568 = vld [vmem:[#allocation4 + $0x208] sm:$0xff]
      %v1569 = vld [vmem:[#allocation4 + $0x210] sm:$0xff]
      %v1570 = vld [vmem:[#allocation4 + $0x218] sm:$0xff]
      %v1571 = vld [vmem:[#allocation4 + $0x220] sm:$0xff]
      %v1572 = vld [vmem:[#allocation4 + $0x228] sm:$0xff]
      %v1573 = vld [vmem:[#allocation4 + $0x230] sm:$0xff]
      %v1574 = vld [vmem:[#allocation4 + $0x238] sm:$0xff]
      %v1576 = vsel %vm551, %v1457, 0
      %v1579 = vsel %vm551, %v1460, 0
      %v1582 = vsel %vm551, %v1463, 0
      %v1585 = vsel %vm551, %v1466, 0
      %v1588 = vsel %vm551, %v1469, 0
      %v1591 = vsel %vm551, %v1472, 0
      %v1594 = vsel %vm551, %v1475, 0
      %v1597 = vsel %vm551, %v1478, 0
      %v1600 = vsel %vm551, %v1481, 0
      %v1603 = vsel %vm551, %v1484, 0
      %v1606 = vsel %vm551, %v1487, 0
      %v1609 = vsel %vm551, %v1490, 0
      %v1612 = vsel %vm551, %v1493, 0
      %v1615 = vsel %vm551, %v1496, 0
      %v1618 = vsel %vm551, %v1499, 0
      %v1621 = vsel %vm551, %v1502, 0
      %1623 = vmatpush.msra.mxu0 %v1533
      %1624 = vmatpush.msra.mxu0 %v1531
      %1625 = vmatpush.msra.mxu0 %v1529
      %1626 = vmatpush.msra.mxu0 %v1527
      %1627 = vmatpush.msra.mxu0 %v1525
      %1628 = vmatpush.msra.mxu0 %v1523
      %1629 = vmatpush.msra.mxu0 %v1521
      %1630 = vmatpush.msra.mxu0 %v1519
      %1631 = vmatpush.msra.mxu0 %v1517
      %1632 = vmatpush.msra.mxu0 %v1515
      %1633 = vmatpush.msra.mxu0 %v1513
      %1634 = vmatpush.msra.mxu0 %v1511
      %1635 = vmatpush.msra.mxu0 %v1509
      %1636 = vmatpush.msra.mxu0 %v1507
      %1637 = vmatpush.msra.mxu0 %v1505
      %1638 = vmatpush.msra.mxu0 %v1503
      %1639 = vmatmul.f32.gmra.mxu0 %v1455
      %v1640 = vpop.f32.mrf.mxu0
      %v1641 = vadd.f32 0.0, %v1640
      %1642 = vmatmul.f32.gmra.mxu0 %v1458
      %v1643 = vpop.f32.mrf.mxu0
      %v1644 = vadd.f32 0.0, %v1643
      %1645 = vmatmul.f32.gmra.mxu0 %v1461
      %v1646 = vpop.f32.mrf.mxu0
      %v1647 = vadd.f32 0.0, %v1646
      %1648 = vmatmul.f32.gmra.mxu0 %v1464
      %v1649 = vpop.f32.mrf.mxu0
      %v1650 = vadd.f32 0.0, %v1649
      %1651 = vmatmul.f32.gmra.mxu0 %v1467
      %v1652 = vpop.f32.mrf.mxu0
      %v1653 = vadd.f32 0.0, %v1652
      %1654 = vmatmul.f32.gmra.mxu0 %v1470
      %v1655 = vpop.f32.mrf.mxu0
      %v1656 = vadd.f32 0.0, %v1655
      %1657 = vmatmul.f32.gmra.mxu0 %v1473
      %v1658 = vpop.f32.mrf.mxu0
      %v1659 = vadd.f32 0.0, %v1658
      %1660 = vmatmul.f32.gmra.mxu0 %v1476
      %v1661 = vpop.f32.mrf.mxu0
      %v1662 = vadd.f32 0.0, %v1661
      %1663 = vmatmul.f32.gmra.mxu0 %v1479
      %v1664 = vpop.f32.mrf.mxu0
      %v1665 = vadd.f32 0.0, %v1664
      %1666 = vmatmul.f32.gmra.mxu0 %v1482
      %v1667 = vpop.f32.mrf.mxu0
      %v1668 = vadd.f32 0.0, %v1667
      %1669 = vmatmul.f32.gmra.mxu0 %v1485
      %v1670 = vpop.f32.mrf.mxu0
      %v1671 = vadd.f32 0.0, %v1670
      %1672 = vmatmul.f32.gmra.mxu0 %v1488
      %v1673 = vpop.f32.mrf.mxu0
      %v1674 = vadd.f32 0.0, %v1673
      %1675 = vmatmul.f32.gmra.mxu0 %v1491
      %v1676 = vpop.f32.mrf.mxu0
      %v1677 = vadd.f32 0.0, %v1676
      %1678 = vmatmul.f32.gmra.mxu0 %v1494
      %v1679 = vpop.f32.mrf.mxu0
      %v1680 = vadd.f32 0.0, %v1679
      %1681 = vmatmul.f32.gmra.mxu0 %v1497
      %v1682 = vpop.f32.mrf.mxu0
      %v1683 = vadd.f32 0.0, %v1682
      %1684 = vmatmul.f32.gmra.mxu0 %v1500
      %v1685 = vpop.f32.mrf.mxu0
      %v1686 = vadd.f32 0.0, %v1685
      %1687 = vdwg.mxu0
      %1688 = vmatpush.msra.mxu0 %v1565
      %1689 = vmatpush.msra.mxu0 %v1563
      %1690 = vmatpush.msra.mxu0 %v1561
      %1691 = vmatpush.msra.mxu0 %v1559
      %1692 = vmatpush.msra.mxu0 %v1557
      %1693 = vmatpush.msra.mxu0 %v1555
      %1694 = vmatpush.msra.mxu0 %v1553
      %1695 = vmatpush.msra.mxu0 %v1551
      %1696 = vmatpush.msra.mxu0 %v1549
      %1697 = vmatpush.msra.mxu0 %v1547
      %1698 = vmatpush.msra.mxu0 %v1545
      %1699 = vmatpush.msra.mxu0 %v1543
      %1700 = vmatpush.msra.mxu0 %v1541
      %1701 = vmatpush.msra.mxu0 %v1539
      %1702 = vmatpush.msra.mxu0 %v1537
      %1703 = vmatpush.msra.mxu0 %v1535
      %1704 = vmatmul.f32.gmra.mxu0 %v1456
      %v1705 = vpop.f32.mrf.mxu0
      %v1706 = vadd.f32 %v1641, %v1705
      %1707 = vmatmul.f32.gmra.mxu0 %v1459
      %v1708 = vpop.f32.mrf.mxu0
      %v1709 = vadd.f32 %v1644, %v1708
      %1710 = vmatmul.f32.gmra.mxu0 %v1462
      %v1711 = vpop.f32.mrf.mxu0
      %v1712 = vadd.f32 %v1647, %v1711
      %1713 = vmatmul.f32.gmra.mxu0 %v1465
      %v1714 = vpop.f32.mrf.mxu0
      %v1715 = vadd.f32 %v1650, %v1714
      %1716 = vmatmul.f32.gmra.mxu0 %v1468
      %v1717 = vpop.f32.mrf.mxu0
      %v1718 = vadd.f32 %v1653, %v1717
      %1719 = vmatmul.f32.gmra.mxu0 %v1471
      %v1720 = vpop.f32.mrf.mxu0
      %v1721 = vadd.f32 %v1656, %v1720
      %1722 = vmatmul.f32.gmra.mxu0 %v1474
      %v1723 = vpop.f32.mrf.mxu0
      %v1724 = vadd.f32 %v1659, %v1723
      %1725 = vmatmul.f32.gmra.mxu0 %v1477
      %v1726 = vpop.f32.mrf.mxu0
      %v1727 = vadd.f32 %v1662, %v1726
      %1728 = vmatmul.f32.gmra.mxu0 %v1480
      %v1729 = vpop.f32.mrf.mxu0
      %v1730 = vadd.f32 %v1665, %v1729
      %1731 = vmatmul.f32.gmra.mxu0 %v1483
      %v1732 = vpop.f32.mrf.mxu0
      %v1733 = vadd.f32 %v1668, %v1732
      %1734 = vmatmul.f32.gmra.mxu0 %v1486
      %v1735 = vpop.f32.mrf.mxu0
      %v1736 = vadd.f32 %v1671, %v1735
      %1737 = vmatmul.f32.gmra.mxu0 %v1489
      %v1738 = vpop.f32.mrf.mxu0
      %v1739 = vadd.f32 %v1674, %v1738
      %1740 = vmatmul.f32.gmra.mxu0 %v1492
      %v1741 = vpop.f32.mrf.mxu0
      %v1742 = vadd.f32 %v1677, %v1741
      %1743 = vmatmul.f32.gmra.mxu0 %v1495
      %v1744 = vpop.f32.mrf.mxu0
      %v1745 = vadd.f32 %v1680, %v1744
      %1746 = vmatmul.f32.gmra.mxu0 %v1498
      %v1747 = vpop.f32.mrf.mxu0
      %v1748 = vadd.f32 %v1683, %v1747
      %1749 = vmatmul.f32.gmra.mxu0 %v1501
      %v1750 = vpop.f32.mrf.mxu0
      %v1751 = vadd.f32 %v1686, %v1750
      %1752 = vdwg.mxu0
      %1753 = vmatpush.msra.mxu0 0.0
      %1754 = vmatpush.msra.mxu0 0.0
      %1755 = vmatpush.msra.mxu0 0.0
      %1756 = vmatpush.msra.mxu0 0.0
      %1757 = vmatpush.msra.mxu0 0.0
      %1758 = vmatpush.msra.mxu0 0.0
      %1759 = vmatpush.msra.mxu0 0.0
      %1760 = vmatpush.msra.mxu0 0.0
      %1761 = vmatpush.msra.mxu0 0.0
      %1762 = vmatpush.msra.mxu0 0.0
      %1763 = vmatpush.msra.mxu0 0.0
      %1764 = vmatpush.msra.mxu0 0.0
      %1765 = vmatpush.msra.mxu0 %v1573
      %1766 = vmatpush.msra.mxu0 %v1571
      %1767 = vmatpush.msra.mxu0 %v1569
      %1768 = vmatpush.msra.mxu0 %v1567
      %1769 = vmatmul.f32.gmra.mxu0 %v1576
      %v1770 = vpop.f32.mrf.mxu0
      %v1771 = vadd.f32 %v1706, %v1770
      %1772 = vmatmul.f32.gmra.mxu0 %v1579
      %v1773 = vpop.f32.mrf.mxu0
      %v1774 = vadd.f32 %v1709, %v1773
      %1775 = vmatmul.f32.gmra.mxu0 %v1582
      %v1776 = vpop.f32.mrf.mxu0
      %v1777 = vadd.f32 %v1712, %v1776
      %1778 = vmatmul.f32.gmra.mxu0 %v1585
      %v1779 = vpop.f32.mrf.mxu0
      %v1780 = vadd.f32 %v1715, %v1779
      %1781 = vmatmul.f32.gmra.mxu0 %v1588
      %v1782 = vpop.f32.mrf.mxu0
      %v1783 = vadd.f32 %v1718, %v1782
      %1784 = vmatmul.f32.gmra.mxu0 %v1591
      %v1785 = vpop.f32.mrf.mxu0
      %v1786 = vadd.f32 %v1721, %v1785
      %1787 = vmatmul.f32.gmra.mxu0 %v1594
      %v1788 = vpop.f32.mrf.mxu0
      %v1789 = vadd.f32 %v1724, %v1788
      %1790 = vmatmul.f32.gmra.mxu0 %v1597
      %v1791 = vpop.f32.mrf.mxu0
      %v1792 = vadd.f32 %v1727, %v1791
      %1793 = vmatmul.f32.gmra.mxu0 %v1600
      %v1794 = vpop.f32.mrf.mxu0
      %v1795 = vadd.f32 %v1730, %v1794
      %1796 = vmatmul.f32.gmra.mxu0 %v1603
      %v1797 = vpop.f32.mrf.mxu0
      %v1798 = vadd.f32 %v1733, %v1797
      %1799 = vmatmul.f32.gmra.mxu0 %v1606
      %v1800 = vpop.f32.mrf.mxu0
      %v1801 = vadd.f32 %v1736, %v1800
      %1802 = vmatmul.f32.gmra.mxu0 %v1609
      %v1803 = vpop.f32.mrf.mxu0
      %v1804 = vadd.f32 %v1739, %v1803
      %1805 = vmatmul.f32.gmra.mxu0 %v1612
      %v1806 = vpop.f32.mrf.mxu0
      %v1807 = vadd.f32 %v1742, %v1806
      %1808 = vmatmul.f32.gmra.mxu0 %v1615
      %v1809 = vpop.f32.mrf.mxu0
      %v1810 = vadd.f32 %v1745, %v1809
      %1811 = vmatmul.f32.gmra.mxu0 %v1618
      %v1812 = vpop.f32.mrf.mxu0
      %v1813 = vadd.f32 %v1748, %v1812
      %1814 = vmatmul.f32.gmra.mxu0 %v1621
      %v1815 = vpop.f32.mrf.mxu0
      %v1816 = vadd.f32 %v1751, %v1815
      %1817 = vdwg.mxu0
      %1818 = vmatpush.msra.mxu0 %v1534
      %1819 = vmatpush.msra.mxu0 %v1532
      %1820 = vmatpush.msra.mxu0 %v1530
      %1821 = vmatpush.msra.mxu0 %v1528
      %1822 = vmatpush.msra.mxu0 %v1526
      %1823 = vmatpush.msra.mxu0 %v1524
      %1824 = vmatpush.msra.mxu0 %v1522
      %1825 = vmatpush.msra.mxu0 %v1520
      %1826 = vmatpush.msra.mxu0 %v1518
      %1827 = vmatpush.msra.mxu0 %v1516
      %1828 = vmatpush.msra.mxu0 %v1514
      %1829 = vmatpush.msra.mxu0 %v1512
      %1830 = vmatpush.msra.mxu0 %v1510
      %1831 = vmatpush.msra.mxu0 %v1508
      %1832 = vmatpush.msra.mxu0 %v1506
      %1833 = vmatpush.msra.mxu0 %v1504
      %1834 = vmatmul.f32.gmra.mxu0 %v1455
      %v1835 = vpop.f32.mrf.mxu0
      %v1836 = vadd.f32 0.0, %v1835
      %1837 = vmatmul.f32.gmra.mxu0 %v1458
      %v1838 = vpop.f32.mrf.mxu0
      %v1839 = vadd.f32 0.0, %v1838
      %1840 = vmatmul.f32.gmra.mxu0 %v1461
      %v1841 = vpop.f32.mrf.mxu0
      %v1842 = vadd.f32 0.0, %v1841
      %1843 = vmatmul.f32.gmra.mxu0 %v1464
      %v1844 = vpop.f32.mrf.mxu0
      %v1845 = vadd.f32 0.0, %v1844
      %1846 = vmatmul.f32.gmra.mxu0 %v1467
      %v1847 = vpop.f32.mrf.mxu0
      %v1848 = vadd.f32 0.0, %v1847
      %1849 = vmatmul.f32.gmra.mxu0 %v1470
      %v1850 = vpop.f32.mrf.mxu0
      %v1851 = vadd.f32 0.0, %v1850
      %1852 = vmatmul.f32.gmra.mxu0 %v1473
      %v1853 = vpop.f32.mrf.mxu0
      %v1854 = vadd.f32 0.0, %v1853
      %1855 = vmatmul.f32.gmra.mxu0 %v1476
      %v1856 = vpop.f32.mrf.mxu0
      %v1857 = vadd.f32 0.0, %v1856
      %1858 = vmatmul.f32.gmra.mxu0 %v1479
      %v1859 = vpop.f32.mrf.mxu0
      %v1860 = vadd.f32 0.0, %v1859
      %1861 = vmatmul.f32.gmra.mxu0 %v1482
      %v1862 = vpop.f32.mrf.mxu0
      %v1863 = vadd.f32 0.0, %v1862
      %1864 = vmatmul.f32.gmra.mxu0 %v1485
      %v1865 = vpop.f32.mrf.mxu0
      %v1866 = vadd.f32 0.0, %v1865
      %1867 = vmatmul.f32.gmra.mxu0 %v1488
      %v1868 = vpop.f32.mrf.mxu0
      %v1869 = vadd.f32 0.0, %v1868
      %1870 = vmatmul.f32.gmra.mxu0 %v1491
      %v1871 = vpop.f32.mrf.mxu0
      %v1872 = vadd.f32 0.0, %v1871
      %1873 = vmatmul.f32.gmra.mxu0 %v1494
      %v1874 = vpop.f32.mrf.mxu0
      %v1875 = vadd.f32 0.0, %v1874
      %1876 = vmatmul.f32.gmra.mxu0 %v1497
      %v1877 = vpop.f32.mrf.mxu0
      %v1878 = vadd.f32 0.0, %v1877
      %1879 = vmatmul.f32.gmra.mxu0 %v1500
      %v1880 = vpop.f32.mrf.mxu0
      %v1881 = vadd.f32 0.0, %v1880
      %1882 = vdwg.mxu0
      %1883 = vmatpush.msra.mxu0 %v1566
      %1884 = vmatpush.msra.mxu0 %v1564
      %1885 = vmatpush.msra.mxu0 %v1562
      %1886 = vmatpush.msra.mxu0 %v1560
      %1887 = vmatpush.msra.mxu0 %v1558
      %1888 = vmatpush.msra.mxu0 %v1556
      %1889 = vmatpush.msra.mxu0 %v1554
      %1890 = vmatpush.msra.mxu0 %v1552
      %1891 = vmatpush.msra.mxu0 %v1550
      %1892 = vmatpush.msra.mxu0 %v1548
      %1893 = vmatpush.msra.mxu0 %v1546
      %1894 = vmatpush.msra.mxu0 %v1544
      %1895 = vmatpush.msra.mxu0 %v1542
      %1896 = vmatpush.msra.mxu0 %v1540
      %1897 = vmatpush.msra.mxu0 %v1538
      %1898 = vmatpush.msra.mxu0 %v1536
      %1899 = vmatmul.f32.gmra.mxu0 %v1456
      %v1900 = vpop.f32.mrf.mxu0
      %v1901 = vadd.f32 %v1836, %v1900
      %1902 = vmatmul.f32.gmra.mxu0 %v1459
      %v1903 = vpop.f32.mrf.mxu0
      %v1904 = vadd.f32 %v1839, %v1903
      %1905 = vmatmul.f32.gmra.mxu0 %v1462
      %v1906 = vpop.f32.mrf.mxu0
      %v1907 = vadd.f32 %v1842, %v1906
      %1908 = vmatmul.f32.gmra.mxu0 %v1465
      %v1909 = vpop.f32.mrf.mxu0
      %v1910 = vadd.f32 %v1845, %v1909
      %1911 = vmatmul.f32.gmra.mxu0 %v1468
      %v1912 = vpop.f32.mrf.mxu0
      %v1913 = vadd.f32 %v1848, %v1912
      %1914 = vmatmul.f32.gmra.mxu0 %v1471
      %v1915 = vpop.f32.mrf.mxu0
      %v1916 = vadd.f32 %v1851, %v1915
      %1917 = vmatmul.f32.gmra.mxu0 %v1474
      %v1918 = vpop.f32.mrf.mxu0
      %v1919 = vadd.f32 %v1854, %v1918
      %1920 = vmatmul.f32.gmra.mxu0 %v1477
      %v1921 = vpop.f32.mrf.mxu0
      %v1922 = vadd.f32 %v1857, %v1921
      %1923 = vmatmul.f32.gmra.mxu0 %v1480
      %v1924 = vpop.f32.mrf.mxu0
      %v1925 = vadd.f32 %v1860, %v1924
      %1926 = vmatmul.f32.gmra.mxu0 %v1483
      %v1927 = vpop.f32.mrf.mxu0
      %v1928 = vadd.f32 %v1863, %v1927
      %1929 = vmatmul.f32.gmra.mxu0 %v1486
      %v1930 = vpop.f32.mrf.mxu0
      %v1931 = vadd.f32 %v1866, %v1930
      %1932 = vmatmul.f32.gmra.mxu0 %v1489
      %v1933 = vpop.f32.mrf.mxu0
      %v1934 = vadd.f32 %v1869, %v1933
      %1935 = vmatmul.f32.gmra.mxu0 %v1492
      %v1936 = vpop.f32.mrf.mxu0
      %v1937 = vadd.f32 %v1872, %v1936
      %1938 = vmatmul.f32.gmra.mxu0 %v1495
      %v1939 = vpop.f32.mrf.mxu0
      %v1940 = vadd.f32 %v1875, %v1939
      %1941 = vmatmul.f32.gmra.mxu0 %v1498
      %v1942 = vpop.f32.mrf.mxu0
      %v1943 = vadd.f32 %v1878, %v1942
      %1944 = vmatmul.f32.gmra.mxu0 %v1501
      %v1945 = vpop.f32.mrf.mxu0
      %v1946 = vadd.f32 %v1881, %v1945
      %1947 = vdwg.mxu0
      %1948 = vmatpush.msra.mxu0 0.0
      %1949 = vmatpush.msra.mxu0 0.0
      %1950 = vmatpush.msra.mxu0 0.0
      %1951 = vmatpush.msra.mxu0 0.0
      %1952 = vmatpush.msra.mxu0 0.0
      %1953 = vmatpush.msra.mxu0 0.0
      %1954 = vmatpush.msra.mxu0 0.0
      %1955 = vmatpush.msra.mxu0 0.0
      %1956 = vmatpush.msra.mxu0 0.0
      %1957 = vmatpush.msra.mxu0 0.0
      %1958 = vmatpush.msra.mxu0 0.0
      %1959 = vmatpush.msra.mxu0 0.0
      %1960 = vmatpush.msra.mxu0 %v1574
      %1961 = vmatpush.msra.mxu0 %v1572
      %1962 = vmatpush.msra.mxu0 %v1570
      %1963 = vmatpush.msra.mxu0 %v1568
      %1964 = vmatmul.f32.gmra.mxu0 %v1576
      %v1965 = vpop.f32.mrf.mxu0
      %v1966 = vadd.f32 %v1901, %v1965
      %1967 = vmatmul.f32.gmra.mxu0 %v1579
      %v1968 = vpop.f32.mrf.mxu0
      %v1969 = vadd.f32 %v1904, %v1968
      %1970 = vmatmul.f32.gmra.mxu0 %v1582
      %v1971 = vpop.f32.mrf.mxu0
      %v1972 = vadd.f32 %v1907, %v1971
      %1973 = vmatmul.f32.gmra.mxu0 %v1585
      %v1974 = vpop.f32.mrf.mxu0
      %v1975 = vadd.f32 %v1910, %v1974
      %1976 = vmatmul.f32.gmra.mxu0 %v1588
      %v1977 = vpop.f32.mrf.mxu0
      %v1978 = vadd.f32 %v1913, %v1977
      %1979 = vmatmul.f32.gmra.mxu0 %v1591
      %v1980 = vpop.f32.mrf.mxu0
      %v1981 = vadd.f32 %v1916, %v1980
      %1982 = vmatmul.f32.gmra.mxu0 %v1594
      %v1983 = vpop.f32.mrf.mxu0
      %v1984 = vadd.f32 %v1919, %v1983
      %1985 = vmatmul.f32.gmra.mxu0 %v1597
      %v1986 = vpop.f32.mrf.mxu0
      %v1987 = vadd.f32 %v1922, %v1986
      %1988 = vmatmul.f32.gmra.mxu0 %v1600
      %v1989 = vpop.f32.mrf.mxu0
      %v1990 = vadd.f32 %v1925, %v1989
      %1991 = vmatmul.f32.gmra.mxu0 %v1603
      %v1992 = vpop.f32.mrf.mxu0
      %v1993 = vadd.f32 %v1928, %v1992
      %1994 = vmatmul.f32.gmra.mxu0 %v1606
      %v1995 = vpop.f32.mrf.mxu0
      %v1996 = vadd.f32 %v1931, %v1995
      %1997 = vmatmul.f32.gmra.mxu0 %v1609
      %v1998 = vpop.f32.mrf.mxu0
      %v1999 = vadd.f32 %v1934, %v1998
      %2000 = vmatmul.f32.gmra.mxu0 %v1612
      %v2001 = vpop.f32.mrf.mxu0
      %v2002 = vadd.f32 %v1937, %v2001
      %2003 = vmatmul.f32.gmra.mxu0 %v1615
      %v2004 = vpop.f32.mrf.mxu0
      %v2005 = vadd.f32 %v1940, %v2004
      %2006 = vmatmul.f32.gmra.mxu0 %v1618
      %v2007 = vpop.f32.mrf.mxu0
      %v2008 = vadd.f32 %v1943, %v2007
      %2009 = vmatmul.f32.gmra.mxu0 %v1621
      %v2010 = vpop.f32.mrf.mxu0
      %v2011 = vadd.f32 %v1946, %v2010
      %2012 = vdwg.mxu0
      %v2013 = vadd.f32 %v1423, %v1771
      %v2014 = vadd.f32 %v1424, %v1966
      %v2015 = vadd.f32 %v1425, %v1774
      %v2016 = vadd.f32 %v1426, %v1969
      %v2017 = vadd.f32 %v1427, %v1777
      %v2018 = vadd.f32 %v1428, %v1972
      %v2019 = vadd.f32 %v1429, %v1780
      %v2020 = vadd.f32 %v1430, %v1975
      %v2021 = vadd.f32 %v1431, %v1783
      %v2022 = vadd.f32 %v1432, %v1978
      %v2023 = vadd.f32 %v1433, %v1786
      %v2024 = vadd.f32 %v1434, %v1981
      %v2025 = vadd.f32 %v1435, %v1789
      %v2026 = vadd.f32 %v1436, %v1984
      %v2027 = vadd.f32 %v1437, %v1792
      %v2028 = vadd.f32 %v1438, %v1987
      %v2029 = vadd.f32 %v1439, %v1795
      %v2030 = vadd.f32 %v1440, %v1990
      %v2031 = vadd.f32 %v1441, %v1798
      %v2032 = vadd.f32 %v1442, %v1993
      %v2033 = vadd.f32 %v1443, %v1801
      %v2034 = vadd.f32 %v1444, %v1996
      %v2035 = vadd.f32 %v1445, %v1804
      %v2036 = vadd.f32 %v1446, %v1999
      %v2037 = vadd.f32 %v1447, %v1807
      %v2038 = vadd.f32 %v1448, %v2002
      %v2039 = vadd.f32 %v1449, %v1810
      %v2040 = vadd.f32 %v1450, %v2005
      %v2041 = vadd.f32 %v1451, %v1813
      %v2042 = vadd.f32 %v1452, %v2008
      %v2043 = vadd.f32 %v1453, %v1816
      %v2044 = vadd.f32 %v1454, %v2011
      %2045 = vst [vmem:[#allocation5] sm:$0xff] %v2013
      %2046 = vst [vmem:[#allocation5 + $0x8] sm:$0xff] %v2014
      %2047 = vst [vmem:[#allocation5 + $0x10] sm:$0xff] %v2015
      %2048 = vst [vmem:[#allocation5 + $0x18] sm:$0xff] %v2016
      %2049 = vst [vmem:[#allocation5 + $0x20] sm:$0xff] %v2017
      %2050 = vst [vmem:[#allocation5 + $0x28] sm:$0xff] %v2018
      %2051 = vst [vmem:[#allocation5 + $0x30] sm:$0xff] %v2019
      %2052 = vst [vmem:[#allocation5 + $0x38] sm:$0xff] %v2020
      %2053 = vst [vmem:[#allocation5 + $0x40] sm:$0xff] %v2021
      %2054 = vst [vmem:[#allocation5 + $0x48] sm:$0xff] %v2022
      %2055 = vst [vmem:[#allocation5 + $0x50] sm:$0xff] %v2023
      %2056 = vst [vmem:[#allocation5 + $0x58] sm:$0xff] %v2024
      %2057 = vst [vmem:[#allocation5 + $0x60] sm:$0xff] %v2025
      %2058 = vst [vmem:[#allocation5 + $0x68] sm:$0xff] %v2026
      %2059 = vst [vmem:[#allocation5 + $0x70] sm:$0xff] %v2027
      %2060 = vst [vmem:[#allocation5 + $0x78] sm:$0xff] %v2028
      %2061 = vst [vmem:[#allocation5 + $0x80] sm:$0xff] %v2029
      %2062 = vst [vmem:[#allocation5 + $0x88] sm:$0xff] %v2030
      %2063 = vst [vmem:[#allocation5 + $0x90] sm:$0xff] %v2031
      %2064 = vst [vmem:[#allocation5 + $0x98] sm:$0xff] %v2032
      %2065 = vst [vmem:[#allocation5 + $0xa0] sm:$0xff] %v2033
      %2066 = vst [vmem:[#allocation5 + $0xa8] sm:$0xff] %v2034
      %2067 = vst [vmem:[#allocation5 + $0xb0] sm:$0xff] %v2035
      %2068 = vst [vmem:[#allocation5 + $0xb8] sm:$0xff] %v2036
      %2069 = vst [vmem:[#allocation5 + $0xc0] sm:$0xff] %v2037
      %2070 = vst [vmem:[#allocation5 + $0xc8] sm:$0xff] %v2038
      %2071 = vst [vmem:[#allocation5 + $0xd0] sm:$0xff] %v2039
      %2072 = vst [vmem:[#allocation5 + $0xd8] sm:$0xff] %v2040
      %2073 = vst [vmem:[#allocation5 + $0xe0] sm:$0xff] %v2041
      %2074 = vst [vmem:[#allocation5 + $0xe8] sm:$0xff] %v2042
      %2075 = vst [vmem:[#allocation5 + $0xf0] sm:$0xff] %v2043
      %2076 = vst [vmem:[#allocation5 + $0xf8] sm:$0xff] %v2044
      %v2077 = vld [vmem:[#allocation5] sm:$0xff]
      %v2078 = vld [vmem:[#allocation5 + $0x8] sm:$0xff]
      %v2079 = vld [vmem:[#allocation5 + $0x10] sm:$0xff]
      %v2080 = vld [vmem:[#allocation5 + $0x18] sm:$0xff]
      %v2081 = vld [vmem:[#allocation5 + $0x20] sm:$0xff]
      %v2082 = vld [vmem:[#allocation5 + $0x28] sm:$0xff]
      %v2083 = vld [vmem:[#allocation5 + $0x30] sm:$0xff]
      %v2084 = vld [vmem:[#allocation5 + $0x38] sm:$0xff]
      %v2085 = vld [vmem:[%s3] sm:$0xff]
      %v2086 = vld [vmem:[%s3 + $0x8] sm:$0xff]
      %v2087 = vld [vmem:[%s3 + $0x10] sm:$0xff]
      %v2088 = vld [vmem:[%s3 + $0x18] sm:$0xff]
      %2090 = vset.pattern.permute.xlu0 0
      %2091 = vperm.xlu0 %2090, %v2085
      %v2092 = vpop.permute.xlu0 %2091
      %2095 = vset.pattern.permute.xlu0 0
      %2096 = vperm.xlu0 %2095, %v2086
      %v2097 = vpop.permute.xlu0 %2096
      %2100 = vset.pattern.permute.xlu0 0
      %2101 = vperm.xlu0 %2100, %v2087
      %v2102 = vpop.permute.xlu0 %2101
      %2105 = vset.pattern.permute.xlu0 0
      %2106 = vperm.xlu0 %2105, %v2088
      %v2107 = vpop.permute.xlu0 %2106
      %v2109 = vadd.f32 %v2077, %v2092
      %v2110 = vadd.f32 %v2078, %v2092
      %v2111 = vadd.f32 %v2079, %v2097
      %v2112 = vadd.f32 %v2080, %v2097
      %v2113 = vadd.f32 %v2081, %v2102
      %v2114 = vadd.f32 %v2082, %v2102
      %v2115 = vadd.f32 %v2083, %v2107
      %v2116 = vadd.f32 %v2084, %v2107
      %v2117 = vxor.u32 %v2109, 2147483648
      %v2118 = vxor.u32 %v2110, 2147483648
      %v2119 = vxor.u32 %v2111, 2147483648
      %v2120 = vxor.u32 %v2112, 2147483648
      %v2121 = vxor.u32 %v2113, 2147483648
      %v2122 = vxor.u32 %v2114, 2147483648
      %v2123 = vxor.u32 %v2115, 2147483648
      %v2124 = vxor.u32 %v2116, 2147483648
      %v2125 = vmul.f32 %v2117, 1.442695
      %v2126 = vpow.pop %v2125
      %v2127 = vmul.f32 %v2118, 1.442695
      %v2128 = vpow.pop %v2127
      %v2129 = vmul.f32 %v2119, 1.442695
      %v2130 = vpow.pop %v2129
      %v2131 = vmul.f32 %v2120, 1.442695
      %v2132 = vpow.pop %v2131
      %v2133 = vmul.f32 %v2121, 1.442695
      %v2134 = vpow.pop %v2133
      %v2135 = vmul.f32 %v2122, 1.442695
      %v2136 = vpow.pop %v2135
      %v2137 = vmul.f32 %v2123, 1.442695
      %v2138 = vpow.pop %v2137
      %v2139 = vmul.f32 %v2124, 1.442695
      %v2140 = vpow.pop %v2139
      %v2141 = vadd.f32 %v2126, 1.0
      %v2142 = vadd.f32 %v2128, 1.0
      %v2143 = vadd.f32 %v2130, 1.0
      %v2144 = vadd.f32 %v2132, 1.0
      %v2145 = vadd.f32 %v2134, 1.0
      %v2146 = vadd.f32 %v2136, 1.0
      %v2147 = vadd.f32 %v2138, 1.0
      %v2148 = vadd.f32 %v2140, 1.0
      %v2149 = vrcp.pop %v2141
      %v2150 = vmul.f32 %v2141, %v2149
      %v2151 = vsub.f32 1.0, %v2150
      %v2152 = vmul.f32 %v2149, %v2151
      %v2153 = vadd.f32 %v2149, %v2152
      %vm2154 = vweird.f32 %v2141
      %vm2155 = vweird.f32 %v2149
      %vm2156 = vmor %vm2154, %vm2155
      %v2157 = vsel %vm2156, %v2149, %v2153
      %v2158 = vand.u32 2147483647, %v2141
      %vm2159 = vcmp.eq.f32.partialorder %v2158, 8.507059e+37
      %v2160 = vand.u32 %v2141, 2147483648
      %v2161 = vor.u32 1.1754944e-38, %v2160
      %v2162 = vsel %vm2159, %v2161, %v2157
      %v2163 = vmul.f32 1.0, %v2162
      %v2164 = vrcp.pop %v2142
      %v2165 = vmul.f32 %v2142, %v2164
      %v2166 = vsub.f32 1.0, %v2165
      %v2167 = vmul.f32 %v2164, %v2166
      %v2168 = vadd.f32 %v2164, %v2167
      %vm2169 = vweird.f32 %v2142
      %vm2170 = vweird.f32 %v2164
      %vm2171 = vmor %vm2169, %vm2170
      %v2172 = vsel %vm2171, %v2164, %v2168
      %v2173 = vand.u32 2147483647, %v2142
      %vm2174 = vcmp.eq.f32.partialorder %v2173, 8.507059e+37
      %v2175 = vand.u32 %v2142, 2147483648
      %v2176 = vor.u32 1.1754944e-38, %v2175
      %v2177 = vsel %vm2174, %v2176, %v2172
      %v2178 = vmul.f32 1.0, %v2177
      %v2179 = vrcp.pop %v2143
      %v2180 = vmul.f32 %v2143, %v2179
      %v2181 = vsub.f32 1.0, %v2180
      %v2182 = vmul.f32 %v2179, %v2181
      %v2183 = vadd.f32 %v2179, %v2182
      %vm2184 = vweird.f32 %v2143
      %vm2185 = vweird.f32 %v2179
      %vm2186 = vmor %vm2184, %vm2185
      %v2187 = vsel %vm2186, %v2179, %v2183
      %v2188 = vand.u32 2147483647, %v2143
      %vm2189 = vcmp.eq.f32.partialorder %v2188, 8.507059e+37
      %v2190 = vand.u32 %v2143, 2147483648
      %v2191 = vor.u32 1.1754944e-38, %v2190
      %v2192 = vsel %vm2189, %v2191, %v2187
      %v2193 = vmul.f32 1.0, %v2192
      %v2194 = vrcp.pop %v2144
      %v2195 = vmul.f32 %v2144, %v2194
      %v2196 = vsub.f32 1.0, %v2195
      %v2197 = vmul.f32 %v2194, %v2196
      %v2198 = vadd.f32 %v2194, %v2197
      %vm2199 = vweird.f32 %v2144
      %vm2200 = vweird.f32 %v2194
      %vm2201 = vmor %vm2199, %vm2200
      %v2202 = vsel %vm2201, %v2194, %v2198
      %v2203 = vand.u32 2147483647, %v2144
      %vm2204 = vcmp.eq.f32.partialorder %v2203, 8.507059e+37
      %v2205 = vand.u32 %v2144, 2147483648
      %v2206 = vor.u32 1.1754944e-38, %v2205
      %v2207 = vsel %vm2204, %v2206, %v2202
      %v2208 = vmul.f32 1.0, %v2207
      %v2209 = vrcp.pop %v2145
      %v2210 = vmul.f32 %v2145, %v2209
      %v2211 = vsub.f32 1.0, %v2210
      %v2212 = vmul.f32 %v2209, %v2211
      %v2213 = vadd.f32 %v2209, %v2212
      %vm2214 = vweird.f32 %v2145
      %vm2215 = vweird.f32 %v2209
      %vm2216 = vmor %vm2214, %vm2215
      %v2217 = vsel %vm2216, %v2209, %v2213
      %v2218 = vand.u32 2147483647, %v2145
      %vm2219 = vcmp.eq.f32.partialorder %v2218, 8.507059e+37
      %v2220 = vand.u32 %v2145, 2147483648
      %v2221 = vor.u32 1.1754944e-38, %v2220
      %v2222 = vsel %vm2219, %v2221, %v2217
      %v2223 = vmul.f32 1.0, %v2222
      %v2224 = vrcp.pop %v2146
      %v2225 = vmul.f32 %v2146, %v2224
      %v2226 = vsub.f32 1.0, %v2225
      %v2227 = vmul.f32 %v2224, %v2226
      %v2228 = vadd.f32 %v2224, %v2227
      %vm2229 = vweird.f32 %v2146
      %vm2230 = vweird.f32 %v2224
      %vm2231 = vmor %vm2229, %vm2230
      %v2232 = vsel %vm2231, %v2224, %v2228
      %v2233 = vand.u32 2147483647, %v2146
      %vm2234 = vcmp.eq.f32.partialorder %v2233, 8.507059e+37
      %v2235 = vand.u32 %v2146, 2147483648
      %v2236 = vor.u32 1.1754944e-38, %v2235
      %v2237 = vsel %vm2234, %v2236, %v2232
      %v2238 = vmul.f32 1.0, %v2237
      %v2239 = vrcp.pop %v2147
      %v2240 = vmul.f32 %v2147, %v2239
      %v2241 = vsub.f32 1.0, %v2240
      %v2242 = vmul.f32 %v2239, %v2241
      %v2243 = vadd.f32 %v2239, %v2242
      %vm2244 = vweird.f32 %v2147
      %vm2245 = vweird.f32 %v2239
      %vm2246 = vmor %vm2244, %vm2245
      %v2247 = vsel %vm2246, %v2239, %v2243
      %v2248 = vand.u32 2147483647, %v2147
      %vm2249 = vcmp.eq.f32.partialorder %v2248, 8.507059e+37
      %v2250 = vand.u32 %v2147, 2147483648
      %v2251 = vor.u32 1.1754944e-38, %v2250
      %v2252 = vsel %vm2249, %v2251, %v2247
      %v2253 = vmul.f32 1.0, %v2252
      %v2254 = vrcp.pop %v2148
      %v2255 = vmul.f32 %v2148, %v2254
      %v2256 = vsub.f32 1.0, %v2255
      %v2257 = vmul.f32 %v2254, %v2256
      %v2258 = vadd.f32 %v2254, %v2257
      %vm2259 = vweird.f32 %v2148
      %vm2260 = vweird.f32 %v2254
      %vm2261 = vmor %vm2259, %vm2260
      %v2262 = vsel %vm2261, %v2254, %v2258
      %v2263 = vand.u32 2147483647, %v2148
      %vm2264 = vcmp.eq.f32.partialorder %v2263, 8.507059e+37
      %v2265 = vand.u32 %v2148, 2147483648
      %v2266 = vor.u32 1.1754944e-38, %v2265
      %v2267 = vsel %vm2264, %v2266, %v2262
      %v2268 = vmul.f32 1.0, %v2267
      %v2269 = vld [vmem:[#allocation5 + $0x40] sm:$0xff]
      %v2270 = vld [vmem:[#allocation5 + $0x48] sm:$0xff]
      %v2271 = vld [vmem:[#allocation5 + $0x50] sm:$0xff]
      %v2272 = vld [vmem:[#allocation5 + $0x58] sm:$0xff]
      %v2273 = vld [vmem:[#allocation5 + $0x60] sm:$0xff]
      %v2274 = vld [vmem:[#allocation5 + $0x68] sm:$0xff]
      %v2275 = vld [vmem:[#allocation5 + $0x70] sm:$0xff]
      %v2276 = vld [vmem:[#allocation5 + $0x78] sm:$0xff]
      %v2277 = vld [vmem:[%s3 + $0x20] sm:$0xff]
      %v2278 = vld [vmem:[%s3 + $0x28] sm:$0xff]
      %v2279 = vld [vmem:[%s3 + $0x30] sm:$0xff]
      %v2280 = vld [vmem:[%s3 + $0x38] sm:$0xff]
      %2282 = vset.pattern.permute.xlu0 0
      %2283 = vperm.xlu0 %2282, %v2277
      %v2284 = vpop.permute.xlu0 %2283
      %2287 = vset.pattern.permute.xlu0 0
      %2288 = vperm.xlu0 %2287, %v2278
      %v2289 = vpop.permute.xlu0 %2288
      %2292 = vset.pattern.permute.xlu0 0
      %2293 = vperm.xlu0 %2292, %v2279
      %v2294 = vpop.permute.xlu0 %2293
      %2297 = vset.pattern.permute.xlu0 0
      %2298 = vperm.xlu0 %2297, %v2280
      %v2299 = vpop.permute.xlu0 %2298
      %v2301 = vadd.f32 %v2269, %v2284
      %v2302 = vadd.f32 %v2270, %v2284
      %v2303 = vadd.f32 %v2271, %v2289
      %v2304 = vadd.f32 %v2272, %v2289
      %v2305 = vadd.f32 %v2273, %v2294
      %v2306 = vadd.f32 %v2274, %v2294
      %v2307 = vadd.f32 %v2275, %v2299
      %v2308 = vadd.f32 %v2276, %v2299
      %v2309 = vxor.u32 %v2301, 2147483648
      %v2310 = vxor.u32 %v2302, 2147483648
      %v2311 = vxor.u32 %v2303, 2147483648
      %v2312 = vxor.u32 %v2304, 2147483648
      %v2313 = vxor.u32 %v2305, 2147483648
      %v2314 = vxor.u32 %v2306, 2147483648
      %v2315 = vxor.u32 %v2307, 2147483648
      %v2316 = vxor.u32 %v2308, 2147483648
      %v2317 = vmul.f32 %v2309, 1.442695
      %v2318 = vpow.pop %v2317
      %v2319 = vmul.f32 %v2310, 1.442695
      %v2320 = vpow.pop %v2319
      %v2321 = vmul.f32 %v2311, 1.442695
      %v2322 = vpow.pop %v2321
      %v2323 = vmul.f32 %v2312, 1.442695
      %v2324 = vpow.pop %v2323
      %v2325 = vmul.f32 %v2313, 1.442695
      %v2326 = vpow.pop %v2325
      %v2327 = vmul.f32 %v2314, 1.442695
      %v2328 = vpow.pop %v2327
      %v2329 = vmul.f32 %v2315, 1.442695
      %v2330 = vpow.pop %v2329
      %v2331 = vmul.f32 %v2316, 1.442695
      %v2332 = vpow.pop %v2331
      %v2333 = vadd.f32 %v2318, 1.0
      %v2334 = vadd.f32 %v2320, 1.0
      %v2335 = vadd.f32 %v2322, 1.0
      %v2336 = vadd.f32 %v2324, 1.0
      %v2337 = vadd.f32 %v2326, 1.0
      %v2338 = vadd.f32 %v2328, 1.0
      %v2339 = vadd.f32 %v2330, 1.0
      %v2340 = vadd.f32 %v2332, 1.0
      %v2341 = vrcp.pop %v2333
      %v2342 = vmul.f32 %v2333, %v2341
      %v2343 = vsub.f32 1.0, %v2342
      %v2344 = vmul.f32 %v2341, %v2343
      %v2345 = vadd.f32 %v2341, %v2344
      %vm2346 = vweird.f32 %v2333
      %vm2347 = vweird.f32 %v2341
      %vm2348 = vmor %vm2346, %vm2347
      %v2349 = vsel %vm2348, %v2341, %v2345
      %v2350 = vand.u32 2147483647, %v2333
      %vm2351 = vcmp.eq.f32.partialorder %v2350, 8.507059e+37
      %v2352 = vand.u32 %v2333, 2147483648
      %v2353 = vor.u32 1.1754944e-38, %v2352
      %v2354 = vsel %vm2351, %v2353, %v2349
      %v2355 = vmul.f32 1.0, %v2354
      %v2356 = vrcp.pop %v2334
      %v2357 = vmul.f32 %v2334, %v2356
      %v2358 = vsub.f32 1.0, %v2357
      %v2359 = vmul.f32 %v2356, %v2358
      %v2360 = vadd.f32 %v2356, %v2359
      %vm2361 = vweird.f32 %v2334
      %vm2362 = vweird.f32 %v2356
      %vm2363 = vmor %vm2361, %vm2362
      %v2364 = vsel %vm2363, %v2356, %v2360
      %v2365 = vand.u32 2147483647, %v2334
      %vm2366 = vcmp.eq.f32.partialorder %v2365, 8.507059e+37
      %v2367 = vand.u32 %v2334, 2147483648
      %v2368 = vor.u32 1.1754944e-38, %v2367
      %v2369 = vsel %vm2366, %v2368, %v2364
      %v2370 = vmul.f32 1.0, %v2369
      %v2371 = vrcp.pop %v2335
      %v2372 = vmul.f32 %v2335, %v2371
      %v2373 = vsub.f32 1.0, %v2372
      %v2374 = vmul.f32 %v2371, %v2373
      %v2375 = vadd.f32 %v2371, %v2374
      %vm2376 = vweird.f32 %v2335
      %vm2377 = vweird.f32 %v2371
      %vm2378 = vmor %vm2376, %vm2377
      %v2379 = vsel %vm2378, %v2371, %v2375
      %v2380 = vand.u32 2147483647, %v2335
      %vm2381 = vcmp.eq.f32.partialorder %v2380, 8.507059e+37
      %v2382 = vand.u32 %v2335, 2147483648
      %v2383 = vor.u32 1.1754944e-38, %v2382
      %v2384 = vsel %vm2381, %v2383, %v2379
      %v2385 = vmul.f32 1.0, %v2384
      %v2386 = vrcp.pop %v2336
      %v2387 = vmul.f32 %v2336, %v2386
      %v2388 = vsub.f32 1.0, %v2387
      %v2389 = vmul.f32 %v2386, %v2388
      %v2390 = vadd.f32 %v2386, %v2389
      %vm2391 = vweird.f32 %v2336
      %vm2392 = vweird.f32 %v2386
      %vm2393 = vmor %vm2391, %vm2392
      %v2394 = vsel %vm2393, %v2386, %v2390
      %v2395 = vand.u32 2147483647, %v2336
      %vm2396 = vcmp.eq.f32.partialorder %v2395, 8.507059e+37
      %v2397 = vand.u32 %v2336, 2147483648
      %v2398 = vor.u32 1.1754944e-38, %v2397
      %v2399 = vsel %vm2396, %v2398, %v2394
      %v2400 = vmul.f32 1.0, %v2399
      %v2401 = vrcp.pop %v2337
      %v2402 = vmul.f32 %v2337, %v2401
      %v2403 = vsub.f32 1.0, %v2402
      %v2404 = vmul.f32 %v2401, %v2403
      %v2405 = vadd.f32 %v2401, %v2404
      %vm2406 = vweird.f32 %v2337
      %vm2407 = vweird.f32 %v2401
      %vm2408 = vmor %vm2406, %vm2407
      %v2409 = vsel %vm2408, %v2401, %v2405
      %v2410 = vand.u32 2147483647, %v2337
      %vm2411 = vcmp.eq.f32.partialorder %v2410, 8.507059e+37
      %v2412 = vand.u32 %v2337, 2147483648
      %v2413 = vor.u32 1.1754944e-38, %v2412
      %v2414 = vsel %vm2411, %v2413, %v2409
      %v2415 = vmul.f32 1.0, %v2414
      %v2416 = vrcp.pop %v2338
      %v2417 = vmul.f32 %v2338, %v2416
      %v2418 = vsub.f32 1.0, %v2417
      %v2419 = vmul.f32 %v2416, %v2418
      %v2420 = vadd.f32 %v2416, %v2419
      %vm2421 = vweird.f32 %v2338
      %vm2422 = vweird.f32 %v2416
      %vm2423 = vmor %vm2421, %vm2422
      %v2424 = vsel %vm2423, %v2416, %v2420
      %v2425 = vand.u32 2147483647, %v2338
      %vm2426 = vcmp.eq.f32.partialorder %v2425, 8.507059e+37
      %v2427 = vand.u32 %v2338, 2147483648
      %v2428 = vor.u32 1.1754944e-38, %v2427
      %v2429 = vsel %vm2426, %v2428, %v2424
      %v2430 = vmul.f32 1.0, %v2429
      %v2431 = vrcp.pop %v2339
      %v2432 = vmul.f32 %v2339, %v2431
      %v2433 = vsub.f32 1.0, %v2432
      %v2434 = vmul.f32 %v2431, %v2433
      %v2435 = vadd.f32 %v2431, %v2434
      %vm2436 = vweird.f32 %v2339
      %vm2437 = vweird.f32 %v2431
      %vm2438 = vmor %vm2436, %vm2437
      %v2439 = vsel %vm2438, %v2431, %v2435
      %v2440 = vand.u32 2147483647, %v2339
      %vm2441 = vcmp.eq.f32.partialorder %v2440, 8.507059e+37
      %v2442 = vand.u32 %v2339, 2147483648
      %v2443 = vor.u32 1.1754944e-38, %v2442
      %v2444 = vsel %vm2441, %v2443, %v2439
      %v2445 = vmul.f32 1.0, %v2444
      %v2446 = vrcp.pop %v2340
      %v2447 = vmul.f32 %v2340, %v2446
      %v2448 = vsub.f32 1.0, %v2447
      %v2449 = vmul.f32 %v2446, %v2448
      %v2450 = vadd.f32 %v2446, %v2449
      %vm2451 = vweird.f32 %v2340
      %vm2452 = vweird.f32 %v2446
      %vm2453 = vmor %vm2451, %vm2452
      %v2454 = vsel %vm2453, %v2446, %v2450
      %v2455 = vand.u32 2147483647, %v2340
      %vm2456 = vcmp.eq.f32.partialorder %v2455, 8.507059e+37
      %v2457 = vand.u32 %v2340, 2147483648
      %v2458 = vor.u32 1.1754944e-38, %v2457
      %v2459 = vsel %vm2456, %v2458, %v2454
      %v2460 = vmul.f32 1.0, %v2459
      %v2461 = vld [vmem:[#allocation5 + $0x80] sm:$0xff]
      %v2462 = vld [vmem:[#allocation5 + $0x88] sm:$0xff]
      %v2463 = vld [vmem:[#allocation5 + $0x90] sm:$0xff]
      %v2464 = vld [vmem:[#allocation5 + $0x98] sm:$0xff]
      %v2465 = vld [vmem:[#allocation5 + $0xa0] sm:$0xff]
      %v2466 = vld [vmem:[#allocation5 + $0xa8] sm:$0xff]
      %v2467 = vld [vmem:[#allocation5 + $0xb0] sm:$0xff]
      %v2468 = vld [vmem:[#allocation5 + $0xb8] sm:$0xff]
      %v2469 = vld [vmem:[%s3 + $0x40] sm:$0xff]
      %v2470 = vld [vmem:[%s3 + $0x48] sm:$0xff]
      %v2471 = vld [vmem:[%s3 + $0x50] sm:$0xff]
      %v2472 = vld [vmem:[%s3 + $0x58] sm:$0xff]
      %2474 = vset.pattern.permute.xlu0 0
      %2475 = vperm.xlu0 %2474, %v2469
      %v2476 = vpop.permute.xlu0 %2475
      %2479 = vset.pattern.permute.xlu0 0
      %2480 = vperm.xlu0 %2479, %v2470
      %v2481 = vpop.permute.xlu0 %2480
      %2484 = vset.pattern.permute.xlu0 0
      %2485 = vperm.xlu0 %2484, %v2471
      %v2486 = vpop.permute.xlu0 %2485
      %2489 = vset.pattern.permute.xlu0 0
      %2490 = vperm.xlu0 %2489, %v2472
      %v2491 = vpop.permute.xlu0 %2490
      %v2493 = vadd.f32 %v2461, %v2476
      %v2494 = vadd.f32 %v2462, %v2476
      %v2495 = vadd.f32 %v2463, %v2481
      %v2496 = vadd.f32 %v2464, %v2481
      %v2497 = vadd.f32 %v2465, %v2486
      %v2498 = vadd.f32 %v2466, %v2486
      %v2499 = vadd.f32 %v2467, %v2491
      %v2500 = vadd.f32 %v2468, %v2491
      %v2501 = vtanh.pop %v2493
      %v2502 = vtanh.pop %v2494
      %v2503 = vtanh.pop %v2495
      %v2504 = vtanh.pop %v2496
      %v2505 = vtanh.pop %v2497
      %v2506 = vtanh.pop %v2498
      %v2507 = vtanh.pop %v2499
      %v2508 = vtanh.pop %v2500
      %v2509 = vld [vmem:[#allocation5 + $0xc0] sm:$0xff]
      %v2510 = vld [vmem:[#allocation5 + $0xc8] sm:$0xff]
      %v2511 = vld [vmem:[#allocation5 + $0xd0] sm:$0xff]
      %v2512 = vld [vmem:[#allocation5 + $0xd8] sm:$0xff]
      %v2513 = vld [vmem:[#allocation5 + $0xe0] sm:$0xff]
      %v2514 = vld [vmem:[#allocation5 + $0xe8] sm:$0xff]
      %v2515 = vld [vmem:[#allocation5 + $0xf0] sm:$0xff]
      %v2516 = vld [vmem:[#allocation5 + $0xf8] sm:$0xff]
      %v2517 = vld [vmem:[%s3 + $0x60] sm:$0xff]
      %v2518 = vld [vmem:[%s3 + $0x68] sm:$0xff]
      %v2519 = vld [vmem:[%s3 + $0x70] sm:$0xff]
      %v2520 = vld [vmem:[%s3 + $0x78] sm:$0xff]
      %2522 = vset.pattern.permute.xlu0 0
      %2523 = vperm.xlu0 %2522, %v2517
      %v2524 = vpop.permute.xlu0 %2523
      %2527 = vset.pattern.permute.xlu0 0
      %2528 = vperm.xlu0 %2527, %v2518
      %v2529 = vpop.permute.xlu0 %2528
      %2532 = vset.pattern.permute.xlu0 0
      %2533 = vperm.xlu0 %2532, %v2519
      %v2534 = vpop.permute.xlu0 %2533
      %2537 = vset.pattern.permute.xlu0 0
      %2538 = vperm.xlu0 %2537, %v2520
      %v2539 = vpop.permute.xlu0 %2538
      %v2541 = vadd.f32 %v2509, %v2524
      %v2542 = vadd.f32 %v2510, %v2524
      %v2543 = vadd.f32 %v2511, %v2529
      %v2544 = vadd.f32 %v2512, %v2529
      %v2545 = vadd.f32 %v2513, %v2534
      %v2546 = vadd.f32 %v2514, %v2534
      %v2547 = vadd.f32 %v2515, %v2539
      %v2548 = vadd.f32 %v2516, %v2539
      %v2549 = vxor.u32 %v2541, 2147483648
      %v2550 = vxor.u32 %v2542, 2147483648
      %v2551 = vxor.u32 %v2543, 2147483648
      %v2552 = vxor.u32 %v2544, 2147483648
      %v2553 = vxor.u32 %v2545, 2147483648
      %v2554 = vxor.u32 %v2546, 2147483648
      %v2555 = vxor.u32 %v2547, 2147483648
      %v2556 = vxor.u32 %v2548, 2147483648
      %v2557 = vmul.f32 %v2549, 1.442695
      %v2558 = vpow.pop %v2557
      %v2559 = vmul.f32 %v2550, 1.442695
      %v2560 = vpow.pop %v2559
      %v2561 = vmul.f32 %v2551, 1.442695
      %v2562 = vpow.pop %v2561
      %v2563 = vmul.f32 %v2552, 1.442695
      %v2564 = vpow.pop %v2563
      %v2565 = vmul.f32 %v2553, 1.442695
      %v2566 = vpow.pop %v2565
      %v2567 = vmul.f32 %v2554, 1.442695
      %v2568 = vpow.pop %v2567
      %v2569 = vmul.f32 %v2555, 1.442695
      %v2570 = vpow.pop %v2569
      %v2571 = vmul.f32 %v2556, 1.442695
      %v2572 = vpow.pop %v2571
      %v2573 = vadd.f32 %v2558, 1.0
      %v2574 = vadd.f32 %v2560, 1.0
      %v2575 = vadd.f32 %v2562, 1.0
      %v2576 = vadd.f32 %v2564, 1.0
      %v2577 = vadd.f32 %v2566, 1.0
      %v2578 = vadd.f32 %v2568, 1.0
      %v2579 = vadd.f32 %v2570, 1.0
      %v2580 = vadd.f32 %v2572, 1.0
      %v2581 = vrcp.pop %v2573
      %v2582 = vmul.f32 %v2573, %v2581
      %v2583 = vsub.f32 1.0, %v2582
      %v2584 = vmul.f32 %v2581, %v2583
      %v2585 = vadd.f32 %v2581, %v2584
      %vm2586 = vweird.f32 %v2573
      %vm2587 = vweird.f32 %v2581
      %vm2588 = vmor %vm2586, %vm2587
      %v2589 = vsel %vm2588, %v2581, %v2585
      %v2590 = vand.u32 2147483647, %v2573
      %vm2591 = vcmp.eq.f32.partialorder %v2590, 8.507059e+37
      %v2592 = vand.u32 %v2573, 2147483648
      %v2593 = vor.u32 1.1754944e-38, %v2592
      %v2594 = vsel %vm2591, %v2593, %v2589
      %v2595 = vmul.f32 1.0, %v2594
      %v2596 = vrcp.pop %v2574
      %v2597 = vmul.f32 %v2574, %v2596
      %v2598 = vsub.f32 1.0, %v2597
      %v2599 = vmul.f32 %v2596, %v2598
      %v2600 = vadd.f32 %v2596, %v2599
      %vm2601 = vweird.f32 %v2574
      %vm2602 = vweird.f32 %v2596
      %vm2603 = vmor %vm2601, %vm2602
      %v2604 = vsel %vm2603, %v2596, %v2600
      %v2605 = vand.u32 2147483647, %v2574
      %vm2606 = vcmp.eq.f32.partialorder %v2605, 8.507059e+37
      %v2607 = vand.u32 %v2574, 2147483648
      %v2608 = vor.u32 1.1754944e-38, %v2607
      %v2609 = vsel %vm2606, %v2608, %v2604
      %v2610 = vmul.f32 1.0, %v2609
      %v2611 = vrcp.pop %v2575
      %v2612 = vmul.f32 %v2575, %v2611
      %v2613 = vsub.f32 1.0, %v2612
      %v2614 = vmul.f32 %v2611, %v2613
      %v2615 = vadd.f32 %v2611, %v2614
      %vm2616 = vweird.f32 %v2575
      %vm2617 = vweird.f32 %v2611
      %vm2618 = vmor %vm2616, %vm2617
      %v2619 = vsel %vm2618, %v2611, %v2615
      %v2620 = vand.u32 2147483647, %v2575
      %vm2621 = vcmp.eq.f32.partialorder %v2620, 8.507059e+37
      %v2622 = vand.u32 %v2575, 2147483648
      %v2623 = vor.u32 1.1754944e-38, %v2622
      %v2624 = vsel %vm2621, %v2623, %v2619
      %v2625 = vmul.f32 1.0, %v2624
      %v2626 = vrcp.pop %v2576
      %v2627 = vmul.f32 %v2576, %v2626
      %v2628 = vsub.f32 1.0, %v2627
      %v2629 = vmul.f32 %v2626, %v2628
      %v2630 = vadd.f32 %v2626, %v2629
      %vm2631 = vweird.f32 %v2576
      %vm2632 = vweird.f32 %v2626
      %vm2633 = vmor %vm2631, %vm2632
      %v2634 = vsel %vm2633, %v2626, %v2630
      %v2635 = vand.u32 2147483647, %v2576
      %vm2636 = vcmp.eq.f32.partialorder %v2635, 8.507059e+37
      %v2637 = vand.u32 %v2576, 2147483648
      %v2638 = vor.u32 1.1754944e-38, %v2637
      %v2639 = vsel %vm2636, %v2638, %v2634
      %v2640 = vmul.f32 1.0, %v2639
      %v2641 = vrcp.pop %v2577
      %v2642 = vmul.f32 %v2577, %v2641
      %v2643 = vsub.f32 1.0, %v2642
      %v2644 = vmul.f32 %v2641, %v2643
      %v2645 = vadd.f32 %v2641, %v2644
      %vm2646 = vweird.f32 %v2577
      %vm2647 = vweird.f32 %v2641
      %vm2648 = vmor %vm2646, %vm2647
      %v2649 = vsel %vm2648, %v2641, %v2645
      %v2650 = vand.u32 2147483647, %v2577
      %vm2651 = vcmp.eq.f32.partialorder %v2650, 8.507059e+37
      %v2652 = vand.u32 %v2577, 2147483648
      %v2653 = vor.u32 1.1754944e-38, %v2652
      %v2654 = vsel %vm2651, %v2653, %v2649
      %v2655 = vmul.f32 1.0, %v2654
      %v2656 = vrcp.pop %v2578
      %v2657 = vmul.f32 %v2578, %v2656
      %v2658 = vsub.f32 1.0, %v2657
      %v2659 = vmul.f32 %v2656, %v2658
      %v2660 = vadd.f32 %v2656, %v2659
      %vm2661 = vweird.f32 %v2578
      %vm2662 = vweird.f32 %v2656
      %vm2663 = vmor %vm2661, %vm2662
      %v2664 = vsel %vm2663, %v2656, %v2660
      %v2665 = vand.u32 2147483647, %v2578
      %vm2666 = vcmp.eq.f32.partialorder %v2665, 8.507059e+37
      %v2667 = vand.u32 %v2578, 2147483648
      %v2668 = vor.u32 1.1754944e-38, %v2667
      %v2669 = vsel %vm2666, %v2668, %v2664
      %v2670 = vmul.f32 1.0, %v2669
      %v2671 = vrcp.pop %v2579
      %v2672 = vmul.f32 %v2579, %v2671
      %v2673 = vsub.f32 1.0, %v2672
      %v2674 = vmul.f32 %v2671, %v2673
      %v2675 = vadd.f32 %v2671, %v2674
      %vm2676 = vweird.f32 %v2579
      %vm2677 = vweird.f32 %v2671
      %vm2678 = vmor %vm2676, %vm2677
      %v2679 = vsel %vm2678, %v2671, %v2675
      %v2680 = vand.u32 2147483647, %v2579
      %vm2681 = vcmp.eq.f32.partialorder %v2680, 8.507059e+37
      %v2682 = vand.u32 %v2579, 2147483648
      %v2683 = vor.u32 1.1754944e-38, %v2682
      %v2684 = vsel %vm2681, %v2683, %v2679
      %v2685 = vmul.f32 1.0, %v2684
      %v2686 = vrcp.pop %v2580
      %v2687 = vmul.f32 %v2580, %v2686
      %v2688 = vsub.f32 1.0, %v2687
      %v2689 = vmul.f32 %v2686, %v2688
      %v2690 = vadd.f32 %v2686, %v2689
      %vm2691 = vweird.f32 %v2580
      %vm2692 = vweird.f32 %v2686
      %vm2693 = vmor %vm2691, %vm2692
      %v2694 = vsel %vm2693, %v2686, %v2690
      %v2695 = vand.u32 2147483647, %v2580
      %vm2696 = vcmp.eq.f32.partialorder %v2695, 8.507059e+37
      %v2697 = vand.u32 %v2580, 2147483648
      %v2698 = vor.u32 1.1754944e-38, %v2697
      %v2699 = vsel %vm2696, %v2698, %v2694
      %v2700 = vmul.f32 1.0, %v2699
      %v2701 = vld [vmem:[#allocation3] sm:$0xff]
      %v2702 = vld [vmem:[#allocation3 + $0x8] sm:$0xff]
      %v2703 = vld [vmem:[#allocation3 + $0x10] sm:$0xff]
      %v2704 = vld [vmem:[#allocation3 + $0x18] sm:$0xff]
      %v2705 = vld [vmem:[#allocation3 + $0x20] sm:$0xff]
      %v2706 = vld [vmem:[#allocation3 + $0x28] sm:$0xff]
      %v2707 = vld [vmem:[#allocation3 + $0x30] sm:$0xff]
      %v2708 = vld [vmem:[#allocation3 + $0x38] sm:$0xff]
      %v2709 = vmul.f32 %v2355, %v2701
      %v2710 = vmul.f32 %v2370, %v2702
      %v2711 = vmul.f32 %v2385, %v2703
      %v2712 = vmul.f32 %v2400, %v2704
      %v2713 = vmul.f32 %v2415, %v2705
      %v2714 = vmul.f32 %v2430, %v2706
      %v2715 = vmul.f32 %v2445, %v2707
      %v2716 = vmul.f32 %v2460, %v2708
      %v2717 = vmul.f32 %v2163, %v2501
      %v2718 = vmul.f32 %v2178, %v2502
      %v2719 = vmul.f32 %v2193, %v2503
      %v2720 = vmul.f32 %v2208, %v2504
      %v2721 = vmul.f32 %v2223, %v2505
      %v2722 = vmul.f32 %v2238, %v2506
      %v2723 = vmul.f32 %v2253, %v2507
      %v2724 = vmul.f32 %v2268, %v2508
      %v2725 = vadd.f32 %v2709, %v2717
      %v2726 = vadd.f32 %v2710, %v2718
      %v2727 = vadd.f32 %v2711, %v2719
      %v2728 = vadd.f32 %v2712, %v2720
      %v2729 = vadd.f32 %v2713, %v2721
      %v2730 = vadd.f32 %v2714, %v2722
      %v2731 = vadd.f32 %v2715, %v2723
      %v2732 = vadd.f32 %v2716, %v2724
      %v2733 = vtanh.pop %v2725
      %v2734 = vtanh.pop %v2726
      %v2735 = vtanh.pop %v2727
      %v2736 = vtanh.pop %v2728
      %v2737 = vtanh.pop %v2729
      %v2738 = vtanh.pop %v2730
      %v2739 = vtanh.pop %v2731
      %v2740 = vtanh.pop %v2732
      %v2741 = vmul.f32 %v2595, %v2733
      %v2742 = vmul.f32 %v2610, %v2734
      %v2743 = vmul.f32 %v2625, %v2735
      %v2744 = vmul.f32 %v2640, %v2736
      %v2745 = vmul.f32 %v2655, %v2737
      %v2746 = vmul.f32 %v2670, %v2738
      %v2747 = vmul.f32 %v2685, %v2739
      %v2748 = vmul.f32 %v2700, %v2740
      %2749 = vst [vmem:[#allocation2] sm:$0xff] %v2741
      %2750 = vst [vmem:[#allocation2 + $0x8] sm:$0xff] %v2742
      %2751 = vst [vmem:[#allocation2 + $0x10] sm:$0xff] %v2743
      %2752 = vst [vmem:[#allocation2 + $0x18] sm:$0xff] %v2744
      %2753 = vst [vmem:[#allocation2 + $0x20] sm:$0xff] %v2745
      %2754 = vst [vmem:[#allocation2 + $0x28] sm:$0xff] %v2746
      %2755 = vst [vmem:[#allocation2 + $0x30] sm:$0xff] %v2747
      %2756 = vst [vmem:[#allocation2 + $0x38] sm:$0xff] %v2748
      %2757 = vst [vmem:[#allocation3] sm:$0xff] %v2725
      %2758 = vst [vmem:[#allocation3 + $0x8] sm:$0xff] %v2726
      %2759 = vst [vmem:[#allocation3 + $0x10] sm:$0xff] %v2727
      %2760 = vst [vmem:[#allocation3 + $0x18] sm:$0xff] %v2728
      %2761 = vst [vmem:[#allocation3 + $0x20] sm:$0xff] %v2729
      %2762 = vst [vmem:[#allocation3 + $0x28] sm:$0xff] %v2730
      %2763 = vst [vmem:[#allocation3 + $0x30] sm:$0xff] %v2731
      %2764 = vst [vmem:[#allocation3 + $0x38] sm:$0xff] %v2732
      %2765 = vst [vmem:[%s389] sm:$0xff] %v2741
      %2766 = vst [vmem:[%s389 + $0x8] sm:$0xff] %v2742
      %2767 = vst [vmem:[%s389 + $0x10] sm:$0xff] %v2743
      %2768 = vst [vmem:[%s389 + $0x18] sm:$0xff] %v2744
      %2769 = vst [vmem:[%s389 + $0x20] sm:$0xff] %v2745
      %2770 = vst [vmem:[%s389 + $0x28] sm:$0xff] %v2746
      %2771 = vst [vmem:[%s389 + $0x30] sm:$0xff] %v2747
      %2772 = vst [vmem:[%s389 + $0x38] sm:$0xff] %v2748
      %p2773 = scmp.eq.s32.totalorder %s25, 7
      // Predicated region
      $region53: #{conv_lstm_module_forward.3} parent=47 // pred_check
        %p2774 = pneg %p2773
      $region54: #{conv_lstm_module_forward.3} parent=47 // pred_check_branch
        %2776 = sbr.rel (%p2774) target = $region56
      $region55: #{conv_lstm_module_forward.3} parent=47 // pred_region
        %2777 = vst [vmem:[%s394] sm:$0xff] %v2725
        %2778 = vst [vmem:[%s394 + $0x8] sm:$0xff] %v2726
        %2779 = vst [vmem:[%s394 + $0x10] sm:$0xff] %v2727
        %2780 = vst [vmem:[%s394 + $0x18] sm:$0xff] %v2728
        %2781 = vst [vmem:[%s394 + $0x20] sm:$0xff] %v2729
        %2782 = vst [vmem:[%s394 + $0x28] sm:$0xff] %v2730
        %2783 = vst [vmem:[%s394 + $0x30] sm:$0xff] %v2731
        %2784 = vst [vmem:[%s394 + $0x38] sm:$0xff] %v2732
      $region56: #{conv_lstm_module_forward.3} parent=47 // pred_fallthru
        _
      %p2785 = scmp.lt.s32.totalorder %s24, 1
      %s2786 = scalar_select %p2785, %s24, 1
      %p2787 = scmp.lt.s32.totalorder %s25, 7
      %s2788 = scalar_select %p2787, %s25, 7
      %s2789 = smul.addr %s2788, 8
      %s2790 = smul.addr %s2786, 64
      %s2791 = sadd.s32 %s2789, %s2790
      %s2792 = smul.addr %s2791, 8
      %s2793 = scalar_lea.vmem %s7, %s2792
      %p2794 = scmp.lt.s32.totalorder %s24, 1
      %s2795 = scalar_select %p2794, %s24, 1
      %s2796 = smul.addr %s2795, 8
      %s2797 = smul.addr %s2796, 8
      %s2798 = scalar_lea.vmem %s8, %s2797
      // Predicated region
      $region57: #{conv_lstm_module_forward.3} parent=47 // pred_check
        %p2799 = pneg %p216
      $region58: #{conv_lstm_module_forward.3} parent=47 // pred_check_branch
        %2801 = sbr.rel (%p2799) target = $region60
      $region59: #{conv_lstm_module_forward.3} parent=47 // pred_region
        _
      $region60: #{conv_lstm_module_forward.3} parent=47 // pred_fallthru
        _
      // Predicated region
      $region61: #{conv_lstm_module_forward.3} parent=47 // pred_check
        %p2802 = pneg %p242
      $region62: #{conv_lstm_module_forward.3} parent=47 // pred_check_branch
        %2804 = sbr.rel (%p2802) target = $region64
      $region63: #{conv_lstm_module_forward.3} parent=47 // pred_region
        _
      $region64: #{conv_lstm_module_forward.3} parent=47 // pred_fallthru
        _
    $region48: #{conv_lstm_module_forward.3} parent=5 // pred_fallthru
      _
    %p2805 = scmp.le.s32.totalorder 2, %s15
    // Predicated region
    $region65: #{conv_lstm_module_forward.3} parent=5 // pred_check
      %p2806 = pneg %p2805
    $region66: #{conv_lstm_module_forward.3} parent=5 // pred_check_branch
      %2808 = sbr.rel (%p2806) target = $region68
    $region67: #{conv_lstm_module_forward.3} parent=5 // pred_region
      %s2809 = ssub.s32 %s15, 2
      // Predicated region
      $region69: #{conv_lstm_module_forward.3} parent=67 // pred_check
        %p2810 = pneg %p222
      $region70: #{conv_lstm_module_forward.3} parent=67 // pred_check_branch
        %2812 = sbr.rel (%p2810) target = $region72
      $region71: #{conv_lstm_module_forward.3} parent=67 // pred_region
        %p2813 = scmp.lt.s32.totalorder %s26, 1
        %s2814 = scalar_select %p2813, %s26, 1
        %p2815 = scmp.lt.s32.totalorder %s27, 7
        %s2816 = scalar_select %p2815, %s27, 7
        %s2817 = smul.addr %s2816, 8
        %s2818 = smul.addr %s2814, 64
        %s2819 = sadd.s32 %s2817, %s2818
        %s2820 = smul.addr %s2819, 8
        %s2821 = scalar_lea.vmem %s7, %s2820
      $region72: #{conv_lstm_module_forward.3} parent=67 // pred_fallthru
        _
      // Predicated region
      $region73: #{conv_lstm_module_forward.3} parent=67 // pred_check
        %p2822 = pneg %p248
      $region74: #{conv_lstm_module_forward.3} parent=67 // pred_check_branch
        %2824 = sbr.rel (%p2822) target = $region76
      $region75: #{conv_lstm_module_forward.3} parent=67 // pred_region
        %p2825 = scmp.lt.s32.totalorder %s26, 1
        %s2826 = scalar_select %p2825, %s26, 1
        %s2827 = smul.addr %s2826, 8
        %s2828 = smul.addr %s2827, 8
        %s2829 = scalar_lea.vmem %s8, %s2828
      $region76: #{conv_lstm_module_forward.3} parent=67 // pred_fallthru
        _
    $region68: #{conv_lstm_module_forward.3} parent=5 // pred_fallthru
      _
  $region6: #{conv_lstm_module_forward.3} parent=0 // loop_footer
    %s19 = sadd.s32 1, %s15
  $region7: #{conv_lstm_module_forward.3} parent=0 // loop_footer_branch
    %14 = sbr.rel target = $region3
  $region8: #{conv_lstm_module_forward.3} parent=0 // loop_exit
    _

</llo_original>
